<compile_context>
chip_gen: v5e
topology: v5e:2x2
jax: 0.10.0
libtpu: 0.0.40
codegen_flags: <defaults>
</compile_context>

<pallas_src>
import numpy as np

import jax
import jax.numpy as jnp
from jax import lax
from jax.experimental import pallas as pl
from jax.experimental.pallas import tpu as pltpu

_LN_EPS = 1e-5


# ----------------------------------------------------------------------------
# In-kernel helpers (traced inside the Pallas kernel body)
# ----------------------------------------------------------------------------
def _ln_seg(y, L):
    """LayerNorm over per-sample segments of length L packed along lanes."""
    PL = y.shape[-1]
    P = PL // L
    outs = []
    for p in range(P):
        seg = y[:, p * L:(p + 1) * L]
        m = jnp.mean(seg, axis=-1, keepdims=True)
        d = seg - m
        v = jnp.mean(d * d, axis=-1, keepdims=True)
        outs.append(d * lax.rsqrt(v + _LN_EPS))
    return outs[0] if P == 1 else jnp.concatenate(outs, axis=-1)


def _elu(y):
    return jnp.where(y > 0, y, jnp.exp(jnp.minimum(y, 0.0)) - 1.0)


def _sigmoid(y):
    return pl.reciprocal(1.0 + jnp.exp(-y), approx=True)


def _taps(parts, sr_ref, sl_ref, tap_dtype):
    """Build the (3*Ci, PL) tap operand [prev; cur; next] fully in registers.

    prev/next are per-segment shifts with zero padding, realized as matmuls
    with precomputed 0/1 shift matrices (boundary zeroing folded in).  Skip
    concatenation is realized by concatenating `parts` along channels first.
    """
    z = parts[0] if len(parts) == 1 else jnp.concatenate(parts, axis=0)
    zb = z.astype(jnp.bfloat16)
    prev = jnp.dot(zb, sr_ref[...], preferred_element_type=jnp.float32)
    nxt = jnp.dot(zb, sl_ref[...], preferred_element_type=jnp.float32)
    return jnp.concatenate([prev, z, nxt], axis=0).astype(tap_dtype)


def _conv3(parts, w_ref, b_ref, sr_ref, sl_ref, tap_dtype=jnp.bfloat16):
    # Conv1d(kernel=3, stride=1, padding=1) as ONE (Co, 3Ci) @ (3Ci, PL) matmul.
    taps = _taps(parts, sr_ref, sl_ref, tap_dtype)
    return jnp.dot(w_ref[...], taps,
                   preferred_element_type=jnp.float32) + b_ref[...]


def _tconv4(parts, w_ref, b_ref, sr_ref, sl_ref, pe_ref, po_ref):
    # ConvTranspose1d(kernel=4, stride=2, padding=1):
    #   even[t] = W1 z[t] + W3 z[t-1],  odd[t] = W2 z[t] + W0 z[t+1]
    # via one block matmul with w = [[W3,W1,0],[0,W2,W0]], then an even/odd
    # lane interleave via precomputed selection matrices.
    taps = _taps(parts, sr_ref, sl_ref, jnp.bfloat16)
    y = jnp.dot(w_ref[...], taps, preferred_element_type=jnp.float32)
    co = b_ref.shape[0]
    ev = y[:co].astype(jnp.bfloat16)
    od = y[co:].astype(jnp.bfloat16)
    out = (jnp.dot(ev, pe_ref[...], preferred_element_type=jnp.float32)
           + jnp.dot(od, po_ref[...], preferred_element_type=jnp.float32))
    return out + b_ref[...]


def _maxpool2(y, qe_ref, qo_ref):
    # MaxPool1d(2): (C, PL) -> (C, PL/2) via precomputed even/odd selection
    # matmuls + max (segment structure is preserved since segments halve too).
    yb = y.astype(jnp.bfloat16)
    return jnp.maximum(
        jnp.dot(yb, qe_ref[...], preferred_element_type=jnp.float32),
        jnp.dot(yb, qo_ref[...], preferred_element_type=jnp.float32))


# ----------------------------------------------------------------------------
# Fused kernel body: one full forward pass per grid step (per sample pack)
# ----------------------------------------------------------------------------
def _make_kernel(S):
    def kernel(*refs):
        (inp_ref,
         in_w, in_b, c1_w, c1_b, c2_w, c2_b, c3_w, c3_b,
         t1_w, t1_b, t2_w, t2_b, t3_w, t3_b, out_w, out_b,
         srS, slS, sr2, sl2, sr4, sl4, sr8, sl8,
         q1e, q1o, q2e, q2o, q3e, q3o,
         p1e, p1o, p2e, p2o, p3e, p3o,
         o_ref) = refs

        inp = inp_ref[...].astype(jnp.float32)              # (input_ch, P*S)

        # input_mlp: Conv1d(k=1) + LayerNorm(S) + ELU
        h = jnp.dot(in_w[...], inp.astype(jnp.bfloat16),
                    preferred_element_type=jnp.float32) + in_b[...]
        h = _elu(_ln_seg(h, S))                              # (c, P*S)

        # encoder: Conv1d(3) + LN + ELU + MaxPool(2)
        skip1 = _maxpool2(
            _elu(_ln_seg(_conv3([h], c1_w, c1_b, srS, slS), S)),
            q1e, q1o)                                        # (2c, P*S/2)
        skip2 = _maxpool2(
            _elu(_ln_seg(_conv3([skip1], c2_w, c2_b, sr2, sl2), S // 2)),
            q2e, q2o)                                        # (4c, P*S/4)
        h = _maxpool2(
            _elu(_ln_seg(_conv3([skip2], c3_w, c3_b, sr4, sl4), S // 4)),
            q3e, q3o)                                        # (4c, P*S/8)

        # decoder: ConvTranspose1d(4,2,1) + LN + ELU (skip concat inside taps)
        h = _elu(_ln_seg(_tconv4([h], t1_w, t1_b, sr8, sl8, p1e, p1o),
                         S // 4))                            # (4c, P*S/4)
        h = _elu(_ln_seg(_tconv4([h, skip2], t2_w, t2_b, sr4, sl4, p2e, p2o),
                         S // 2))                            # (2c, P*S/2)
        h = _elu(_ln_seg(_tconv4([h, skip1], t3_w, t3_b, sr2, sl2, p3e, p3o),
                         S))                                 # (c,  P*S)

        # conv_out (f32 operands for final accuracy) + sigmoid
        y = _conv3([h, inp], out_w, out_b, srS, slS, tap_dtype=jnp.float32)
        o_ref[...] = _sigmoid(y).astype(o_ref.dtype)         # (c, P*S)

    return kernel


# ----------------------------------------------------------------------------
# Host-side constant builders (weights fused once; structure matrices in bf16)
# ----------------------------------------------------------------------------
def _fuse_conv_w(w):
    # (Co, Ci, 3) PyTorch Conv1d weight -> (Co, 3*Ci) laid out as [W0 | W1 | W2]
    return jnp.concatenate([w[:, :, k] for k in range(w.shape[2])], axis=1)


def _fuse_tconv_w(w):
    # (Ci, Co, 4) ConvTranspose1d weight -> (2*Co, 3*Ci) block weight
    #   even rows: [W3 | W1 | 0 ],  odd rows: [0 | W2 | W0],  Wk = w[:, :, k].T
    wk = [jnp.transpose(w[:, :, k]) for k in range(4)]
    z = jnp.zeros_like(wk[0])
    return jnp.concatenate(
        [jnp.concatenate([wk[3], wk[1], z], axis=1),
         jnp.concatenate([z, wk[2], wk[0]], axis=1)], axis=0)


def _shift_mats(P, L):
    # Within-segment shift matrices (boundary zeroing folded in), bf16 0/1.
    #   prev = z @ SR : prev[:, j] = z[:, j-1] (0 at each segment start)
    #   next = z @ SL : next[:, j] = z[:, j+1] (0 at each segment end)
    PL = P * L
    i = np.arange(PL)[:, None]
    j = np.arange(PL)[None, :]
    sr = ((i == j - 1) & (j % L != 0)).astype(np.float32)
    sl = ((i == j + 1) & (j % L != L - 1)).astype(np.float32)
    return jnp.asarray(sr, jnp.bfloat16), jnp.asarray(sl, jnp.bfloat16)


def _pool_mats(PL):
    # MaxPool1d(2) even/odd selection: (PL, PL/2), qe[i,j]=1 iff i==2j, etc.
    i = np.arange(PL)[:, None]
    j = np.arange(PL // 2)[None, :]
    qe = (i == 2 * j).astype(np.float32)
    qo = (i == 2 * j + 1).astype(np.float32)
    return jnp.asarray(qe, jnp.bfloat16), jnp.asarray(qo, jnp.bfloat16)


def _interleave_mats(PL):
    # Even/odd lane interleave: (PL, 2*PL), pe[i,2i]=1, po[i,2i+1]=1.
    i = np.arange(PL)[:, None]
    j = np.arange(2 * PL)[None, :]
    pe = (j == 2 * i).astype(np.float32)
    po = (j == 2 * i + 1).astype(np.float32)
    return jnp.asarray(pe, jnp.bfloat16), jnp.asarray(po, jnp.bfloat16)


def _pick_pack(N, S):
    # Smallest divisor P of N such that P*S fills at least one 128-lane vreg.
    for P in range(1, N + 1):
        if N % P == 0 and P * S >= 128:
            return P
    return N


# ----------------------------------------------------------------------------
# pallas_call wrapper
# ----------------------------------------------------------------------------
def conv_autoencoder_forward(params, x, cond):
    N, x_ch, S = x.shape
    cond_ch = cond.shape[1]
    input_ch = x_ch + cond_ch
    c = params["in_w"].shape[0]
    assert S % 8 == 0, "S must be divisible by 8 (three MaxPool(2) stages)"

    P = _pick_pack(N, S)
    G = N // P
    PS = P * S
    bf = jnp.bfloat16

    # torch.cat([x, cond], dim=-2), then pack the batch along lanes:
    # (N, C, S) -> (C, N*S); per-sample segments stay lane-contiguous so each
    # grid step's (C, P*S) block covers whole samples.
    inp = jnp.concatenate([x, cond], axis=1)
    inp_p = jnp.transpose(inp, (1, 0, 2)).reshape(input_ch, N * S)

    consts = [
        params["in_w"][:, :, 0].astype(bf), params["in_b"].reshape(-1, 1),
        _fuse_conv_w(params["c1_w"]).astype(bf), params["c1_b"].reshape(-1, 1),
        _fuse_conv_w(params["c2_w"]).astype(bf), params["c2_b"].reshape(-1, 1),
        _fuse_conv_w(params["c3_w"]).astype(bf), params["c3_b"].reshape(-1, 1),
        _fuse_tconv_w(params["t1_w"]).astype(bf), params["t1_b"].reshape(-1, 1),
        _fuse_tconv_w(params["t2_w"]).astype(bf), params["t2_b"].reshape(-1, 1),
        _fuse_tconv_w(params["t3_w"]).astype(bf), params["t3_b"].reshape(-1, 1),
        _fuse_conv_w(params["out_w"]),            params["out_b"].reshape(-1, 1),
    ]
    for L in (S, S // 2, S // 4, S // 8):          # shift matrices per seg len
        consts += list(_shift_mats(P, L))
    for Lp in (PS, PS // 2, PS // 4):              # maxpool selection matrices
        consts += list(_pool_mats(Lp))
    for Lp in (PS // 8, PS // 4, PS // 2):         # interleave matrices
        consts += list(_interleave_mats(Lp))

    in_specs = [pl.BlockSpec((input_ch, PS), lambda g: (0, g))]
    for a in consts:
        in_specs.append(pl.BlockSpec(tuple(a.shape), lambda g: (0, 0)))

    out_p = pl.pallas_call(
        _make_kernel(S),
        out_shape=jax.ShapeDtypeStruct((c, N * S), x.dtype),
        grid=(G,),
        in_specs=in_specs,
        out_specs=pl.BlockSpec((c, PS), lambda g: (0, g)),
        compiler_params=pltpu.CompilerParams(
            dimension_semantics=("parallel",)),
    )(inp_p, *consts)

    # Unpack lanes back to (N, c, S).
    return jnp.transpose(out_p.reshape(c, N, S), (1, 0, 2))


# ----------------------------------------------------------------------------
# Deterministic parameter init (shapes follow the PyTorch module __init__)
# ----------------------------------------------------------------------------
def init_params(key, input_ch, num_ch):
    c = num_ch
    layer_shapes = {
        "in":  ((c, input_ch, 1), c),              # Conv1d(input_ch, c, 1)
        "c1":  ((2 * c, c, 3), 2 * c),             # Conv1d(c, 2c, 3)
        "c2":  ((4 * c, 2 * c, 3), 4 * c),         # Conv1d(2c, 4c, 3)
        "c3":  ((4 * c, 4 * c, 3), 4 * c),         # Conv1d(4c, 4c, 3)
        "t1":  ((4 * c, 4 * c, 4), 4 * c),         # ConvTranspose1d(4c, 4c, 4)
        "t2":  ((8 * c, 2 * c, 4), 2 * c),         # ConvTranspose1d(8c, 2c, 4)
        "t3":  ((4 * c, c, 4), c),                 # ConvTranspose1d(4c, c, 4)
        "out": ((c, c + input_ch, 3), c),          # Conv1d(c+input_ch, c, 3)
    }
    params = {}
    for i, (name, (wshape, bdim)) in enumerate(layer_shapes.items()):
        kw, kb = jax.random.split(jax.random.fold_in(key, i))
        scale = 1.0 / float(np.sqrt(float(wshape[1] * wshape[2])))
        params[name + "_w"] = scale * jax.random.normal(kw, wshape, jnp.float32)
        params[name + "_b"] = 0.1 * jax.random.normal(kb, (bdim,), jnp.float32)
    return params


# ----------------------------------------------------------------------------
# Pure-JAX reference (lax.conv, Precision.HIGHEST) for the correctness check
# ----------------------------------------------------------------------------
def _ref_conv1d(x, w, b, padding):
    y = lax.conv_general_dilated(
        x, w, window_strides=(1,), padding=((padding, padding),),
        dimension_numbers=("NCH", "OIH", "NCH"),
        precision=lax.Precision.HIGHEST)
    return y + b[None, :, None]


def _ref_tconv1d(x, w, b):
    w_conv = jnp.flip(w, axis=2).transpose(1, 0, 2)    # (Co, Ci, K)
    y = lax.conv_general_dilated(
        x, w_conv, window_strides=(1,), padding=((2, 2),), lhs_dilation=(2,),
        dimension_numbers=("NCH", "OIH", "NCH"),
        precision=lax.Precision.HIGHEST)
    return y + b[None, :, None]


def _ref_ln(x):
    m = jnp.mean(x, axis=-1, keepdims=True)
    v = jnp.mean((x - m) ** 2, axis=-1, keepdims=True)
    return (x - m) / jnp.sqrt(v + _LN_EPS)


def _ref_elu(x):
    return jnp.where(x > 0, x, jnp.exp(jnp.minimum(x, 0.0)) - 1.0)


def _ref_pool(x):
    N, C, L = x.shape
    return jnp.max(x.reshape(N, C, L // 2, 2), axis=-1)


def reference_forward(params, x, cond):
    inp = jnp.concatenate([x, cond], axis=-2)
    h = _ref_elu(_ref_ln(_ref_conv1d(inp, params["in_w"], params["in_b"], 0)))
    c1 = _ref_pool(_ref_elu(_ref_ln(_ref_conv1d(h, params["c1_w"], params["c1_b"], 1))))
    c2 = _ref_pool(_ref_elu(_ref_ln(_ref_conv1d(c1, params["c2_w"], params["c2_b"], 1))))
    h = _ref_pool(_ref_elu(_ref_ln(_ref_conv1d(c2, params["c3_w"], params["c3_b"], 1))))
    h = _ref_elu(_ref_ln(_ref_tconv1d(h, params["t1_w"], params["t1_b"])))
    h = _ref_elu(_ref_ln(_ref_tconv1d(jnp.concatenate([h, c2], 1),
                                      params["t2_w"], params["t2_b"])))
    h = _ref_elu(_ref_ln(_ref_tconv1d(jnp.concatenate([h, c1], 1),
                                      params["t3_w"], params["t3_b"])))
    h = _ref_conv1d(jnp.concatenate([h, inp], 1), params["out_w"], params["out_b"], 1)
    return 1.0 / (1.0 + jnp.exp(-h))


# ----------------------------------------------------------------------------
if __name__ == "__main__":
    key = jax.random.PRNGKey(0)
    N, x_ch, cond_ch, num_ch, S = 2, 4, 4, 8, 64
    input_ch = x_ch + cond_ch

    kx, kc, kp = jax.random.split(key, 3)
    x = jax.random.normal(kx, (N, x_ch, S), jnp.float32)
    cond = jax.random.normal(kc, (N, cond_ch, S), jnp.float32)
    params = init_params(kp, input_ch, num_ch)

    fwd = jax.jit(conv_autoencoder_forward)
    out = jax.block_until_ready(fwd(params, x, cond))
    assert out.shape == (N, num_ch, S), out.shape

    # Tolerance covers bf16 MXU operands (per perf review) vs the f32
    # Precision.HIGHEST reference; all LN/ELU/sigmoid math stays f32.
    ref = reference_forward(params, x, cond)
    max_err = float(jnp.max(jnp.abs(out - ref)))
    if not bool(jnp.allclose(out, ref, atol=2e-2, rtol=2e-2)):
        raise AssertionError(f"Pallas output mismatch vs reference, max|err|={max_err}")

    print("KERNEL_OK")
</pallas_src>

<mosaic_0001>
module attributes {stable_mosaic.version = 11 : i64} {
  func.func @kernel(%arg0: i32, %arg1: memref<8x128xf32, #tpu.memory_space<vmem>>, %arg2: memref<8x8xbf16, #tpu.memory_space<vmem>>, %arg3: memref<8x1xf32, #tpu.memory_space<vmem>>, %arg4: memref<16x24xbf16, #tpu.memory_space<vmem>>, %arg5: memref<16x1xf32, #tpu.memory_space<vmem>>, %arg6: memref<32x48xbf16, #tpu.memory_space<vmem>>, %arg7: memref<32x1xf32, #tpu.memory_space<vmem>>, %arg8: memref<32x96xbf16, #tpu.memory_space<vmem>>, %arg9: memref<32x1xf32, #tpu.memory_space<vmem>>, %arg10: memref<64x96xbf16, #tpu.memory_space<vmem>>, %arg11: memref<32x1xf32, #tpu.memory_space<vmem>>, %arg12: memref<32x192xbf16, #tpu.memory_space<vmem>>, %arg13: memref<16x1xf32, #tpu.memory_space<vmem>>, %arg14: memref<16x96xbf16, #tpu.memory_space<vmem>>, %arg15: memref<8x1xf32, #tpu.memory_space<vmem>>, %arg16: memref<8x48xf32, #tpu.memory_space<vmem>>, %arg17: memref<8x1xf32, #tpu.memory_space<vmem>>, %arg18: memref<128x128xbf16, #tpu.memory_space<vmem>>, %arg19: memref<128x128xbf16, #tpu.memory_space<vmem>>, %arg20: memref<64x64xbf16, #tpu.memory_space<vmem>>, %arg21: memref<64x64xbf16, #tpu.memory_space<vmem>>, %arg22: memref<32x32xbf16, #tpu.memory_space<vmem>>, %arg23: memref<32x32xbf16, #tpu.memory_space<vmem>>, %arg24: memref<16x16xbf16, #tpu.memory_space<vmem>>, %arg25: memref<16x16xbf16, #tpu.memory_space<vmem>>, %arg26: memref<128x64xbf16, #tpu.memory_space<vmem>>, %arg27: memref<128x64xbf16, #tpu.memory_space<vmem>>, %arg28: memref<64x32xbf16, #tpu.memory_space<vmem>>, %arg29: memref<64x32xbf16, #tpu.memory_space<vmem>>, %arg30: memref<32x16xbf16, #tpu.memory_space<vmem>>, %arg31: memref<32x16xbf16, #tpu.memory_space<vmem>>, %arg32: memref<16x32xbf16, #tpu.memory_space<vmem>>, %arg33: memref<16x32xbf16, #tpu.memory_space<vmem>>, %arg34: memref<32x64xbf16, #tpu.memory_space<vmem>>, %arg35: memref<32x64xbf16, #tpu.memory_space<vmem>>, %arg36: memref<64x128xbf16, #tpu.memory_space<vmem>>, %arg37: memref<64x128xbf16, #tpu.memory_space<vmem>>, %arg38: memref<8x128xf32, #tpu.memory_space<vmem>>) attributes {dimension_semantics = [#tpu.dimension_semantics<parallel>], iteration_bounds = array<i64: 1>, scalar_prefetch = 0 : i64, scratch_operands = 0 : i64, tpu.core_type = #tpu.core_type<tc>, window_params = [{transform_indices = @transform_0, window_bounds = array<i64: 8, 128>}, {pipeline_mode = #tpu.pipeline_mode<synchronous>, transform_indices = @transform_1, window_bounds = array<i64: 8, 8>}, {pipeline_mode = #tpu.pipeline_mode<synchronous>, transform_indices = @transform_2, window_bounds = array<i64: 8, 1>}, {pipeline_mode = #tpu.pipeline_mode<synchronous>, transform_indices = @transform_3, window_bounds = array<i64: 16, 24>}, {pipeline_mode = #tpu.pipeline_mode<synchronous>, transform_indices = @transform_4, window_bounds = array<i64: 16, 1>}, {pipeline_mode = #tpu.pipeline_mode<synchronous>, transform_indices = @transform_5, window_bounds = array<i64: 32, 48>}, {pipeline_mode = #tpu.pipeline_mode<synchronous>, transform_indices = @transform_6, window_bounds = array<i64: 32, 1>}, {pipeline_mode = #tpu.pipeline_mode<synchronous>, transform_indices = @transform_7, window_bounds = array<i64: 32, 96>}, {pipeline_mode = #tpu.pipeline_mode<synchronous>, transform_indices = @transform_8, window_bounds = array<i64: 32, 1>}, {pipeline_mode = #tpu.pipeline_mode<synchronous>, transform_indices = @transform_9, window_bounds = array<i64: 64, 96>}, {pipeline_mode = #tpu.pipeline_mode<synchronous>, transform_indices = @transform_10, window_bounds = array<i64: 32, 1>}, {pipeline_mode = #tpu.pipeline_mode<synchronous>, transform_indices = @transform_11, window_bounds = array<i64: 32, 192>}, {pipeline_mode = #tpu.pipeline_mode<synchronous>, transform_indices = @transform_12, window_bounds = array<i64: 16, 1>}, {pipeline_mode = #tpu.pipeline_mode<synchronous>, transform_indices = @transform_13, window_bounds = array<i64: 16, 96>}, {pipeline_mode = #tpu.pipeline_mode<synchronous>, transform_indices = @transform_14, window_bounds = array<i64: 8, 1>}, {pipeline_mode = #tpu.pipeline_mode<synchronous>, transform_indices = @transform_15, window_bounds = array<i64: 8, 48>}, {pipeline_mode = #tpu.pipeline_mode<synchronous>, transform_indices = @transform_16, window_bounds = array<i64: 8, 1>}, {pipeline_mode = #tpu.pipeline_mode<synchronous>, transform_indices = @transform_17, window_bounds = array<i64: 128, 128>}, {pipeline_mode = #tpu.pipeline_mode<synchronous>, transform_indices = @transform_18, window_bounds = array<i64: 128, 128>}, {pipeline_mode = #tpu.pipeline_mode<synchronous>, transform_indices = @transform_19, window_bounds = array<i64: 64, 64>}, {pipeline_mode = #tpu.pipeline_mode<synchronous>, transform_indices = @transform_20, window_bounds = array<i64: 64, 64>}, {pipeline_mode = #tpu.pipeline_mode<synchronous>, transform_indices = @transform_21, window_bounds = array<i64: 32, 32>}, {pipeline_mode = #tpu.pipeline_mode<synchronous>, transform_indices = @transform_22, window_bounds = array<i64: 32, 32>}, {pipeline_mode = #tpu.pipeline_mode<synchronous>, transform_indices = @transform_23, window_bounds = array<i64: 16, 16>}, {pipeline_mode = #tpu.pipeline_mode<synchronous>, transform_indices = @transform_24, window_bounds = array<i64: 16, 16>}, {pipeline_mode = #tpu.pipeline_mode<synchronous>, transform_indices = @transform_25, window_bounds = array<i64: 128, 64>}, {pipeline_mode = #tpu.pipeline_mode<synchronous>, transform_indices = @transform_26, window_bounds = array<i64: 128, 64>}, {pipeline_mode = #tpu.pipeline_mode<synchronous>, transform_indices = @transform_27, window_bounds = array<i64: 64, 32>}, {pipeline_mode = #tpu.pipeline_mode<synchronous>, transform_indices = @transform_28, window_bounds = array<i64: 64, 32>}, {pipeline_mode = #tpu.pipeline_mode<synchronous>, transform_indices = @transform_29, window_bounds = array<i64: 32, 16>}, {pipeline_mode = #tpu.pipeline_mode<synchronous>, transform_indices = @transform_30, window_bounds = array<i64: 32, 16>}, {pipeline_mode = #tpu.pipeline_mode<synchronous>, transform_indices = @transform_31, window_bounds = array<i64: 16, 32>}, {pipeline_mode = #tpu.pipeline_mode<synchronous>, transform_indices = @transform_32, window_bounds = array<i64: 16, 32>}, {pipeline_mode = #tpu.pipeline_mode<synchronous>, transform_indices = @transform_33, window_bounds = array<i64: 32, 64>}, {pipeline_mode = #tpu.pipeline_mode<synchronous>, transform_indices = @transform_34, window_bounds = array<i64: 32, 64>}, {pipeline_mode = #tpu.pipeline_mode<synchronous>, transform_indices = @transform_35, window_bounds = array<i64: 64, 128>}, {pipeline_mode = #tpu.pipeline_mode<synchronous>, transform_indices = @transform_36, window_bounds = array<i64: 64, 128>}, {transform_indices = @transform_37, window_bounds = array<i64: 8, 128>}]} {
    %c0 = arith.constant 0 : index
    %c0_0 = arith.constant 0 : index
    %0 = vector.load %arg1[%c0, %c0_0] : memref<8x128xf32, #tpu.memory_space<vmem>>, vector<8x128xf32>
    %c0_1 = arith.constant 0 : index
    %c0_2 = arith.constant 0 : index
    %1 = vector.load %arg2[%c0_1, %c0_2] : memref<8x8xbf16, #tpu.memory_space<vmem>>, vector<8x8xbf16>
    %2 = arith.truncf %0 : vector<8x128xf32> to vector<8x128xbf16>
    %cst = arith.constant dense<0.000000e+00> : vector<8x128xf32>
    %3 = tpu.matmul %1, %2, %cst {dimension_numbers = #tpu.dot_dimension_numbers<[1], [0], [0], [1], [0, 0, 1, 1], [], []>} : vector<8x8xbf16>, vector<8x128xbf16>, vector<8x128xf32> -> vector<8x128xf32>
    %c0_3 = arith.constant 0 : index
    %c0_4 = arith.constant 0 : index
    %4 = vector.load %arg3[%c0_3, %c0_4] : memref<8x1xf32, #tpu.memory_space<vmem>>, vector<8x1xf32>
    %5 = vector.broadcast %4 : vector<8x1xf32> to vector<8x128xf32>
    %6 = arith.addf %3, %5 : vector<8x128xf32>
    %7 = vector.extract_strided_slice %6 {offsets = [0, 0], sizes = [8, 64], strides = [1, 1]} : vector<8x128xf32> to vector<8x64xf32>
    %cst_5 = arith.constant dense<0.000000e+00> : vector<8xf32>
    %8 = vector.multi_reduction <add>, %7, %cst_5 [1] : vector<8x64xf32> to vector<8xf32>
    %9 = vector.shape_cast %8 : vector<8xf32> to vector<8x1xf32>
    %cst_6 = arith.constant 6.400000e+01 : f32
    %10 = vector.broadcast %cst_6 : f32 to vector<8x1xf32>
    %11 = arith.divf %9, %10 : vector<8x1xf32>
    %12 = vector.broadcast %11 : vector<8x1xf32> to vector<8x64xf32>
    %13 = arith.subf %7, %12 : vector<8x64xf32>
    %14 = arith.mulf %13, %13 : vector<8x64xf32>
    %cst_7 = arith.constant dense<0.000000e+00> : vector<8xf32>
    %15 = vector.multi_reduction <add>, %14, %cst_7 [1] : vector<8x64xf32> to vector<8xf32>
    %16 = vector.shape_cast %15 : vector<8xf32> to vector<8x1xf32>
    %cst_8 = arith.constant 6.400000e+01 : f32
    %17 = vector.broadcast %cst_8 : f32 to vector<8x1xf32>
    %18 = arith.divf %16, %17 : vector<8x1xf32>
    %cst_9 = arith.constant 9.99999974E-6 : f32
    %19 = vector.broadcast %cst_9 : f32 to vector<8x1xf32>
    %20 = arith.addf %18, %19 : vector<8x1xf32>
    %21 = math.rsqrt %20 : vector<8x1xf32>
    %22 = vector.broadcast %21 : vector<8x1xf32> to vector<8x64xf32>
    %23 = arith.mulf %13, %22 : vector<8x64xf32>
    %24 = vector.extract_strided_slice %6 {offsets = [0, 64], sizes = [8, 64], strides = [1, 1]} : vector<8x128xf32> to vector<8x64xf32>
    %cst_10 = arith.constant dense<0.000000e+00> : vector<8xf32>
    %25 = vector.multi_reduction <add>, %24, %cst_10 [1] : vector<8x64xf32> to vector<8xf32>
    %26 = vector.shape_cast %25 : vector<8xf32> to vector<8x1xf32>
    %cst_11 = arith.constant 6.400000e+01 : f32
    %27 = vector.broadcast %cst_11 : f32 to vector<8x1xf32>
    %28 = arith.divf %26, %27 : vector<8x1xf32>
    %29 = vector.broadcast %28 : vector<8x1xf32> to vector<8x64xf32>
    %30 = arith.subf %24, %29 : vector<8x64xf32>
    %31 = arith.mulf %30, %30 : vector<8x64xf32>
    %cst_12 = arith.constant dense<0.000000e+00> : vector<8xf32>
    %32 = vector.multi_reduction <add>, %31, %cst_12 [1] : vector<8x64xf32> to vector<8xf32>
    %33 = vector.shape_cast %32 : vector<8xf32> to vector<8x1xf32>
    %cst_13 = arith.constant 6.400000e+01 : f32
    %34 = vector.broadcast %cst_13 : f32 to vector<8x1xf32>
    %35 = arith.divf %33, %34 : vector<8x1xf32>
    %cst_14 = arith.constant 9.99999974E-6 : f32
    %36 = vector.broadcast %cst_14 : f32 to vector<8x1xf32>
    %37 = arith.addf %35, %36 : vector<8x1xf32>
    %38 = math.rsqrt %37 : vector<8x1xf32>
    %39 = vector.broadcast %38 : vector<8x1xf32> to vector<8x64xf32>
    %40 = arith.mulf %30, %39 : vector<8x64xf32>
    %41 = tpu.concatenate %23, %40 in 1 : vector<8x64xf32>, vector<8x64xf32> -> vector<8x128xf32>
    %cst_15 = arith.constant 0.000000e+00 : f32
    %42 = vector.broadcast %cst_15 : f32 to vector<8x128xf32>
    %43 = arith.cmpf ogt, %41, %42 : vector<8x128xf32>
    %cst_16 = arith.constant 0.000000e+00 : f32
    %44 = vector.broadcast %cst_16 : f32 to vector<8x128xf32>
    %45 = arith.minimumf %41, %44 : vector<8x128xf32>
    %46 = math.exp %45 : vector<8x128xf32>
    %cst_17 = arith.constant 1.000000e+00 : f32
    %47 = vector.broadcast %cst_17 : f32 to vector<8x128xf32>
    %48 = arith.subf %46, %47 : vector<8x128xf32>
    %49 = arith.select %43, %41, %48 : vector<8x128xi1>, vector<8x128xf32>
    %50 = arith.truncf %49 : vector<8x128xf32> to vector<8x128xbf16>
    %c0_18 = arith.constant 0 : index
    %c0_19 = arith.constant 0 : index
    %51 = vector.load %arg18[%c0_18, %c0_19] : memref<128x128xbf16, #tpu.memory_space<vmem>>, vector<128x128xbf16>
    %cst_20 = arith.constant dense<0.000000e+00> : vector<8x128xf32>
    %52 = tpu.matmul %50, %51, %cst_20 {dimension_numbers = #tpu.dot_dimension_numbers<[1], [0], [0], [1], [0, 0, 1, 1], [], []>} : vector<8x128xbf16>, vector<128x128xbf16>, vector<8x128xf32> -> vector<8x128xf32>
    %c0_21 = arith.constant 0 : index
    %c0_22 = arith.constant 0 : index
    %53 = vector.load %arg19[%c0_21, %c0_22] : memref<128x128xbf16, #tpu.memory_space<vmem>>, vector<128x128xbf16>
    %cst_23 = arith.constant dense<0.000000e+00> : vector<8x128xf32>
    %54 = tpu.matmul %50, %53, %cst_23 {dimension_numbers = #tpu.dot_dimension_numbers<[1], [0], [0], [1], [0, 0, 1, 1], [], []>} : vector<8x128xbf16>, vector<128x128xbf16>, vector<8x128xf32> -> vector<8x128xf32>
    %55 = tpu.concatenate %52, %49, %54 in 0 : vector<8x128xf32>, vector<8x128xf32>, vector<8x128xf32> -> vector<24x128xf32>
    %56 = arith.truncf %55 : vector<24x128xf32> to vector<24x128xbf16>
    %c0_24 = arith.constant 0 : index
    %c0_25 = arith.constant 0 : index
    %57 = vector.load %arg4[%c0_24, %c0_25] : memref<16x24xbf16, #tpu.memory_space<vmem>>, vector<16x24xbf16>
    %cst_26 = arith.constant dense<0.000000e+00> : vector<16x128xf32>
    %58 = tpu.matmul %57, %56, %cst_26 {dimension_numbers = #tpu.dot_dimension_numbers<[1], [0], [0], [1], [0, 0, 1, 1], [], []>} : vector<16x24xbf16>, vector<24x128xbf16>, vector<16x128xf32> -> vector<16x128xf32>
    %c0_27 = arith.constant 0 : index
    %c0_28 = arith.constant 0 : index
    %59 = vector.load %arg5[%c0_27, %c0_28] : memref<16x1xf32, #tpu.memory_space<vmem>>, vector<16x1xf32>
    %60 = vector.broadcast %59 : vector<16x1xf32> to vector<16x128xf32>
    %61 = arith.addf %58, %60 : vector<16x128xf32>
    %62 = vector.extract_strided_slice %61 {offsets = [0, 0], sizes = [16, 64], strides = [1, 1]} : vector<16x128xf32> to vector<16x64xf32>
    %cst_29 = arith.constant dense<0.000000e+00> : vector<16xf32>
    %63 = vector.multi_reduction <add>, %62, %cst_29 [1] : vector<16x64xf32> to vector<16xf32>
    %64 = vector.shape_cast %63 : vector<16xf32> to vector<16x1xf32>
    %cst_30 = arith.constant 6.400000e+01 : f32
    %65 = vector.broadcast %cst_30 : f32 to vector<16x1xf32>
    %66 = arith.divf %64, %65 : vector<16x1xf32>
    %67 = vector.broadcast %66 : vector<16x1xf32> to vector<16x64xf32>
    %68 = arith.subf %62, %67 : vector<16x64xf32>
    %69 = arith.mulf %68, %68 : vector<16x64xf32>
    %cst_31 = arith.constant dense<0.000000e+00> : vector<16xf32>
    %70 = vector.multi_reduction <add>, %69, %cst_31 [1] : vector<16x64xf32> to vector<16xf32>
    %71 = vector.shape_cast %70 : vector<16xf32> to vector<16x1xf32>
    %cst_32 = arith.constant 6.400000e+01 : f32
    %72 = vector.broadcast %cst_32 : f32 to vector<16x1xf32>
    %73 = arith.divf %71, %72 : vector<16x1xf32>
    %cst_33 = arith.constant 9.99999974E-6 : f32
    %74 = vector.broadcast %cst_33 : f32 to vector<16x1xf32>
    %75 = arith.addf %73, %74 : vector<16x1xf32>
    %76 = math.rsqrt %75 : vector<16x1xf32>
    %77 = vector.broadcast %76 : vector<16x1xf32> to vector<16x64xf32>
    %78 = arith.mulf %68, %77 : vector<16x64xf32>
    %79 = vector.extract_strided_slice %61 {offsets = [0, 64], sizes = [16, 64], strides = [1, 1]} : vector<16x128xf32> to vector<16x64xf32>
    %cst_34 = arith.constant dense<0.000000e+00> : vector<16xf32>
    %80 = vector.multi_reduction <add>, %79, %cst_34 [1] : vector<16x64xf32> to vector<16xf32>
    %81 = vector.shape_cast %80 : vector<16xf32> to vector<16x1xf32>
    %cst_35 = arith.constant 6.400000e+01 : f32
    %82 = vector.broadcast %cst_35 : f32 to vector<16x1xf32>
    %83 = arith.divf %81, %82 : vector<16x1xf32>
    %84 = vector.broadcast %83 : vector<16x1xf32> to vector<16x64xf32>
    %85 = arith.subf %79, %84 : vector<16x64xf32>
    %86 = arith.mulf %85, %85 : vector<16x64xf32>
    %cst_36 = arith.constant dense<0.000000e+00> : vector<16xf32>
    %87 = vector.multi_reduction <add>, %86, %cst_36 [1] : vector<16x64xf32> to vector<16xf32>
    %88 = vector.shape_cast %87 : vector<16xf32> to vector<16x1xf32>
    %cst_37 = arith.constant 6.400000e+01 : f32
    %89 = vector.broadcast %cst_37 : f32 to vector<16x1xf32>
    %90 = arith.divf %88, %89 : vector<16x1xf32>
    %cst_38 = arith.constant 9.99999974E-6 : f32
    %91 = vector.broadcast %cst_38 : f32 to vector<16x1xf32>
    %92 = arith.addf %90, %91 : vector<16x1xf32>
    %93 = math.rsqrt %92 : vector<16x1xf32>
    %94 = vector.broadcast %93 : vector<16x1xf32> to vector<16x64xf32>
    %95 = arith.mulf %85, %94 : vector<16x64xf32>
    %96 = tpu.concatenate %78, %95 in 1 : vector<16x64xf32>, vector<16x64xf32> -> vector<16x128xf32>
    %cst_39 = arith.constant 0.000000e+00 : f32
    %97 = vector.broadcast %cst_39 : f32 to vector<16x128xf32>
    %98 = arith.cmpf ogt, %96, %97 : vector<16x128xf32>
    %cst_40 = arith.constant 0.000000e+00 : f32
    %99 = vector.broadcast %cst_40 : f32 to vector<16x128xf32>
    %100 = arith.minimumf %96, %99 : vector<16x128xf32>
    %101 = math.exp %100 : vector<16x128xf32>
    %cst_41 = arith.constant 1.000000e+00 : f32
    %102 = vector.broadcast %cst_41 : f32 to vector<16x128xf32>
    %103 = arith.subf %101, %102 : vector<16x128xf32>
    %104 = arith.select %98, %96, %103 : vector<16x128xi1>, vector<16x128xf32>
    %105 = arith.truncf %104 : vector<16x128xf32> to vector<16x128xbf16>
    %c0_42 = arith.constant 0 : index
    %c0_43 = arith.constant 0 : index
    %106 = vector.load %arg26[%c0_42, %c0_43] : memref<128x64xbf16, #tpu.memory_space<vmem>>, vector<128x64xbf16>
    %cst_44 = arith.constant dense<0.000000e+00> : vector<16x64xf32>
    %107 = tpu.matmul %105, %106, %cst_44 {dimension_numbers = #tpu.dot_dimension_numbers<[1], [0], [0], [1], [0, 0, 1, 1], [], []>} : vector<16x128xbf16>, vector<128x64xbf16>, vector<16x64xf32> -> vector<16x64xf32>
    %c0_45 = arith.constant 0 : index
    %c0_46 = arith.constant 0 : index
    %108 = vector.load %arg27[%c0_45, %c0_46] : memref<128x64xbf16, #tpu.memory_space<vmem>>, vector<128x64xbf16>
    %cst_47 = arith.constant dense<0.000000e+00> : vector<16x64xf32>
    %109 = tpu.matmul %105, %108, %cst_47 {dimension_numbers = #tpu.dot_dimension_numbers<[1], [0], [0], [1], [0, 0, 1, 1], [], []>} : vector<16x128xbf16>, vector<128x64xbf16>, vector<16x64xf32> -> vector<16x64xf32>
    %110 = arith.maximumf %107, %109 : vector<16x64xf32>
    %111 = arith.truncf %110 : vector<16x64xf32> to vector<16x64xbf16>
    %c0_48 = arith.constant 0 : index
    %c0_49 = arith.constant 0 : index
    %112 = vector.load %arg20[%c0_48, %c0_49] : memref<64x64xbf16, #tpu.memory_space<vmem>>, vector<64x64xbf16>
    %cst_50 = arith.constant dense<0.000000e+00> : vector<16x64xf32>
    %113 = tpu.matmul %111, %112, %cst_50 {dimension_numbers = #tpu.dot_dimension_numbers<[1], [0], [0], [1], [0, 0, 1, 1], [], []>} : vector<16x64xbf16>, vector<64x64xbf16>, vector<16x64xf32> -> vector<16x64xf32>
    %c0_51 = arith.constant 0 : index
    %c0_52 = arith.constant 0 : index
    %114 = vector.load %arg21[%c0_51, %c0_52] : memref<64x64xbf16, #tpu.memory_space<vmem>>, vector<64x64xbf16>
    %cst_53 = arith.constant dense<0.000000e+00> : vector<16x64xf32>
    %115 = tpu.matmul %111, %114, %cst_53 {dimension_numbers = #tpu.dot_dimension_numbers<[1], [0], [0], [1], [0, 0, 1, 1], [], []>} : vector<16x64xbf16>, vector<64x64xbf16>, vector<16x64xf32> -> vector<16x64xf32>
    %116 = tpu.concatenate %113, %110, %115 in 0 : vector<16x64xf32>, vector<16x64xf32>, vector<16x64xf32> -> vector<48x64xf32>
    %117 = arith.truncf %116 : vector<48x64xf32> to vector<48x64xbf16>
    %c0_54 = arith.constant 0 : index
    %c0_55 = arith.constant 0 : index
    %118 = vector.load %arg6[%c0_54, %c0_55] : memref<32x48xbf16, #tpu.memory_space<vmem>>, vector<32x48xbf16>
    %cst_56 = arith.constant dense<0.000000e+00> : vector<32x64xf32>
    %119 = tpu.matmul %118, %117, %cst_56 {dimension_numbers = #tpu.dot_dimension_numbers<[1], [0], [0], [1], [0, 0, 1, 1], [], []>} : vector<32x48xbf16>, vector<48x64xbf16>, vector<32x64xf32> -> vector<32x64xf32>
    %c0_57 = arith.constant 0 : index
    %c0_58 = arith.constant 0 : index
    %120 = vector.load %arg7[%c0_57, %c0_58] : memref<32x1xf32, #tpu.memory_space<vmem>>, vector<32x1xf32>
    %121 = vector.broadcast %120 : vector<32x1xf32> to vector<32x64xf32>
    %122 = arith.addf %119, %121 : vector<32x64xf32>
    %123 = vector.extract_strided_slice %122 {offsets = [0, 0], sizes = [32, 32], strides = [1, 1]} : vector<32x64xf32> to vector<32x32xf32>
    %cst_59 = arith.constant dense<0.000000e+00> : vector<32xf32>
    %124 = vector.multi_reduction <add>, %123, %cst_59 [1] : vector<32x32xf32> to vector<32xf32>
    %125 = vector.shape_cast %124 : vector<32xf32> to vector<32x1xf32>
    %cst_60 = arith.constant 3.200000e+01 : f32
    %126 = vector.broadcast %cst_60 : f32 to vector<32x1xf32>
    %127 = arith.divf %125, %126 : vector<32x1xf32>
    %128 = vector.broadcast %127 : vector<32x1xf32> to vector<32x32xf32>
    %129 = arith.subf %123, %128 : vector<32x32xf32>
    %130 = arith.mulf %129, %129 : vector<32x32xf32>
    %cst_61 = arith.constant dense<0.000000e+00> : vector<32xf32>
    %131 = vector.multi_reduction <add>, %130, %cst_61 [1] : vector<32x32xf32> to vector<32xf32>
    %132 = vector.shape_cast %131 : vector<32xf32> to vector<32x1xf32>
    %cst_62 = arith.constant 3.200000e+01 : f32
    %133 = vector.broadcast %cst_62 : f32 to vector<32x1xf32>
    %134 = arith.divf %132, %133 : vector<32x1xf32>
    %cst_63 = arith.constant 9.99999974E-6 : f32
    %135 = vector.broadcast %cst_63 : f32 to vector<32x1xf32>
    %136 = arith.addf %134, %135 : vector<32x1xf32>
    %137 = math.rsqrt %136 : vector<32x1xf32>
    %138 = vector.broadcast %137 : vector<32x1xf32> to vector<32x32xf32>
    %139 = arith.mulf %129, %138 : vector<32x32xf32>
    %140 = vector.extract_strided_slice %122 {offsets = [0, 32], sizes = [32, 32], strides = [1, 1]} : vector<32x64xf32> to vector<32x32xf32>
    %cst_64 = arith.constant dense<0.000000e+00> : vector<32xf32>
    %141 = vector.multi_reduction <add>, %140, %cst_64 [1] : vector<32x32xf32> to vector<32xf32>
    %142 = vector.shape_cast %141 : vector<32xf32> to vector<32x1xf32>
    %cst_65 = arith.constant 3.200000e+01 : f32
    %143 = vector.broadcast %cst_65 : f32 to vector<32x1xf32>
    %144 = arith.divf %142, %143 : vector<32x1xf32>
    %145 = vector.broadcast %144 : vector<32x1xf32> to vector<32x32xf32>
    %146 = arith.subf %140, %145 : vector<32x32xf32>
    %147 = arith.mulf %146, %146 : vector<32x32xf32>
    %cst_66 = arith.constant dense<0.000000e+00> : vector<32xf32>
    %148 = vector.multi_reduction <add>, %147, %cst_66 [1] : vector<32x32xf32> to vector<32xf32>
    %149 = vector.shape_cast %148 : vector<32xf32> to vector<32x1xf32>
    %cst_67 = arith.constant 3.200000e+01 : f32
    %150 = vector.broadcast %cst_67 : f32 to vector<32x1xf32>
    %151 = arith.divf %149, %150 : vector<32x1xf32>
    %cst_68 = arith.constant 9.99999974E-6 : f32
    %152 = vector.broadcast %cst_68 : f32 to vector<32x1xf32>
    %153 = arith.addf %151, %152 : vector<32x1xf32>
    %154 = math.rsqrt %153 : vector<32x1xf32>
    %155 = vector.broadcast %154 : vector<32x1xf32> to vector<32x32xf32>
    %156 = arith.mulf %146, %155 : vector<32x32xf32>
    %157 = tpu.concatenate %139, %156 in 1 : vector<32x32xf32>, vector<32x32xf32> -> vector<32x64xf32>
    %cst_69 = arith.constant 0.000000e+00 : f32
    %158 = vector.broadcast %cst_69 : f32 to vector<32x64xf32>
    %159 = arith.cmpf ogt, %157, %158 : vector<32x64xf32>
    %cst_70 = arith.constant 0.000000e+00 : f32
    %160 = vector.broadcast %cst_70 : f32 to vector<32x64xf32>
    %161 = arith.minimumf %157, %160 : vector<32x64xf32>
    %162 = math.exp %161 : vector<32x64xf32>
    %cst_71 = arith.constant 1.000000e+00 : f32
    %163 = vector.broadcast %cst_71 : f32 to vector<32x64xf32>
    %164 = arith.subf %162, %163 : vector<32x64xf32>
    %165 = arith.select %159, %157, %164 : vector<32x64xi1>, vector<32x64xf32>
    %166 = arith.truncf %165 : vector<32x64xf32> to vector<32x64xbf16>
    %c0_72 = arith.constant 0 : index
    %c0_73 = arith.constant 0 : index
    %167 = vector.load %arg28[%c0_72, %c0_73] : memref<64x32xbf16, #tpu.memory_space<vmem>>, vector<64x32xbf16>
    %cst_74 = arith.constant dense<0.000000e+00> : vector<32x32xf32>
    %168 = tpu.matmul %166, %167, %cst_74 {dimension_numbers = #tpu.dot_dimension_numbers<[1], [0], [0], [1], [0, 0, 1, 1], [], []>} : vector<32x64xbf16>, vector<64x32xbf16>, vector<32x32xf32> -> vector<32x32xf32>
    %c0_75 = arith.constant 0 : index
    %c0_76 = arith.constant 0 : index
    %169 = vector.load %arg29[%c0_75, %c0_76] : memref<64x32xbf16, #tpu.memory_space<vmem>>, vector<64x32xbf16>
    %cst_77 = arith.constant dense<0.000000e+00> : vector<32x32xf32>
    %170 = tpu.matmul %166, %169, %cst_77 {dimension_numbers = #tpu.dot_dimension_numbers<[1], [0], [0], [1], [0, 0, 1, 1], [], []>} : vector<32x64xbf16>, vector<64x32xbf16>, vector<32x32xf32> -> vector<32x32xf32>
    %171 = arith.maximumf %168, %170 : vector<32x32xf32>
    %172 = arith.truncf %171 : vector<32x32xf32> to vector<32x32xbf16>
    %c0_78 = arith.constant 0 : index
    %c0_79 = arith.constant 0 : index
    %173 = vector.load %arg22[%c0_78, %c0_79] : memref<32x32xbf16, #tpu.memory_space<vmem>>, vector<32x32xbf16>
    %cst_80 = arith.constant dense<0.000000e+00> : vector<32x32xf32>
    %174 = tpu.matmul %172, %173, %cst_80 {dimension_numbers = #tpu.dot_dimension_numbers<[1], [0], [0], [1], [0, 0, 1, 1], [], []>} : vector<32x32xbf16>, vector<32x32xbf16>, vector<32x32xf32> -> vector<32x32xf32>
    %c0_81 = arith.constant 0 : index
    %c0_82 = arith.constant 0 : index
    %175 = vector.load %arg23[%c0_81, %c0_82] : memref<32x32xbf16, #tpu.memory_space<vmem>>, vector<32x32xbf16>
    %cst_83 = arith.constant dense<0.000000e+00> : vector<32x32xf32>
    %176 = tpu.matmul %172, %175, %cst_83 {dimension_numbers = #tpu.dot_dimension_numbers<[1], [0], [0], [1], [0, 0, 1, 1], [], []>} : vector<32x32xbf16>, vector<32x32xbf16>, vector<32x32xf32> -> vector<32x32xf32>
    %177 = tpu.concatenate %174, %171, %176 in 0 : vector<32x32xf32>, vector<32x32xf32>, vector<32x32xf32> -> vector<96x32xf32>
    %178 = arith.truncf %177 : vector<96x32xf32> to vector<96x32xbf16>
    %c0_84 = arith.constant 0 : index
    %c0_85 = arith.constant 0 : index
    %179 = vector.load %arg8[%c0_84, %c0_85] : memref<32x96xbf16, #tpu.memory_space<vmem>>, vector<32x96xbf16>
    %cst_86 = arith.constant dense<0.000000e+00> : vector<32x32xf32>
    %180 = tpu.matmul %179, %178, %cst_86 {dimension_numbers = #tpu.dot_dimension_numbers<[1], [0], [0], [1], [0, 0, 1, 1], [], []>} : vector<32x96xbf16>, vector<96x32xbf16>, vector<32x32xf32> -> vector<32x32xf32>
    %c0_87 = arith.constant 0 : index
    %c0_88 = arith.constant 0 : index
    %181 = vector.load %arg9[%c0_87, %c0_88] : memref<32x1xf32, #tpu.memory_space<vmem>>, vector<32x1xf32>
    %182 = vector.broadcast %181 : vector<32x1xf32> to vector<32x32xf32>
    %183 = arith.addf %180, %182 : vector<32x32xf32>
    %184 = vector.extract_strided_slice %183 {offsets = [0, 0], sizes = [32, 16], strides = [1, 1]} : vector<32x32xf32> to vector<32x16xf32>
    %cst_89 = arith.constant dense<0.000000e+00> : vector<32xf32>
    %185 = vector.multi_reduction <add>, %184, %cst_89 [1] : vector<32x16xf32> to vector<32xf32>
    %186 = vector.shape_cast %185 : vector<32xf32> to vector<32x1xf32>
    %cst_90 = arith.constant 1.600000e+01 : f32
    %187 = vector.broadcast %cst_90 : f32 to vector<32x1xf32>
    %188 = arith.divf %186, %187 : vector<32x1xf32>
    %189 = vector.broadcast %188 : vector<32x1xf32> to vector<32x16xf32>
    %190 = arith.subf %184, %189 : vector<32x16xf32>
    %191 = arith.mulf %190, %190 : vector<32x16xf32>
    %cst_91 = arith.constant dense<0.000000e+00> : vector<32xf32>
    %192 = vector.multi_reduction <add>, %191, %cst_91 [1] : vector<32x16xf32> to vector<32xf32>
    %193 = vector.shape_cast %192 : vector<32xf32> to vector<32x1xf32>
    %cst_92 = arith.constant 1.600000e+01 : f32
    %194 = vector.broadcast %cst_92 : f32 to vector<32x1xf32>
    %195 = arith.divf %193, %194 : vector<32x1xf32>
    %cst_93 = arith.constant 9.99999974E-6 : f32
    %196 = vector.broadcast %cst_93 : f32 to vector<32x1xf32>
    %197 = arith.addf %195, %196 : vector<32x1xf32>
    %198 = math.rsqrt %197 : vector<32x1xf32>
    %199 = vector.broadcast %198 : vector<32x1xf32> to vector<32x16xf32>
    %200 = arith.mulf %190, %199 : vector<32x16xf32>
    %201 = vector.extract_strided_slice %183 {offsets = [0, 16], sizes = [32, 16], strides = [1, 1]} : vector<32x32xf32> to vector<32x16xf32>
    %cst_94 = arith.constant dense<0.000000e+00> : vector<32xf32>
    %202 = vector.multi_reduction <add>, %201, %cst_94 [1] : vector<32x16xf32> to vector<32xf32>
    %203 = vector.shape_cast %202 : vector<32xf32> to vector<32x1xf32>
    %cst_95 = arith.constant 1.600000e+01 : f32
    %204 = vector.broadcast %cst_95 : f32 to vector<32x1xf32>
    %205 = arith.divf %203, %204 : vector<32x1xf32>
    %206 = vector.broadcast %205 : vector<32x1xf32> to vector<32x16xf32>
    %207 = arith.subf %201, %206 : vector<32x16xf32>
    %208 = arith.mulf %207, %207 : vector<32x16xf32>
    %cst_96 = arith.constant dense<0.000000e+00> : vector<32xf32>
    %209 = vector.multi_reduction <add>, %208, %cst_96 [1] : vector<32x16xf32> to vector<32xf32>
    %210 = vector.shape_cast %209 : vector<32xf32> to vector<32x1xf32>
    %cst_97 = arith.constant 1.600000e+01 : f32
    %211 = vector.broadcast %cst_97 : f32 to vector<32x1xf32>
    %212 = arith.divf %210, %211 : vector<32x1xf32>
    %cst_98 = arith.constant 9.99999974E-6 : f32
    %213 = vector.broadcast %cst_98 : f32 to vector<32x1xf32>
    %214 = arith.addf %212, %213 : vector<32x1xf32>
    %215 = math.rsqrt %214 : vector<32x1xf32>
    %216 = vector.broadcast %215 : vector<32x1xf32> to vector<32x16xf32>
    %217 = arith.mulf %207, %216 : vector<32x16xf32>
    %218 = tpu.concatenate %200, %217 in 1 : vector<32x16xf32>, vector<32x16xf32> -> vector<32x32xf32>
    %cst_99 = arith.constant 0.000000e+00 : f32
    %219 = vector.broadcast %cst_99 : f32 to vector<32x32xf32>
    %220 = arith.cmpf ogt, %218, %219 : vector<32x32xf32>
    %cst_100 = arith.constant 0.000000e+00 : f32
    %221 = vector.broadcast %cst_100 : f32 to vector<32x32xf32>
    %222 = arith.minimumf %218, %221 : vector<32x32xf32>
    %223 = math.exp %222 : vector<32x32xf32>
    %cst_101 = arith.constant 1.000000e+00 : f32
    %224 = vector.broadcast %cst_101 : f32 to vector<32x32xf32>
    %225 = arith.subf %223, %224 : vector<32x32xf32>
    %226 = arith.select %220, %218, %225 : vector<32x32xi1>, vector<32x32xf32>
    %227 = arith.truncf %226 : vector<32x32xf32> to vector<32x32xbf16>
    %c0_102 = arith.constant 0 : index
    %c0_103 = arith.constant 0 : index
    %228 = vector.load %arg30[%c0_102, %c0_103] : memref<32x16xbf16, #tpu.memory_space<vmem>>, vector<32x16xbf16>
    %cst_104 = arith.constant dense<0.000000e+00> : vector<32x16xf32>
    %229 = tpu.matmul %227, %228, %cst_104 {dimension_numbers = #tpu.dot_dimension_numbers<[1], [0], [0], [1], [0, 0, 1, 1], [], []>} : vector<32x32xbf16>, vector<32x16xbf16>, vector<32x16xf32> -> vector<32x16xf32>
    %c0_105 = arith.constant 0 : index
    %c0_106 = arith.constant 0 : index
    %230 = vector.load %arg31[%c0_105, %c0_106] : memref<32x16xbf16, #tpu.memory_space<vmem>>, vector<32x16xbf16>
    %cst_107 = arith.constant dense<0.000000e+00> : vector<32x16xf32>
    %231 = tpu.matmul %227, %230, %cst_107 {dimension_numbers = #tpu.dot_dimension_numbers<[1], [0], [0], [1], [0, 0, 1, 1], [], []>} : vector<32x32xbf16>, vector<32x16xbf16>, vector<32x16xf32> -> vector<32x16xf32>
    %232 = arith.maximumf %229, %231 : vector<32x16xf32>
    %233 = arith.truncf %232 : vector<32x16xf32> to vector<32x16xbf16>
    %c0_108 = arith.constant 0 : index
    %c0_109 = arith.constant 0 : index
    %234 = vector.load %arg24[%c0_108, %c0_109] : memref<16x16xbf16, #tpu.memory_space<vmem>>, vector<16x16xbf16>
    %cst_110 = arith.constant dense<0.000000e+00> : vector<32x16xf32>
    %235 = tpu.matmul %233, %234, %cst_110 {dimension_numbers = #tpu.dot_dimension_numbers<[1], [0], [0], [1], [0, 0, 1, 1], [], []>} : vector<32x16xbf16>, vector<16x16xbf16>, vector<32x16xf32> -> vector<32x16xf32>
    %c0_111 = arith.constant 0 : index
    %c0_112 = arith.constant 0 : index
    %236 = vector.load %arg25[%c0_111, %c0_112] : memref<16x16xbf16, #tpu.memory_space<vmem>>, vector<16x16xbf16>
    %cst_113 = arith.constant dense<0.000000e+00> : vector<32x16xf32>
    %237 = tpu.matmul %233, %236, %cst_113 {dimension_numbers = #tpu.dot_dimension_numbers<[1], [0], [0], [1], [0, 0, 1, 1], [], []>} : vector<32x16xbf16>, vector<16x16xbf16>, vector<32x16xf32> -> vector<32x16xf32>
    %238 = tpu.concatenate %235, %232, %237 in 0 : vector<32x16xf32>, vector<32x16xf32>, vector<32x16xf32> -> vector<96x16xf32>
    %239 = arith.truncf %238 : vector<96x16xf32> to vector<96x16xbf16>
    %c0_114 = arith.constant 0 : index
    %c0_115 = arith.constant 0 : index
    %240 = vector.load %arg10[%c0_114, %c0_115] : memref<64x96xbf16, #tpu.memory_space<vmem>>, vector<64x96xbf16>
    %cst_116 = arith.constant dense<0.000000e+00> : vector<64x16xf32>
    %241 = tpu.matmul %240, %239, %cst_116 {dimension_numbers = #tpu.dot_dimension_numbers<[1], [0], [0], [1], [0, 0, 1, 1], [], []>} : vector<64x96xbf16>, vector<96x16xbf16>, vector<64x16xf32> -> vector<64x16xf32>
    %242 = vector.extract_strided_slice %241 {offsets = [0, 0], sizes = [32, 16], strides = [1, 1]} : vector<64x16xf32> to vector<32x16xf32>
    %243 = arith.truncf %242 : vector<32x16xf32> to vector<32x16xbf16>
    %244 = vector.extract_strided_slice %241 {offsets = [32, 0], sizes = [32, 16], strides = [1, 1]} : vector<64x16xf32> to vector<32x16xf32>
    %245 = arith.truncf %244 : vector<32x16xf32> to vector<32x16xbf16>
    %c0_117 = arith.constant 0 : index
    %c0_118 = arith.constant 0 : index
    %246 = vector.load %arg32[%c0_117, %c0_118] : memref<16x32xbf16, #tpu.memory_space<vmem>>, vector<16x32xbf16>
    %cst_119 = arith.constant dense<0.000000e+00> : vector<32x32xf32>
    %247 = tpu.matmul %243, %246, %cst_119 {dimension_numbers = #tpu.dot_dimension_numbers<[1], [0], [0], [1], [0, 0, 1, 1], [], []>} : vector<32x16xbf16>, vector<16x32xbf16>, vector<32x32xf32> -> vector<32x32xf32>
    %c0_120 = arith.constant 0 : index
    %c0_121 = arith.constant 0 : index
    %248 = vector.load %arg33[%c0_120, %c0_121] : memref<16x32xbf16, #tpu.memory_space<vmem>>, vector<16x32xbf16>
    %cst_122 = arith.constant dense<0.000000e+00> : vector<32x32xf32>
    %249 = tpu.matmul %245, %248, %cst_122 {dimension_numbers = #tpu.dot_dimension_numbers<[1], [0], [0], [1], [0, 0, 1, 1], [], []>} : vector<32x16xbf16>, vector<16x32xbf16>, vector<32x32xf32> -> vector<32x32xf32>
    %250 = arith.addf %247, %249 : vector<32x32xf32>
    %c0_123 = arith.constant 0 : index
    %c0_124 = arith.constant 0 : index
    %251 = vector.load %arg11[%c0_123, %c0_124] : memref<32x1xf32, #tpu.memory_space<vmem>>, vector<32x1xf32>
    %252 = vector.broadcast %251 : vector<32x1xf32> to vector<32x32xf32>
    %253 = arith.addf %250, %252 : vector<32x32xf32>
    %254 = vector.extract_strided_slice %253 {offsets = [0, 0], sizes = [32, 16], strides = [1, 1]} : vector<32x32xf32> to vector<32x16xf32>
    %cst_125 = arith.constant dense<0.000000e+00> : vector<32xf32>
    %255 = vector.multi_reduction <add>, %254, %cst_125 [1] : vector<32x16xf32> to vector<32xf32>
    %256 = vector.shape_cast %255 : vector<32xf32> to vector<32x1xf32>
    %cst_126 = arith.constant 1.600000e+01 : f32
    %257 = vector.broadcast %cst_126 : f32 to vector<32x1xf32>
    %258 = arith.divf %256, %257 : vector<32x1xf32>
    %259 = vector.broadcast %258 : vector<32x1xf32> to vector<32x16xf32>
    %260 = arith.subf %254, %259 : vector<32x16xf32>
    %261 = arith.mulf %260, %260 : vector<32x16xf32>
    %cst_127 = arith.constant dense<0.000000e+00> : vector<32xf32>
    %262 = vector.multi_reduction <add>, %261, %cst_127 [1] : vector<32x16xf32> to vector<32xf32>
    %263 = vector.shape_cast %262 : vector<32xf32> to vector<32x1xf32>
    %cst_128 = arith.constant 1.600000e+01 : f32
    %264 = vector.broadcast %cst_128 : f32 to vector<32x1xf32>
    %265 = arith.divf %263, %264 : vector<32x1xf32>
    %cst_129 = arith.constant 9.99999974E-6 : f32
    %266 = vector.broadcast %cst_129 : f32 to vector<32x1xf32>
    %267 = arith.addf %265, %266 : vector<32x1xf32>
    %268 = math.rsqrt %267 : vector<32x1xf32>
    %269 = vector.broadcast %268 : vector<32x1xf32> to vector<32x16xf32>
    %270 = arith.mulf %260, %269 : vector<32x16xf32>
    %271 = vector.extract_strided_slice %253 {offsets = [0, 16], sizes = [32, 16], strides = [1, 1]} : vector<32x32xf32> to vector<32x16xf32>
    %cst_130 = arith.constant dense<0.000000e+00> : vector<32xf32>
    %272 = vector.multi_reduction <add>, %271, %cst_130 [1] : vector<32x16xf32> to vector<32xf32>
    %273 = vector.shape_cast %272 : vector<32xf32> to vector<32x1xf32>
    %cst_131 = arith.constant 1.600000e+01 : f32
    %274 = vector.broadcast %cst_131 : f32 to vector<32x1xf32>
    %275 = arith.divf %273, %274 : vector<32x1xf32>
    %276 = vector.broadcast %275 : vector<32x1xf32> to vector<32x16xf32>
    %277 = arith.subf %271, %276 : vector<32x16xf32>
    %278 = arith.mulf %277, %277 : vector<32x16xf32>
    %cst_132 = arith.constant dense<0.000000e+00> : vector<32xf32>
    %279 = vector.multi_reduction <add>, %278, %cst_132 [1] : vector<32x16xf32> to vector<32xf32>
    %280 = vector.shape_cast %279 : vector<32xf32> to vector<32x1xf32>
    %cst_133 = arith.constant 1.600000e+01 : f32
    %281 = vector.broadcast %cst_133 : f32 to vector<32x1xf32>
    %282 = arith.divf %280, %281 : vector<32x1xf32>
    %cst_134 = arith.constant 9.99999974E-6 : f32
    %283 = vector.broadcast %cst_134 : f32 to vector<32x1xf32>
    %284 = arith.addf %282, %283 : vector<32x1xf32>
    %285 = math.rsqrt %284 : vector<32x1xf32>
    %286 = vector.broadcast %285 : vector<32x1xf32> to vector<32x16xf32>
    %287 = arith.mulf %277, %286 : vector<32x16xf32>
    %288 = tpu.concatenate %270, %287 in 1 : vector<32x16xf32>, vector<32x16xf32> -> vector<32x32xf32>
    %cst_135 = arith.constant 0.000000e+00 : f32
    %289 = vector.broadcast %cst_135 : f32 to vector<32x32xf32>
    %290 = arith.cmpf ogt, %288, %289 : vector<32x32xf32>
    %cst_136 = arith.constant 0.000000e+00 : f32
    %291 = vector.broadcast %cst_136 : f32 to vector<32x32xf32>
    %292 = arith.minimumf %288, %291 : vector<32x32xf32>
    %293 = math.exp %292 : vector<32x32xf32>
    %cst_137 = arith.constant 1.000000e+00 : f32
    %294 = vector.broadcast %cst_137 : f32 to vector<32x32xf32>
    %295 = arith.subf %293, %294 : vector<32x32xf32>
    %296 = arith.select %290, %288, %295 : vector<32x32xi1>, vector<32x32xf32>
    %297 = tpu.concatenate %296, %171 in 0 : vector<32x32xf32>, vector<32x32xf32> -> vector<64x32xf32>
    %298 = arith.truncf %297 : vector<64x32xf32> to vector<64x32xbf16>
    %c0_138 = arith.constant 0 : index
    %c0_139 = arith.constant 0 : index
    %299 = vector.load %arg22[%c0_138, %c0_139] : memref<32x32xbf16, #tpu.memory_space<vmem>>, vector<32x32xbf16>
    %cst_140 = arith.constant dense<0.000000e+00> : vector<64x32xf32>
    %300 = tpu.matmul %298, %299, %cst_140 {dimension_numbers = #tpu.dot_dimension_numbers<[1], [0], [0], [1], [0, 0, 1, 1], [], []>} : vector<64x32xbf16>, vector<32x32xbf16>, vector<64x32xf32> -> vector<64x32xf32>
    %c0_141 = arith.constant 0 : index
    %c0_142 = arith.constant 0 : index
    %301 = vector.load %arg23[%c0_141, %c0_142] : memref<32x32xbf16, #tpu.memory_space<vmem>>, vector<32x32xbf16>
    %cst_143 = arith.constant dense<0.000000e+00> : vector<64x32xf32>
    %302 = tpu.matmul %298, %301, %cst_143 {dimension_numbers = #tpu.dot_dimension_numbers<[1], [0], [0], [1], [0, 0, 1, 1], [], []>} : vector<64x32xbf16>, vector<32x32xbf16>, vector<64x32xf32> -> vector<64x32xf32>
    %303 = tpu.concatenate %300, %297, %302 in 0 : vector<64x32xf32>, vector<64x32xf32>, vector<64x32xf32> -> vector<192x32xf32>
    %304 = arith.truncf %303 : vector<192x32xf32> to vector<192x32xbf16>
    %c0_144 = arith.constant 0 : index
    %c0_145 = arith.constant 0 : index
    %305 = vector.load %arg12[%c0_144, %c0_145] : memref<32x192xbf16, #tpu.memory_space<vmem>>, vector<32x192xbf16>
    %cst_146 = arith.constant dense<0.000000e+00> : vector<32x32xf32>
    %306 = tpu.matmul %305, %304, %cst_146 {dimension_numbers = #tpu.dot_dimension_numbers<[1], [0], [0], [1], [0, 0, 1, 1], [], []>} : vector<32x192xbf16>, vector<192x32xbf16>, vector<32x32xf32> -> vector<32x32xf32>
    %307 = vector.extract_strided_slice %306 {offsets = [0, 0], sizes = [16, 32], strides = [1, 1]} : vector<32x32xf32> to vector<16x32xf32>
    %308 = arith.truncf %307 : vector<16x32xf32> to vector<16x32xbf16>
    %309 = vector.extract_strided_slice %306 {offsets = [16, 0], sizes = [16, 32], strides = [1, 1]} : vector<32x32xf32> to vector<16x32xf32>
    %310 = arith.truncf %309 : vector<16x32xf32> to vector<16x32xbf16>
    %c0_147 = arith.constant 0 : index
    %c0_148 = arith.constant 0 : index
    %311 = vector.load %arg34[%c0_147, %c0_148] : memref<32x64xbf16, #tpu.memory_space<vmem>>, vector<32x64xbf16>
    %cst_149 = arith.constant dense<0.000000e+00> : vector<16x64xf32>
    %312 = tpu.matmul %308, %311, %cst_149 {dimension_numbers = #tpu.dot_dimension_numbers<[1], [0], [0], [1], [0, 0, 1, 1], [], []>} : vector<16x32xbf16>, vector<32x64xbf16>, vector<16x64xf32> -> vector<16x64xf32>
    %c0_150 = arith.constant 0 : index
    %c0_151 = arith.constant 0 : index
    %313 = vector.load %arg35[%c0_150, %c0_151] : memref<32x64xbf16, #tpu.memory_space<vmem>>, vector<32x64xbf16>
    %cst_152 = arith.constant dense<0.000000e+00> : vector<16x64xf32>
    %314 = tpu.matmul %310, %313, %cst_152 {dimension_numbers = #tpu.dot_dimension_numbers<[1], [0], [0], [1], [0, 0, 1, 1], [], []>} : vector<16x32xbf16>, vector<32x64xbf16>, vector<16x64xf32> -> vector<16x64xf32>
    %315 = arith.addf %312, %314 : vector<16x64xf32>
    %c0_153 = arith.constant 0 : index
    %c0_154 = arith.constant 0 : index
    %316 = vector.load %arg13[%c0_153, %c0_154] : memref<16x1xf32, #tpu.memory_space<vmem>>, vector<16x1xf32>
    %317 = vector.broadcast %316 : vector<16x1xf32> to vector<16x64xf32>
    %318 = arith.addf %315, %317 : vector<16x64xf32>
    %319 = vector.extract_strided_slice %318 {offsets = [0, 0], sizes = [16, 32], strides = [1, 1]} : vector<16x64xf32> to vector<16x32xf32>
    %cst_155 = arith.constant dense<0.000000e+00> : vector<16xf32>
    %320 = vector.multi_reduction <add>, %319, %cst_155 [1] : vector<16x32xf32> to vector<16xf32>
    %321 = vector.shape_cast %320 : vector<16xf32> to vector<16x1xf32>
    %cst_156 = arith.constant 3.200000e+01 : f32
    %322 = vector.broadcast %cst_156 : f32 to vector<16x1xf32>
    %323 = arith.divf %321, %322 : vector<16x1xf32>
    %324 = vector.broadcast %323 : vector<16x1xf32> to vector<16x32xf32>
    %325 = arith.subf %319, %324 : vector<16x32xf32>
    %326 = arith.mulf %325, %325 : vector<16x32xf32>
    %cst_157 = arith.constant dense<0.000000e+00> : vector<16xf32>
    %327 = vector.multi_reduction <add>, %326, %cst_157 [1] : vector<16x32xf32> to vector<16xf32>
    %328 = vector.shape_cast %327 : vector<16xf32> to vector<16x1xf32>
    %cst_158 = arith.constant 3.200000e+01 : f32
    %329 = vector.broadcast %cst_158 : f32 to vector<16x1xf32>
    %330 = arith.divf %328, %329 : vector<16x1xf32>
    %cst_159 = arith.constant 9.99999974E-6 : f32
    %331 = vector.broadcast %cst_159 : f32 to vector<16x1xf32>
    %332 = arith.addf %330, %331 : vector<16x1xf32>
    %333 = math.rsqrt %332 : vector<16x1xf32>
    %334 = vector.broadcast %333 : vector<16x1xf32> to vector<16x32xf32>
    %335 = arith.mulf %325, %334 : vector<16x32xf32>
    %336 = vector.extract_strided_slice %318 {offsets = [0, 32], sizes = [16, 32], strides = [1, 1]} : vector<16x64xf32> to vector<16x32xf32>
    %cst_160 = arith.constant dense<0.000000e+00> : vector<16xf32>
    %337 = vector.multi_reduction <add>, %336, %cst_160 [1] : vector<16x32xf32> to vector<16xf32>
    %338 = vector.shape_cast %337 : vector<16xf32> to vector<16x1xf32>
    %cst_161 = arith.constant 3.200000e+01 : f32
    %339 = vector.broadcast %cst_161 : f32 to vector<16x1xf32>
    %340 = arith.divf %338, %339 : vector<16x1xf32>
    %341 = vector.broadcast %340 : vector<16x1xf32> to vector<16x32xf32>
    %342 = arith.subf %336, %341 : vector<16x32xf32>
    %343 = arith.mulf %342, %342 : vector<16x32xf32>
    %cst_162 = arith.constant dense<0.000000e+00> : vector<16xf32>
    %344 = vector.multi_reduction <add>, %343, %cst_162 [1] : vector<16x32xf32> to vector<16xf32>
    %345 = vector.shape_cast %344 : vector<16xf32> to vector<16x1xf32>
    %cst_163 = arith.constant 3.200000e+01 : f32
    %346 = vector.broadcast %cst_163 : f32 to vector<16x1xf32>
    %347 = arith.divf %345, %346 : vector<16x1xf32>
    %cst_164 = arith.constant 9.99999974E-6 : f32
    %348 = vector.broadcast %cst_164 : f32 to vector<16x1xf32>
    %349 = arith.addf %347, %348 : vector<16x1xf32>
    %350 = math.rsqrt %349 : vector<16x1xf32>
    %351 = vector.broadcast %350 : vector<16x1xf32> to vector<16x32xf32>
    %352 = arith.mulf %342, %351 : vector<16x32xf32>
    %353 = tpu.concatenate %335, %352 in 1 : vector<16x32xf32>, vector<16x32xf32> -> vector<16x64xf32>
    %cst_165 = arith.constant 0.000000e+00 : f32
    %354 = vector.broadcast %cst_165 : f32 to vector<16x64xf32>
    %355 = arith.cmpf ogt, %353, %354 : vector<16x64xf32>
    %cst_166 = arith.constant 0.000000e+00 : f32
    %356 = vector.broadcast %cst_166 : f32 to vector<16x64xf32>
    %357 = arith.minimumf %353, %356 : vector<16x64xf32>
    %358 = math.exp %357 : vector<16x64xf32>
    %cst_167 = arith.constant 1.000000e+00 : f32
    %359 = vector.broadcast %cst_167 : f32 to vector<16x64xf32>
    %360 = arith.subf %358, %359 : vector<16x64xf32>
    %361 = arith.select %355, %353, %360 : vector<16x64xi1>, vector<16x64xf32>
    %362 = tpu.concatenate %361, %110 in 0 : vector<16x64xf32>, vector<16x64xf32> -> vector<32x64xf32>
    %363 = arith.truncf %362 : vector<32x64xf32> to vector<32x64xbf16>
    %c0_168 = arith.constant 0 : index
    %c0_169 = arith.constant 0 : index
    %364 = vector.load %arg20[%c0_168, %c0_169] : memref<64x64xbf16, #tpu.memory_space<vmem>>, vector<64x64xbf16>
    %cst_170 = arith.constant dense<0.000000e+00> : vector<32x64xf32>
    %365 = tpu.matmul %363, %364, %cst_170 {dimension_numbers = #tpu.dot_dimension_numbers<[1], [0], [0], [1], [0, 0, 1, 1], [], []>} : vector<32x64xbf16>, vector<64x64xbf16>, vector<32x64xf32> -> vector<32x64xf32>
    %c0_171 = arith.constant 0 : index
    %c0_172 = arith.constant 0 : index
    %366 = vector.load %arg21[%c0_171, %c0_172] : memref<64x64xbf16, #tpu.memory_space<vmem>>, vector<64x64xbf16>
    %cst_173 = arith.constant dense<0.000000e+00> : vector<32x64xf32>
    %367 = tpu.matmul %363, %366, %cst_173 {dimension_numbers = #tpu.dot_dimension_numbers<[1], [0], [0], [1], [0, 0, 1, 1], [], []>} : vector<32x64xbf16>, vector<64x64xbf16>, vector<32x64xf32> -> vector<32x64xf32>
    %368 = tpu.concatenate %365, %362, %367 in 0 : vector<32x64xf32>, vector<32x64xf32>, vector<32x64xf32> -> vector<96x64xf32>
    %369 = arith.truncf %368 : vector<96x64xf32> to vector<96x64xbf16>
    %c0_174 = arith.constant 0 : index
    %c0_175 = arith.constant 0 : index
    %370 = vector.load %arg14[%c0_174, %c0_175] : memref<16x96xbf16, #tpu.memory_space<vmem>>, vector<16x96xbf16>
    %cst_176 = arith.constant dense<0.000000e+00> : vector<16x64xf32>
    %371 = tpu.matmul %370, %369, %cst_176 {dimension_numbers = #tpu.dot_dimension_numbers<[1], [0], [0], [1], [0, 0, 1, 1], [], []>} : vector<16x96xbf16>, vector<96x64xbf16>, vector<16x64xf32> -> vector<16x64xf32>
    %372 = vector.extract_strided_slice %371 {offsets = [0, 0], sizes = [8, 64], strides = [1, 1]} : vector<16x64xf32> to vector<8x64xf32>
    %373 = arith.truncf %372 : vector<8x64xf32> to vector<8x64xbf16>
    %374 = vector.extract_strided_slice %371 {offsets = [8, 0], sizes = [8, 64], strides = [1, 1]} : vector<16x64xf32> to vector<8x64xf32>
    %375 = arith.truncf %374 : vector<8x64xf32> to vector<8x64xbf16>
    %c0_177 = arith.constant 0 : index
    %c0_178 = arith.constant 0 : index
    %376 = vector.load %arg36[%c0_177, %c0_178] : memref<64x128xbf16, #tpu.memory_space<vmem>>, vector<64x128xbf16>
    %cst_179 = arith.constant dense<0.000000e+00> : vector<8x128xf32>
    %377 = tpu.matmul %373, %376, %cst_179 {dimension_numbers = #tpu.dot_dimension_numbers<[1], [0], [0], [1], [0, 0, 1, 1], [], []>} : vector<8x64xbf16>, vector<64x128xbf16>, vector<8x128xf32> -> vector<8x128xf32>
    %c0_180 = arith.constant 0 : index
    %c0_181 = arith.constant 0 : index
    %378 = vector.load %arg37[%c0_180, %c0_181] : memref<64x128xbf16, #tpu.memory_space<vmem>>, vector<64x128xbf16>
    %cst_182 = arith.constant dense<0.000000e+00> : vector<8x128xf32>
    %379 = tpu.matmul %375, %378, %cst_182 {dimension_numbers = #tpu.dot_dimension_numbers<[1], [0], [0], [1], [0, 0, 1, 1], [], []>} : vector<8x64xbf16>, vector<64x128xbf16>, vector<8x128xf32> -> vector<8x128xf32>
    %380 = arith.addf %377, %379 : vector<8x128xf32>
    %c0_183 = arith.constant 0 : index
    %c0_184 = arith.constant 0 : index
    %381 = vector.load %arg15[%c0_183, %c0_184] : memref<8x1xf32, #tpu.memory_space<vmem>>, vector<8x1xf32>
    %382 = vector.broadcast %381 : vector<8x1xf32> to vector<8x128xf32>
    %383 = arith.addf %380, %382 : vector<8x128xf32>
    %384 = vector.extract_strided_slice %383 {offsets = [0, 0], sizes = [8, 64], strides = [1, 1]} : vector<8x128xf32> to vector<8x64xf32>
    %cst_185 = arith.constant dense<0.000000e+00> : vector<8xf32>
    %385 = vector.multi_reduction <add>, %384, %cst_185 [1] : vector<8x64xf32> to vector<8xf32>
    %386 = vector.shape_cast %385 : vector<8xf32> to vector<8x1xf32>
    %cst_186 = arith.constant 6.400000e+01 : f32
    %387 = vector.broadcast %cst_186 : f32 to vector<8x1xf32>
    %388 = arith.divf %386, %387 : vector<8x1xf32>
    %389 = vector.broadcast %388 : vector<8x1xf32> to vector<8x64xf32>
    %390 = arith.subf %384, %389 : vector<8x64xf32>
    %391 = arith.mulf %390, %390 : vector<8x64xf32>
    %cst_187 = arith.constant dense<0.000000e+00> : vector<8xf32>
    %392 = vector.multi_reduction <add>, %391, %cst_187 [1] : vector<8x64xf32> to vector<8xf32>
    %393 = vector.shape_cast %392 : vector<8xf32> to vector<8x1xf32>
    %cst_188 = arith.constant 6.400000e+01 : f32
    %394 = vector.broadcast %cst_188 : f32 to vector<8x1xf32>
    %395 = arith.divf %393, %394 : vector<8x1xf32>
    %cst_189 = arith.constant 9.99999974E-6 : f32
    %396 = vector.broadcast %cst_189 : f32 to vector<8x1xf32>
    %397 = arith.addf %395, %396 : vector<8x1xf32>
    %398 = math.rsqrt %397 : vector<8x1xf32>
    %399 = vector.broadcast %398 : vector<8x1xf32> to vector<8x64xf32>
    %400 = arith.mulf %390, %399 : vector<8x64xf32>
    %401 = vector.extract_strided_slice %383 {offsets = [0, 64], sizes = [8, 64], strides = [1, 1]} : vector<8x128xf32> to vector<8x64xf32>
    %cst_190 = arith.constant dense<0.000000e+00> : vector<8xf32>
    %402 = vector.multi_reduction <add>, %401, %cst_190 [1] : vector<8x64xf32> to vector<8xf32>
    %403 = vector.shape_cast %402 : vector<8xf32> to vector<8x1xf32>
    %cst_191 = arith.constant 6.400000e+01 : f32
    %404 = vector.broadcast %cst_191 : f32 to vector<8x1xf32>
    %405 = arith.divf %403, %404 : vector<8x1xf32>
    %406 = vector.broadcast %405 : vector<8x1xf32> to vector<8x64xf32>
    %407 = arith.subf %401, %406 : vector<8x64xf32>
    %408 = arith.mulf %407, %407 : vector<8x64xf32>
    %cst_192 = arith.constant dense<0.000000e+00> : vector<8xf32>
    %409 = vector.multi_reduction <add>, %408, %cst_192 [1] : vector<8x64xf32> to vector<8xf32>
    %410 = vector.shape_cast %409 : vector<8xf32> to vector<8x1xf32>
    %cst_193 = arith.constant 6.400000e+01 : f32
    %411 = vector.broadcast %cst_193 : f32 to vector<8x1xf32>
    %412 = arith.divf %410, %411 : vector<8x1xf32>
    %cst_194 = arith.constant 9.99999974E-6 : f32
    %413 = vector.broadcast %cst_194 : f32 to vector<8x1xf32>
    %414 = arith.addf %412, %413 : vector<8x1xf32>
    %415 = math.rsqrt %414 : vector<8x1xf32>
    %416 = vector.broadcast %415 : vector<8x1xf32> to vector<8x64xf32>
    %417 = arith.mulf %407, %416 : vector<8x64xf32>
    %418 = tpu.concatenate %400, %417 in 1 : vector<8x64xf32>, vector<8x64xf32> -> vector<8x128xf32>
    %cst_195 = arith.constant 0.000000e+00 : f32
    %419 = vector.broadcast %cst_195 : f32 to vector<8x128xf32>
    %420 = arith.cmpf ogt, %418, %419 : vector<8x128xf32>
    %cst_196 = arith.constant 0.000000e+00 : f32
    %421 = vector.broadcast %cst_196 : f32 to vector<8x128xf32>
    %422 = arith.minimumf %418, %421 : vector<8x128xf32>
    %423 = math.exp %422 : vector<8x128xf32>
    %cst_197 = arith.constant 1.000000e+00 : f32
    %424 = vector.broadcast %cst_197 : f32 to vector<8x128xf32>
    %425 = arith.subf %423, %424 : vector<8x128xf32>
    %426 = arith.select %420, %418, %425 : vector<8x128xi1>, vector<8x128xf32>
    %427 = tpu.concatenate %426, %0 in 0 : vector<8x128xf32>, vector<8x128xf32> -> vector<16x128xf32>
    %428 = arith.truncf %427 : vector<16x128xf32> to vector<16x128xbf16>
    %c0_198 = arith.constant 0 : index
    %c0_199 = arith.constant 0 : index
    %429 = vector.load %arg18[%c0_198, %c0_199] : memref<128x128xbf16, #tpu.memory_space<vmem>>, vector<128x128xbf16>
    %cst_200 = arith.constant dense<0.000000e+00> : vector<16x128xf32>
    %430 = tpu.matmul %428, %429, %cst_200 {dimension_numbers = #tpu.dot_dimension_numbers<[1], [0], [0], [1], [0, 0, 1, 1], [], []>} : vector<16x128xbf16>, vector<128x128xbf16>, vector<16x128xf32> -> vector<16x128xf32>
    %c0_201 = arith.constant 0 : index
    %c0_202 = arith.constant 0 : index
    %431 = vector.load %arg19[%c0_201, %c0_202] : memref<128x128xbf16, #tpu.memory_space<vmem>>, vector<128x128xbf16>
    %cst_203 = arith.constant dense<0.000000e+00> : vector<16x128xf32>
    %432 = tpu.matmul %428, %431, %cst_203 {dimension_numbers = #tpu.dot_dimension_numbers<[1], [0], [0], [1], [0, 0, 1, 1], [], []>} : vector<16x128xbf16>, vector<128x128xbf16>, vector<16x128xf32> -> vector<16x128xf32>
    %433 = tpu.concatenate %430, %427, %432 in 0 : vector<16x128xf32>, vector<16x128xf32>, vector<16x128xf32> -> vector<48x128xf32>
    %c0_204 = arith.constant 0 : index
    %c0_205 = arith.constant 0 : index
    %434 = vector.load %arg16[%c0_204, %c0_205] : memref<8x48xf32, #tpu.memory_space<vmem>>, vector<8x48xf32>
    %cst_206 = arith.constant dense<0.000000e+00> : vector<8x128xf32>
    %435 = tpu.matmul %434, %433, %cst_206 {dimension_numbers = #tpu.dot_dimension_numbers<[1], [0], [0], [1], [0, 0, 1, 1], [], []>} : vector<8x48xf32>, vector<48x128xf32>, vector<8x128xf32> -> vector<8x128xf32>
    %c0_207 = arith.constant 0 : index
    %c0_208 = arith.constant 0 : index
    %436 = vector.load %arg17[%c0_207, %c0_208] : memref<8x1xf32, #tpu.memory_space<vmem>>, vector<8x1xf32>
    %437 = vector.broadcast %436 : vector<8x1xf32> to vector<8x128xf32>
    %438 = arith.addf %435, %437 : vector<8x128xf32>
    %cst_209 = arith.constant 0.000000e+00 : f32
    %439 = vector.broadcast %cst_209 : f32 to vector<8x128xf32>
    %440 = arith.subf %439, %438 : vector<8x128xf32>
    %441 = math.exp %440 : vector<8x128xf32>
    %cst_210 = arith.constant 1.000000e+00 : f32
    %442 = vector.broadcast %cst_210 : f32 to vector<8x128xf32>
    %443 = arith.addf %442, %441 : vector<8x128xf32>
    %444 = tpu.reciprocal %443 {approx = true} : vector<8x128xf32> -> vector<8x128xf32>
    %c0_211 = arith.constant 0 : index
    %c0_212 = arith.constant 0 : index
    %445 = vector.load %arg38[%c0_211, %c0_212] : memref<8x128xf32, #tpu.memory_space<vmem>>, vector<8x128xf32>
    tpu.vector_store %arg38[%c0_211, %c0_212], %444 {strides = array<i32>} : memref<8x128xf32, #tpu.memory_space<vmem>>, vector<8x128xf32>,
    return
  }
  func.func @transform_0(%arg0: i32) -> (i32, i32) {
    %c0_i32 = arith.constant 0 : i32
    %c0_i32_0 = arith.constant 0 : i32
    return %c0_i32, %arg0 : i32, i32
  }
  func.func @transform_1(%arg0: i32) -> (i32, i32) {
    %c0_i32 = arith.constant 0 : i32
    %c0_i32_0 = arith.constant 0 : i32
    %c0_i32_1 = arith.constant 0 : i32
    return %c0_i32, %c0_i32_0 : i32, i32
  }
  func.func @transform_2(%arg0: i32) -> (i32, i32) {
    %c0_i32 = arith.constant 0 : i32
    %c0_i32_0 = arith.constant 0 : i32
    %c0_i32_1 = arith.constant 0 : i32
    return %c0_i32, %c0_i32_0 : i32, i32
  }
  func.func @transform_3(%arg0: i32) -> (i32, i32) {
    %c0_i32 = arith.constant 0 : i32
    %c0_i32_0 = arith.constant 0 : i32
    %c0_i32_1 = arith.constant 0 : i32
    return %c0_i32, %c0_i32_0 : i32, i32
  }
  func.func @transform_4(%arg0: i32) -> (i32, i32) {
    %c0_i32 = arith.constant 0 : i32
    %c0_i32_0 = arith.constant 0 : i32
    %c0_i32_1 = arith.constant 0 : i32
    return %c0_i32, %c0_i32_0 : i32, i32
  }
  func.func @transform_5(%arg0: i32) -> (i32, i32) {
    %c0_i32 = arith.constant 0 : i32
    %c0_i32_0 = arith.constant 0 : i32
    %c0_i32_1 = arith.constant 0 : i32
    return %c0_i32, %c0_i32_0 : i32, i32
  }
  func.func @transform_6(%arg0: i32) -> (i32, i32) {
    %c0_i32 = arith.constant 0 : i32
    %c0_i32_0 = arith.constant 0 : i32
    %c0_i32_1 = arith.constant 0 : i32
    return %c0_i32, %c0_i32_0 : i32, i32
  }
  func.func @transform_7(%arg0: i32) -> (i32, i32) {
    %c0_i32 = arith.constant 0 : i32
    %c0_i32_0 = arith.constant 0 : i32
    %c0_i32_1 = arith.constant 0 : i32
    return %c0_i32, %c0_i32_0 : i32, i32
  }
  func.func @transform_8(%arg0: i32) -> (i32, i32) {
    %c0_i32 = arith.constant 0 : i32
    %c0_i32_0 = arith.constant 0 : i32
    %c0_i32_1 = arith.constant 0 : i32
    return %c0_i32, %c0_i32_0 : i32, i32
  }
  func.func @transform_9(%arg0: i32) -> (i32, i32) {
    %c0_i32 = arith.constant 0 : i32
    %c0_i32_0 = arith.constant 0 : i32
    %c0_i32_1 = arith.constant 0 : i32
    return %c0_i32, %c0_i32_0 : i32, i32
  }
  func.func @transform_10(%arg0: i32) -> (i32, i32) {
    %c0_i32 = arith.constant 0 : i32
    %c0_i32_0 = arith.constant 0 : i32
    %c0_i32_1 = arith.constant 0 : i32
    return %c0_i32, %c0_i32_0 : i32, i32
  }
  func.func @transform_11(%arg0: i32) -> (i32, i32) {
    %c0_i32 = arith.constant 0 : i32
    %c0_i32_0 = arith.constant 0 : i32
    %c0_i32_1 = arith.constant 0 : i32
    return %c0_i32, %c0_i32_0 : i32, i32
  }
  func.func @transform_12(%arg0: i32) -> (i32, i32) {
    %c0_i32 = arith.constant 0 : i32
    %c0_i32_0 = arith.constant 0 : i32
    %c0_i32_1 = arith.constant 0 : i32
    return %c0_i32, %c0_i32_0 : i32, i32
  }
  func.func @transform_13(%arg0: i32) -> (i32, i32) {
    %c0_i32 = arith.constant 0 : i32
    %c0_i32_0 = arith.constant 0 : i32
    %c0_i32_1 = arith.constant 0 : i32
    return %c0_i32, %c0_i32_0 : i32, i32
  }
  func.func @transform_14(%arg0: i32) -> (i32, i32) {
    %c0_i32 = arith.constant 0 : i32
    %c0_i32_0 = arith.constant 0 : i32
    %c0_i32_1 = arith.constant 0 : i32
    return %c0_i32, %c0_i32_0 : i32, i32
  }
  func.func @transform_15(%arg0: i32) -> (i32, i32) {
    %c0_i32 = arith.constant 0 : i32
    %c0_i32_0 = arith.constant 0 : i32
    %c0_i32_1 = arith.constant 0 : i32
    return %c0_i32, %c0_i32_0 : i32, i32
  }
  func.func @transform_16(%arg0: i32) -> (i32, i32) {
    %c0_i32 = arith.constant 0 : i32
    %c0_i32_0 = arith.constant 0 : i32
    %c0_i32_1 = arith.constant 0 : i32
    return %c0_i32, %c0_i32_0 : i32, i32
  }
  func.func @transform_17(%arg0: i32) -> (i32, i32) {
    %c0_i32 = arith.constant 0 : i32
    %c0_i32_0 = arith.constant 0 : i32
    %c0_i32_1 = arith.constant 0 : i32
    return %c0_i32, %c0_i32_0 : i32, i32
  }
  func.func @transform_18(%arg0: i32) -> (i32, i32) {
    %c0_i32 = arith.constant 0 : i32
    %c0_i32_0 = arith.constant 0 : i32
    %c0_i32_1 = arith.constant 0 : i32
    return %c0_i32, %c0_i32_0 : i32, i32
  }
  func.func @transform_19(%arg0: i32) -> (i32, i32) {
    %c0_i32 = arith.constant 0 : i32
    %c0_i32_0 = arith.constant 0 : i32
    %c0_i32_1 = arith.constant 0 : i32
    return %c0_i32, %c0_i32_0 : i32, i32
  }
  func.func @transform_20(%arg0: i32) -> (i32, i32) {
    %c0_i32 = arith.constant 0 : i32
    %c0_i32_0 = arith.constant 0 : i32
    %c0_i32_1 = arith.constant 0 : i32
    return %c0_i32, %c0_i32_0 : i32, i32
  }
  func.func @transform_21(%arg0: i32) -> (i32, i32) {
    %c0_i32 = arith.constant 0 : i32
    %c0_i32_0 = arith.constant 0 : i32
    %c0_i32_1 = arith.constant 0 : i32
    return %c0_i32, %c0_i32_0 : i32, i32
  }
  func.func @transform_22(%arg0: i32) -> (i32, i32) {
    %c0_i32 = arith.constant 0 : i32
    %c0_i32_0 = arith.constant 0 : i32
    %c0_i32_1 = arith.constant 0 : i32
    return %c0_i32, %c0_i32_0 : i32, i32
  }
  func.func @transform_23(%arg0: i32) -> (i32, i32) {
    %c0_i32 = arith.constant 0 : i32
    %c0_i32_0 = arith.constant 0 : i32
    %c0_i32_1 = arith.constant 0 : i32
    return %c0_i32, %c0_i32_0 : i32, i32
  }
  func.func @transform_24(%arg0: i32) -> (i32, i32) {
    %c0_i32 = arith.constant 0 : i32
    %c0_i32_0 = arith.constant 0 : i32
    %c0_i32_1 = arith.constant 0 : i32
    return %c0_i32, %c0_i32_0 : i32, i32
  }
  func.func @transform_25(%arg0: i32) -> (i32, i32) {
    %c0_i32 = arith.constant 0 : i32
    %c0_i32_0 = arith.constant 0 : i32
    %c0_i32_1 = arith.constant 0 : i32
    return %c0_i32, %c0_i32_0 : i32, i32
  }
  func.func @transform_26(%arg0: i32) -> (i32, i32) {
    %c0_i32 = arith.constant 0 : i32
    %c0_i32_0 = arith.constant 0 : i32
    %c0_i32_1 = arith.constant 0 : i32
    return %c0_i32, %c0_i32_0 : i32, i32
  }
  func.func @transform_27(%arg0: i32) -> (i32, i32) {
    %c0_i32 = arith.constant 0 : i32
    %c0_i32_0 = arith.constant 0 : i32
    %c0_i32_1 = arith.constant 0 : i32
    return %c0_i32, %c0_i32_0 : i32, i32
  }
  func.func @transform_28(%arg0: i32) -> (i32, i32) {
    %c0_i32 = arith.constant 0 : i32
    %c0_i32_0 = arith.constant 0 : i32
    %c0_i32_1 = arith.constant 0 : i32
    return %c0_i32, %c0_i32_0 : i32, i32
  }
  func.func @transform_29(%arg0: i32) -> (i32, i32) {
    %c0_i32 = arith.constant 0 : i32
    %c0_i32_0 = arith.constant 0 : i32
    %c0_i32_1 = arith.constant 0 : i32
    return %c0_i32, %c0_i32_0 : i32, i32
  }
  func.func @transform_30(%arg0: i32) -> (i32, i32) {
    %c0_i32 = arith.constant 0 : i32
    %c0_i32_0 = arith.constant 0 : i32
    %c0_i32_1 = arith.constant 0 : i32
    return %c0_i32, %c0_i32_0 : i32, i32
  }
  func.func @transform_31(%arg0: i32) -> (i32, i32) {
    %c0_i32 = arith.constant 0 : i32
    %c0_i32_0 = arith.constant 0 : i32
    %c0_i32_1 = arith.constant 0 : i32
    return %c0_i32, %c0_i32_0 : i32, i32
  }
  func.func @transform_32(%arg0: i32) -> (i32, i32) {
    %c0_i32 = arith.constant 0 : i32
    %c0_i32_0 = arith.constant 0 : i32
    %c0_i32_1 = arith.constant 0 : i32
    return %c0_i32, %c0_i32_0 : i32, i32
  }
  func.func @transform_33(%arg0: i32) -> (i32, i32) {
    %c0_i32 = arith.constant 0 : i32
    %c0_i32_0 = arith.constant 0 : i32
    %c0_i32_1 = arith.constant 0 : i32
    return %c0_i32, %c0_i32_0 : i32, i32
  }
  func.func @transform_34(%arg0: i32) -> (i32, i32) {
    %c0_i32 = arith.constant 0 : i32
    %c0_i32_0 = arith.constant 0 : i32
    %c0_i32_1 = arith.constant 0 : i32
    return %c0_i32, %c0_i32_0 : i32, i32
  }
  func.func @transform_35(%arg0: i32) -> (i32, i32) {
    %c0_i32 = arith.constant 0 : i32
    %c0_i32_0 = arith.constant 0 : i32
    %c0_i32_1 = arith.constant 0 : i32
    return %c0_i32, %c0_i32_0 : i32, i32
  }
  func.func @transform_36(%arg0: i32) -> (i32, i32) {
    %c0_i32 = arith.constant 0 : i32
    %c0_i32_0 = arith.constant 0 : i32
    %c0_i32_1 = arith.constant 0 : i32
    return %c0_i32, %c0_i32_0 : i32, i32
  }
  func.func @transform_37(%arg0: i32) -> (i32, i32) {
    %c0_i32 = arith.constant 0 : i32
    %c0_i32_0 = arith.constant 0 : i32
    return %c0_i32, %arg0 : i32, i32
  }
}

</mosaic_0001>

<llo_original>
// kernel: conv_autoencoder_forward.1
$region0: #{conv_autoencoder_forward.1}
  #allocation0 [shape = 'u32[]', space=smem, size = 0x4, offset = 0x4, fixed_abs, tag = 'smem constant byte address 0x4 - core index']
  #allocation1 [shape = 'u32[72,128]{1,0:T(1,128)}', space=vmem, size = 0x9000, scoped, tag = 'internal scratch']
  %s0 = inlined_call_operand.smem [shape: u32[38], index: -1, kind: input, shape index: {}]
  %s1 = sld [smem:[%s0]]
  %s2 = scalar_lea.smem %s0, 1
  %s3 = sld [smem:[%s2]]
  %s4 = scalar_lea.smem %s0, 2
  %s5 = sld [smem:[%s4]]
  %s6 = scalar_lea.smem %s0, 3
  %s7 = sld [smem:[%s6]]
  %s8 = scalar_lea.smem %s0, 4
  %s9 = sld [smem:[%s8]]
  %s10 = scalar_lea.smem %s0, 5
  %s11 = sld [smem:[%s10]]
  %s12 = scalar_lea.smem %s0, 6
  %s13 = sld [smem:[%s12]]
  %s14 = scalar_lea.smem %s0, 7
  %s15 = sld [smem:[%s14]]
  %s16 = scalar_lea.smem %s0, 8
  %s17 = sld [smem:[%s16]]
  %s18 = scalar_lea.smem %s0, 9
  %s19 = sld [smem:[%s18]]
  %s20 = scalar_lea.smem %s0, 10
  %s21 = sld [smem:[%s20]]
  %s22 = scalar_lea.smem %s0, 11
  %s23 = sld [smem:[%s22]]
  %s24 = scalar_lea.smem %s0, 12
  %s25 = sld [smem:[%s24]]
  %s26 = scalar_lea.smem %s0, 13
  %s27 = sld [smem:[%s26]]
  %s28 = scalar_lea.smem %s0, 14
  %s29 = sld [smem:[%s28]]
  %s30 = scalar_lea.smem %s0, 15
  %s31 = sld [smem:[%s30]]
  %s32 = scalar_lea.smem %s0, 16
  %s33 = sld [smem:[%s32]]
  %s34 = scalar_lea.smem %s0, 17
  %s35 = sld [smem:[%s34]]
  %s36 = scalar_lea.smem %s0, 18
  %s37 = sld [smem:[%s36]]
  %s38 = scalar_lea.smem %s0, 19
  %s39 = sld [smem:[%s38]]
  %s40 = scalar_lea.smem %s0, 20
  %s41 = sld [smem:[%s40]]
  %s42 = scalar_lea.smem %s0, 21
  %s43 = sld [smem:[%s42]]
  %s44 = scalar_lea.smem %s0, 22
  %s45 = sld [smem:[%s44]]
  %s46 = scalar_lea.smem %s0, 23
  %s47 = sld [smem:[%s46]]
  %s48 = scalar_lea.smem %s0, 24
  %s49 = sld [smem:[%s48]]
  %s50 = scalar_lea.smem %s0, 25
  %s51 = sld [smem:[%s50]]
  %s52 = scalar_lea.smem %s0, 26
  %s53 = sld [smem:[%s52]]
  %s54 = scalar_lea.smem %s0, 27
  %s55 = sld [smem:[%s54]]
  %s56 = scalar_lea.smem %s0, 28
  %s57 = sld [smem:[%s56]]
  %s58 = scalar_lea.smem %s0, 29
  %s59 = sld [smem:[%s58]]
  %s60 = scalar_lea.smem %s0, 30
  %s61 = sld [smem:[%s60]]
  %s62 = scalar_lea.smem %s0, 31
  %s63 = sld [smem:[%s62]]
  %s64 = scalar_lea.smem %s0, 32
  %s65 = sld [smem:[%s64]]
  %s66 = scalar_lea.smem %s0, 33
  %s67 = sld [smem:[%s66]]
  %s68 = scalar_lea.smem %s0, 34
  %s69 = sld [smem:[%s68]]
  %s70 = scalar_lea.smem %s0, 35
  %s71 = sld [smem:[%s70]]
  %s72 = scalar_lea.smem %s0, 36
  %s73 = sld [smem:[%s72]]
  %s74 = scalar_lea.smem %s0, 37
  %s75 = sld [smem:[%s74]]
  %s76 = sld [smem:[#allocation0]]
  $region158: #{conv_autoencoder_forward.1} parent=0
    _
  %s78 = ssub.s32 1, %s76
  %s79 = scalar_select 0, %s78, %s76
  // Predicated region
  $region2: #{conv_autoencoder_forward.1} parent=0 // pred_check
    _
  $region3: #{conv_autoencoder_forward.1} parent=0 // pred_check_branch
    %81 = sbr.rel (0) target = $region5
  $region4: #{conv_autoencoder_forward.1} parent=0 // pred_region
    _
  $region5: #{conv_autoencoder_forward.1} parent=0 // pred_fallthru
    _
  // Predicated region
  $region6: #{conv_autoencoder_forward.1} parent=0 // pred_check
    _
  $region7: #{conv_autoencoder_forward.1} parent=0 // pred_check_branch
    %83 = sbr.rel (0) target = $region9
  $region8: #{conv_autoencoder_forward.1} parent=0 // pred_region
    _
  $region9: #{conv_autoencoder_forward.1} parent=0 // pred_fallthru
    _
  // Predicated region
  $region10: #{conv_autoencoder_forward.1} parent=0 // pred_check
    _
  $region11: #{conv_autoencoder_forward.1} parent=0 // pred_check_branch
    %85 = sbr.rel (0) target = $region13
  $region12: #{conv_autoencoder_forward.1} parent=0 // pred_region
    _
  $region13: #{conv_autoencoder_forward.1} parent=0 // pred_fallthru
    _
  // Predicated region
  $region14: #{conv_autoencoder_forward.1} parent=0 // pred_check
    _
  $region15: #{conv_autoencoder_forward.1} parent=0 // pred_check_branch
    %87 = sbr.rel (0) target = $region17
  $region16: #{conv_autoencoder_forward.1} parent=0 // pred_region
    _
  $region17: #{conv_autoencoder_forward.1} parent=0 // pred_fallthru
    _
  // Predicated region
  $region18: #{conv_autoencoder_forward.1} parent=0 // pred_check
    _
  $region19: #{conv_autoencoder_forward.1} parent=0 // pred_check_branch
    %89 = sbr.rel (0) target = $region21
  $region20: #{conv_autoencoder_forward.1} parent=0 // pred_region
    _
  $region21: #{conv_autoencoder_forward.1} parent=0 // pred_fallthru
    _
  // Predicated region
  $region22: #{conv_autoencoder_forward.1} parent=0 // pred_check
    _
  $region23: #{conv_autoencoder_forward.1} parent=0 // pred_check_branch
    %91 = sbr.rel (0) target = $region25
  $region24: #{conv_autoencoder_forward.1} parent=0 // pred_region
    _
  $region25: #{conv_autoencoder_forward.1} parent=0 // pred_fallthru
    _
  // Predicated region
  $region26: #{conv_autoencoder_forward.1} parent=0 // pred_check
    _
  $region27: #{conv_autoencoder_forward.1} parent=0 // pred_check_branch
    %93 = sbr.rel (0) target = $region29
  $region28: #{conv_autoencoder_forward.1} parent=0 // pred_region
    _
  $region29: #{conv_autoencoder_forward.1} parent=0 // pred_fallthru
    _
  // Predicated region
  $region30: #{conv_autoencoder_forward.1} parent=0 // pred_check
    _
  $region31: #{conv_autoencoder_forward.1} parent=0 // pred_check_branch
    %95 = sbr.rel (0) target = $region33
  $region32: #{conv_autoencoder_forward.1} parent=0 // pred_region
    _
  $region33: #{conv_autoencoder_forward.1} parent=0 // pred_fallthru
    _
  // Predicated region
  $region34: #{conv_autoencoder_forward.1} parent=0 // pred_check
    _
  $region35: #{conv_autoencoder_forward.1} parent=0 // pred_check_branch
    %97 = sbr.rel (0) target = $region37
  $region36: #{conv_autoencoder_forward.1} parent=0 // pred_region
    _
  $region37: #{conv_autoencoder_forward.1} parent=0 // pred_fallthru
    _
  // Predicated region
  $region38: #{conv_autoencoder_forward.1} parent=0 // pred_check
    _
  $region39: #{conv_autoencoder_forward.1} parent=0 // pred_check_branch
    %99 = sbr.rel (0) target = $region41
  $region40: #{conv_autoencoder_forward.1} parent=0 // pred_region
    _
  $region41: #{conv_autoencoder_forward.1} parent=0 // pred_fallthru
    _
  // Predicated region
  $region42: #{conv_autoencoder_forward.1} parent=0 // pred_check
    _
  $region43: #{conv_autoencoder_forward.1} parent=0 // pred_check_branch
    %101 = sbr.rel (0) target = $region45
  $region44: #{conv_autoencoder_forward.1} parent=0 // pred_region
    _
  $region45: #{conv_autoencoder_forward.1} parent=0 // pred_fallthru
    _
  // Predicated region
  $region46: #{conv_autoencoder_forward.1} parent=0 // pred_check
    _
  $region47: #{conv_autoencoder_forward.1} parent=0 // pred_check_branch
    %103 = sbr.rel (0) target = $region49
  $region48: #{conv_autoencoder_forward.1} parent=0 // pred_region
    _
  $region49: #{conv_autoencoder_forward.1} parent=0 // pred_fallthru
    _
  // Predicated region
  $region50: #{conv_autoencoder_forward.1} parent=0 // pred_check
    _
  $region51: #{conv_autoencoder_forward.1} parent=0 // pred_check_branch
    %105 = sbr.rel (0) target = $region53
  $region52: #{conv_autoencoder_forward.1} parent=0 // pred_region
    _
  $region53: #{conv_autoencoder_forward.1} parent=0 // pred_fallthru
    _
  // Predicated region
  $region54: #{conv_autoencoder_forward.1} parent=0 // pred_check
    _
  $region55: #{conv_autoencoder_forward.1} parent=0 // pred_check_branch
    %107 = sbr.rel (0) target = $region57
  $region56: #{conv_autoencoder_forward.1} parent=0 // pred_region
    _
  $region57: #{conv_autoencoder_forward.1} parent=0 // pred_fallthru
    _
  // Predicated region
  $region58: #{conv_autoencoder_forward.1} parent=0 // pred_check
    _
  $region59: #{conv_autoencoder_forward.1} parent=0 // pred_check_branch
    %109 = sbr.rel (0) target = $region61
  $region60: #{conv_autoencoder_forward.1} parent=0 // pred_region
    _
  $region61: #{conv_autoencoder_forward.1} parent=0 // pred_fallthru
    _
  // Predicated region
  $region62: #{conv_autoencoder_forward.1} parent=0 // pred_check
    _
  $region63: #{conv_autoencoder_forward.1} parent=0 // pred_check_branch
    %111 = sbr.rel (0) target = $region65
  $region64: #{conv_autoencoder_forward.1} parent=0 // pred_region
    _
  $region65: #{conv_autoencoder_forward.1} parent=0 // pred_fallthru
    _
  // Predicated region
  $region66: #{conv_autoencoder_forward.1} parent=0 // pred_check
    _
  $region67: #{conv_autoencoder_forward.1} parent=0 // pred_check_branch
    %113 = sbr.rel (0) target = $region69
  $region68: #{conv_autoencoder_forward.1} parent=0 // pred_region
    _
  $region69: #{conv_autoencoder_forward.1} parent=0 // pred_fallthru
    _
  // Predicated region
  $region70: #{conv_autoencoder_forward.1} parent=0 // pred_check
    _
  $region71: #{conv_autoencoder_forward.1} parent=0 // pred_check_branch
    %115 = sbr.rel (0) target = $region73
  $region72: #{conv_autoencoder_forward.1} parent=0 // pred_region
    _
  $region73: #{conv_autoencoder_forward.1} parent=0 // pred_fallthru
    _
  // Predicated region
  $region74: #{conv_autoencoder_forward.1} parent=0 // pred_check
    _
  $region75: #{conv_autoencoder_forward.1} parent=0 // pred_check_branch
    %117 = sbr.rel (0) target = $region77
  $region76: #{conv_autoencoder_forward.1} parent=0 // pred_region
    _
  $region77: #{conv_autoencoder_forward.1} parent=0 // pred_fallthru
    _
  // Predicated region
  $region78: #{conv_autoencoder_forward.1} parent=0 // pred_check
    _
  $region79: #{conv_autoencoder_forward.1} parent=0 // pred_check_branch
    %119 = sbr.rel (0) target = $region81
  $region80: #{conv_autoencoder_forward.1} parent=0 // pred_region
    _
  $region81: #{conv_autoencoder_forward.1} parent=0 // pred_fallthru
    _
  // Predicated region
  $region82: #{conv_autoencoder_forward.1} parent=0 // pred_check
    _
  $region83: #{conv_autoencoder_forward.1} parent=0 // pred_check_branch
    %121 = sbr.rel (0) target = $region85
  $region84: #{conv_autoencoder_forward.1} parent=0 // pred_region
    _
  $region85: #{conv_autoencoder_forward.1} parent=0 // pred_fallthru
    _
  // Predicated region
  $region86: #{conv_autoencoder_forward.1} parent=0 // pred_check
    _
  $region87: #{conv_autoencoder_forward.1} parent=0 // pred_check_branch
    %123 = sbr.rel (0) target = $region89
  $region88: #{conv_autoencoder_forward.1} parent=0 // pred_region
    _
  $region89: #{conv_autoencoder_forward.1} parent=0 // pred_fallthru
    _
  // Predicated region
  $region90: #{conv_autoencoder_forward.1} parent=0 // pred_check
    _
  $region91: #{conv_autoencoder_forward.1} parent=0 // pred_check_branch
    %125 = sbr.rel (0) target = $region93
  $region92: #{conv_autoencoder_forward.1} parent=0 // pred_region
    _
  $region93: #{conv_autoencoder_forward.1} parent=0 // pred_fallthru
    _
  // Predicated region
  $region94: #{conv_autoencoder_forward.1} parent=0 // pred_check
    _
  $region95: #{conv_autoencoder_forward.1} parent=0 // pred_check_branch
    %127 = sbr.rel (0) target = $region97
  $region96: #{conv_autoencoder_forward.1} parent=0 // pred_region
    _
  $region97: #{conv_autoencoder_forward.1} parent=0 // pred_fallthru
    _
  // Predicated region
  $region98: #{conv_autoencoder_forward.1} parent=0 // pred_check
    _
  $region99: #{conv_autoencoder_forward.1} parent=0 // pred_check_branch
    %129 = sbr.rel (0) target = $region101
  $region100: #{conv_autoencoder_forward.1} parent=0 // pred_region
    _
  $region101: #{conv_autoencoder_forward.1} parent=0 // pred_fallthru
    _
  // Predicated region
  $region102: #{conv_autoencoder_forward.1} parent=0 // pred_check
    _
  $region103: #{conv_autoencoder_forward.1} parent=0 // pred_check_branch
    %131 = sbr.rel (0) target = $region105
  $region104: #{conv_autoencoder_forward.1} parent=0 // pred_region
    _
  $region105: #{conv_autoencoder_forward.1} parent=0 // pred_fallthru
    _
  // Predicated region
  $region106: #{conv_autoencoder_forward.1} parent=0 // pred_check
    _
  $region107: #{conv_autoencoder_forward.1} parent=0 // pred_check_branch
    %133 = sbr.rel (0) target = $region109
  $region108: #{conv_autoencoder_forward.1} parent=0 // pred_region
    _
  $region109: #{conv_autoencoder_forward.1} parent=0 // pred_fallthru
    _
  // Predicated region
  $region110: #{conv_autoencoder_forward.1} parent=0 // pred_check
    _
  $region111: #{conv_autoencoder_forward.1} parent=0 // pred_check_branch
    %135 = sbr.rel (0) target = $region113
  $region112: #{conv_autoencoder_forward.1} parent=0 // pred_region
    _
  $region113: #{conv_autoencoder_forward.1} parent=0 // pred_fallthru
    _
  // Predicated region
  $region114: #{conv_autoencoder_forward.1} parent=0 // pred_check
    _
  $region115: #{conv_autoencoder_forward.1} parent=0 // pred_check_branch
    %137 = sbr.rel (0) target = $region117
  $region116: #{conv_autoencoder_forward.1} parent=0 // pred_region
    _
  $region117: #{conv_autoencoder_forward.1} parent=0 // pred_fallthru
    _
  // Predicated region
  $region118: #{conv_autoencoder_forward.1} parent=0 // pred_check
    _
  $region119: #{conv_autoencoder_forward.1} parent=0 // pred_check_branch
    %139 = sbr.rel (0) target = $region121
  $region120: #{conv_autoencoder_forward.1} parent=0 // pred_region
    _
  $region121: #{conv_autoencoder_forward.1} parent=0 // pred_fallthru
    _
  // Predicated region
  $region122: #{conv_autoencoder_forward.1} parent=0 // pred_check
    _
  $region123: #{conv_autoencoder_forward.1} parent=0 // pred_check_branch
    %141 = sbr.rel (0) target = $region125
  $region124: #{conv_autoencoder_forward.1} parent=0 // pred_region
    _
  $region125: #{conv_autoencoder_forward.1} parent=0 // pred_fallthru
    _
  // Predicated region
  $region126: #{conv_autoencoder_forward.1} parent=0 // pred_check
    _
  $region127: #{conv_autoencoder_forward.1} parent=0 // pred_check_branch
    %143 = sbr.rel (0) target = $region129
  $region128: #{conv_autoencoder_forward.1} parent=0 // pred_region
    _
  $region129: #{conv_autoencoder_forward.1} parent=0 // pred_fallthru
    _
  // Predicated region
  $region130: #{conv_autoencoder_forward.1} parent=0 // pred_check
    _
  $region131: #{conv_autoencoder_forward.1} parent=0 // pred_check_branch
    %145 = sbr.rel (0) target = $region133
  $region132: #{conv_autoencoder_forward.1} parent=0 // pred_region
    _
  $region133: #{conv_autoencoder_forward.1} parent=0 // pred_fallthru
    _
  // Predicated region
  $region134: #{conv_autoencoder_forward.1} parent=0 // pred_check
    _
  $region135: #{conv_autoencoder_forward.1} parent=0 // pred_check_branch
    %147 = sbr.rel (0) target = $region137
  $region136: #{conv_autoencoder_forward.1} parent=0 // pred_region
    _
  $region137: #{conv_autoencoder_forward.1} parent=0 // pred_fallthru
    _
  // Predicated region
  $region138: #{conv_autoencoder_forward.1} parent=0 // pred_check
    _
  $region139: #{conv_autoencoder_forward.1} parent=0 // pred_check_branch
    %149 = sbr.rel (0) target = $region141
  $region140: #{conv_autoencoder_forward.1} parent=0 // pred_region
    _
  $region141: #{conv_autoencoder_forward.1} parent=0 // pred_fallthru
    _
  // Predicated region
  $region142: #{conv_autoencoder_forward.1} parent=0 // pred_check
    _
  $region143: #{conv_autoencoder_forward.1} parent=0 // pred_check_branch
    %151 = sbr.rel (0) target = $region145
  $region144: #{conv_autoencoder_forward.1} parent=0 // pred_region
    _
  $region145: #{conv_autoencoder_forward.1} parent=0 // pred_fallthru
    _
  // Predicated region
  $region146: #{conv_autoencoder_forward.1} parent=0 // pred_check
    _
  $region147: #{conv_autoencoder_forward.1} parent=0 // pred_check_branch
    %153 = sbr.rel (0) target = $region149
  $region148: #{conv_autoencoder_forward.1} parent=0 // pred_region
    _
  $region149: #{conv_autoencoder_forward.1} parent=0 // pred_fallthru
    _
  %v155 = vld [vmem:[%s1] sm:$0xff]
  %v156 = vld [vmem:[%s3] sm:$0xf]
  %v157 = vpack.c.bf16 %v155, %v155
  %v158 = vld [vmem:[%s5] sm:$0xff]
  %160 = vset.pattern.permute.xlu0 0
  %161 = vperm.xlu0 %160, %v158
  %v162 = vpop.permute.xlu0 %161
  %vm164 = vcmask 64512
  %v166 = vsel %vm164, %v156, 0
  %vm168 = vcmask 1043456
  %v170 = vsel %vm168, %v157, 0
  %172 = vmatpush.bf16.msra.mxu0 0
  %173 = vmatpush.bf16.msra.mxu0 0
  %174 = vmatpush.bf16.msra.mxu0 0
  %175 = vmatpush.bf16.msra.mxu0 0
  %176 = vmatpush.bf16.msra.mxu0 0
  %177 = vmatpush.bf16.msra.mxu0 0
  %178 = vmatpush.bf16.msra.mxu0 0
  %179 = vmatpush.bf16.msra.mxu0 %v170
  %180 = vmatmul.bf16.gmra.mxu0 %v166
  %v181 = vpop.f32.mrf.mxu0
  %v182 = vadd.f32 %v162, %v181
  %v183 = vpop.f32.mrf.mxu0
  %184 = vdwg.mxu0
  %vm185 = vcmask 523264
  %v186 = vsel %vm185, %v182, 0.0
  %187 = vadd.xlane.f32.xlu0 %v186
  %v188 = vpop.xlane.xlu0 %187
  %v189 = vrcp.pop 64.0
  %v190 = vmul.f32 64.0, %v189
  %v191 = vsub.f32 1.0, %v190
  %v192 = vmul.f32 %v189, %v191
  %v193 = vadd.f32 %v189, %v192
  %vm194 = vweird.f32 %v189
  %v195 = vsel %vm194, %v189, %v193
  %v196 = vmul.f32 %v188, %v195
  %v197 = vsub.f32 %v182, %v196
  %v198 = vmul.f32 %v197, %v197
  %v199 = vsel %vm185, %v198, 0.0
  %200 = vadd.xlane.f32.xlu0 %v199
  %v201 = vpop.xlane.xlu0 %200
  %v202 = vmul.f32 %v201, %v195
  %v203 = vadd.f32 %v202, 1e-05
  %v204 = vrsqrt.pop %v203
  %v205 = vmul.f32 %v204, %v203
  %v206 = vmul.f32 %v205, %v204
  %v207 = vmul.f32 0.5, %v206
  %v208 = vsub.f32 1.5, %v207
  %v209 = vmul.f32 %v204, %v208
  %vm210 = vweird.f32 %v203
  %vm211 = vweird.f32 %v204
  %vm212 = vmor %vm210, %vm211
  %v213 = vsel %vm212, %v204, %v209
  %v214 = vmul.f32 %v197, %v213
  %216 = vrot.lane.b32.xlu0 %v182, 64
  %v217 = vpop.permute.xlu0 %216
  %v219 = vsel %vm185, %v217, 0.0
  %220 = vadd.xlane.f32.xlu0 %v219
  %v221 = vpop.xlane.xlu0 %220
  %v222 = vmul.f32 %v221, %v195
  %v223 = vsub.f32 %v182, %v222
  %v224 = vmul.f32 %v223, %v223
  %226 = vrot.lane.b32.xlu0 %v224, 64
  %v227 = vpop.permute.xlu0 %226
  %v229 = vsel %vm185, %v227, 0.0
  %230 = vadd.xlane.f32.xlu0 %v229
  %v231 = vpop.xlane.xlu0 %230
  %v232 = vmul.f32 %v231, %v195
  %v233 = vadd.f32 %v232, 1e-05
  %v234 = vrsqrt.pop %v233
  %v235 = vmul.f32 %v234, %v233
  %v236 = vmul.f32 %v235, %v234
  %v237 = vmul.f32 0.5, %v236
  %v238 = vsub.f32 1.5, %v237
  %v239 = vmul.f32 %v234, %v238
  %vm240 = vweird.f32 %v233
  %vm241 = vweird.f32 %v234
  %vm242 = vmor %vm240, %vm241
  %v243 = vsel %vm242, %v234, %v239
  %v244 = vmul.f32 %v223, %v243
  %v245 = vsel %vm185, %v214, %v244
  %vm246 = vcmp.gt.f32.partialorder %v245, 0.0
  %v247 = vmin.f32 %v245, 0.0
  %v248 = vmul.f32 %v247, 1.442695
  %v249 = vpow.pop %v248
  %v250 = vsub.f32 %v249, 1.0
  %v251 = vsel %vm246, %v245, %v250
  %v252 = vpack.c.bf16 %v251, %v251
  %v253 = vld [vmem:[%s35] sm:$0xf]
  %v254 = vld [vmem:[%s35 + $0x4] sm:$0xf]
  %v255 = vld [vmem:[%s35 + $0x8] sm:$0xf]
  %v256 = vld [vmem:[%s35 + $0xc] sm:$0xf]
  %v257 = vld [vmem:[%s35 + $0x10] sm:$0xf]
  %v258 = vld [vmem:[%s35 + $0x14] sm:$0xf]
  %v259 = vld [vmem:[%s35 + $0x18] sm:$0xf]
  %v260 = vld [vmem:[%s35 + $0x1c] sm:$0xf]
  %v261 = vld [vmem:[%s35 + $0x20] sm:$0xf]
  %v262 = vld [vmem:[%s35 + $0x24] sm:$0xf]
  %v263 = vld [vmem:[%s35 + $0x28] sm:$0xf]
  %v264 = vld [vmem:[%s35 + $0x2c] sm:$0xf]
  %v265 = vld [vmem:[%s35 + $0x30] sm:$0xf]
  %v266 = vld [vmem:[%s35 + $0x34] sm:$0xf]
  %v267 = vld [vmem:[%s35 + $0x38] sm:$0xf]
  %v268 = vld [vmem:[%s35 + $0x3c] sm:$0xf]
  %v285 = vunpack.c.l.b16 %v253
  %v286 = vunpack.c.l.b16 %v254
  %v287 = vunpack.c.l.b16 %v255
  %v288 = vunpack.c.l.b16 %v256
  %v289 = vunpack.c.l.b16 %v257
  %v290 = vunpack.c.l.b16 %v258
  %v291 = vunpack.c.l.b16 %v259
  %v292 = vunpack.c.l.b16 %v260
  %v293 = vunpack.c.l.b16 %v261
  %v294 = vunpack.c.l.b16 %v262
  %v295 = vunpack.c.l.b16 %v263
  %v296 = vunpack.c.l.b16 %v264
  %v297 = vunpack.c.l.b16 %v265
  %v298 = vunpack.c.l.b16 %v266
  %v299 = vunpack.c.l.b16 %v267
  %v300 = vunpack.c.l.b16 %v268
  %v301 = vpack.c.b16 %v286, %v285
  %v302 = vpack.c.b16 %v288, %v287
  %v303 = vpack.c.b16 %v290, %v289
  %v304 = vpack.c.b16 %v292, %v291
  %v305 = vpack.c.b16 %v294, %v293
  %v306 = vpack.c.b16 %v296, %v295
  %v307 = vpack.c.b16 %v298, %v297
  %v308 = vpack.c.b16 %v300, %v299
  %317 = vmatpush.bf16.msra.mxu0 %v308
  %318 = vmatpush.bf16.msra.mxu0 %v307
  %319 = vmatpush.bf16.msra.mxu0 %v306
  %320 = vmatpush.bf16.msra.mxu0 %v305
  %321 = vmatpush.bf16.msra.mxu0 %v304
  %322 = vmatpush.bf16.msra.mxu0 %v303
  %323 = vmatpush.bf16.msra.mxu0 %v302
  %324 = vmatpush.bf16.msra.mxu0 %v301
  %325 = vmatmul.bf16.gmra.mxu0 %v252
  %v326 = vpop.f32.mrf.mxu0
  %v327 = vadd.f32 0.0, %v326
  %v328 = vpop.f32.mrf.mxu0
  %329 = vdwg.mxu0
  %v330 = vld [vmem:[%s37] sm:$0xf]
  %v331 = vld [vmem:[%s37 + $0x4] sm:$0xf]
  %v332 = vld [vmem:[%s37 + $0x8] sm:$0xf]
  %v333 = vld [vmem:[%s37 + $0xc] sm:$0xf]
  %v334 = vld [vmem:[%s37 + $0x10] sm:$0xf]
  %v335 = vld [vmem:[%s37 + $0x14] sm:$0xf]
  %v336 = vld [vmem:[%s37 + $0x18] sm:$0xf]
  %v337 = vld [vmem:[%s37 + $0x1c] sm:$0xf]
  %v338 = vld [vmem:[%s37 + $0x20] sm:$0xf]
  %v339 = vld [vmem:[%s37 + $0x24] sm:$0xf]
  %v340 = vld [vmem:[%s37 + $0x28] sm:$0xf]
  %v341 = vld [vmem:[%s37 + $0x2c] sm:$0xf]
  %v342 = vld [vmem:[%s37 + $0x30] sm:$0xf]
  %v343 = vld [vmem:[%s37 + $0x34] sm:$0xf]
  %v344 = vld [vmem:[%s37 + $0x38] sm:$0xf]
  %v345 = vld [vmem:[%s37 + $0x3c] sm:$0xf]
  %v362 = vunpack.c.l.b16 %v330
  %v363 = vunpack.c.l.b16 %v331
  %v364 = vunpack.c.l.b16 %v332
  %v365 = vunpack.c.l.b16 %v333
  %v366 = vunpack.c.l.b16 %v334
  %v367 = vunpack.c.l.b16 %v335
  %v368 = vunpack.c.l.b16 %v336
  %v369 = vunpack.c.l.b16 %v337
  %v370 = vunpack.c.l.b16 %v338
  %v371 = vunpack.c.l.b16 %v339
  %v372 = vunpack.c.l.b16 %v340
  %v373 = vunpack.c.l.b16 %v341
  %v374 = vunpack.c.l.b16 %v342
  %v375 = vunpack.c.l.b16 %v343
  %v376 = vunpack.c.l.b16 %v344
  %v377 = vunpack.c.l.b16 %v345
  %v378 = vpack.c.b16 %v363, %v362
  %v379 = vpack.c.b16 %v365, %v364
  %v380 = vpack.c.b16 %v367, %v366
  %v381 = vpack.c.b16 %v369, %v368
  %v382 = vpack.c.b16 %v371, %v370
  %v383 = vpack.c.b16 %v373, %v372
  %v384 = vpack.c.b16 %v375, %v374
  %v385 = vpack.c.b16 %v377, %v376
  %394 = vmatpush.bf16.msra.mxu0 %v385
  %395 = vmatpush.bf16.msra.mxu0 %v384
  %396 = vmatpush.bf16.msra.mxu0 %v383
  %397 = vmatpush.bf16.msra.mxu0 %v382
  %398 = vmatpush.bf16.msra.mxu0 %v381
  %399 = vmatpush.bf16.msra.mxu0 %v380
  %400 = vmatpush.bf16.msra.mxu0 %v379
  %401 = vmatpush.bf16.msra.mxu0 %v378
  %402 = vmatmul.bf16.gmra.mxu0 %v252
  %v403 = vpop.f32.mrf.mxu0
  %v404 = vadd.f32 0.0, %v403
  %v405 = vpop.f32.mrf.mxu0
  %406 = vdwg.mxu0
  %v407 = vpack.c.bf16 %v251, %v327
  %v408 = vpack.c.bf16 %v404, %v404
  %v409 = vld [vmem:[%s7] sm:$0xf]
  %v410 = vld [vmem:[%s7 + $0x4] sm:$0xf]
  %v411 = vld [vmem:[%s9] sm:$0xff]
  %v412 = vld [vmem:[%s9 + $0x8] sm:$0xff]
  %414 = vset.pattern.permute.xlu0 0
  %415 = vperm.xlu0 %414, %v411
  %v416 = vpop.permute.xlu0 %415
  %419 = vset.pattern.permute.xlu0 0
  %420 = vperm.xlu0 %419, %v412
  %v421 = vpop.permute.xlu0 %420
  %v425 = vunpack.c.l.b16 %v409
  %v426 = vunpack.c.l.b16 %v410
  %v427 = vpack.c.b16 %v426, %v425
  %vm428 = vcmask 195584
  %v430 = vsel %vm428, %v427, 0
  %v433 = vsel %vm168, %v408, 0
  %435 = vmatpush.bf16.msra.mxu0 0
  %436 = vmatpush.bf16.msra.mxu0 0
  %437 = vmatpush.bf16.msra.mxu0 0
  %438 = vmatpush.bf16.msra.mxu0 0
  %439 = vmatpush.bf16.msra.mxu0 0
  %440 = vmatpush.bf16.msra.mxu0 0
  %441 = vmatpush.bf16.msra.mxu0 %v433
  %442 = vmatpush.bf16.msra.mxu0 %v407
  %443 = vmatmul.bf16.gmra.mxu0 %v430
  %v444 = vpop.f32.mrf.mxu0
  %v445 = vadd.f32 %v416, %v444
  %v446 = vpop.f32.mrf.mxu0
  %v447 = vadd.f32 %v421, %v446
  %448 = vdwg.mxu0
  %v449 = vsel %vm185, %v445, 0.0
  %450 = vadd.xlane.f32.xlu0 %v449
  %v451 = vpop.xlane.xlu0 %450
  %v452 = vsel %vm185, %v447, 0.0
  %453 = vadd.xlane.f32.xlu0 %v452
  %v454 = vpop.xlane.xlu0 %453
  %v455 = vmul.f32 %v451, %v195
  %v456 = vmul.f32 %v454, %v195
  %v457 = vsub.f32 %v445, %v455
  %v458 = vsub.f32 %v447, %v456
  %v459 = vmul.f32 %v457, %v457
  %v460 = vmul.f32 %v458, %v458
  %v461 = vsel %vm185, %v459, 0.0
  %462 = vadd.xlane.f32.xlu0 %v461
  %v463 = vpop.xlane.xlu0 %462
  %v464 = vsel %vm185, %v460, 0.0
  %465 = vadd.xlane.f32.xlu0 %v464
  %v466 = vpop.xlane.xlu0 %465
  %v467 = vmul.f32 %v463, %v195
  %v468 = vmul.f32 %v466, %v195
  %v469 = vadd.f32 %v467, 1e-05
  %v470 = vadd.f32 %v468, 1e-05
  %v471 = vrsqrt.pop %v469
  %v472 = vmul.f32 %v471, %v469
  %v473 = vmul.f32 %v472, %v471
  %v474 = vmul.f32 0.5, %v473
  %v475 = vsub.f32 1.5, %v474
  %v476 = vmul.f32 %v471, %v475
  %vm477 = vweird.f32 %v469
  %vm478 = vweird.f32 %v471
  %vm479 = vmor %vm477, %vm478
  %v480 = vsel %vm479, %v471, %v476
  %v481 = vrsqrt.pop %v470
  %v482 = vmul.f32 %v481, %v470
  %v483 = vmul.f32 %v482, %v481
  %v484 = vmul.f32 0.5, %v483
  %v485 = vsub.f32 1.5, %v484
  %v486 = vmul.f32 %v481, %v485
  %vm487 = vweird.f32 %v470
  %vm488 = vweird.f32 %v481
  %vm489 = vmor %vm487, %vm488
  %v490 = vsel %vm489, %v481, %v486
  %v491 = vmul.f32 %v457, %v480
  %v492 = vmul.f32 %v458, %v490
  %495 = vrot.lane.b32.xlu0 %v445, 64
  %v496 = vpop.permute.xlu0 %495
  %497 = vrot.lane.b32.xlu0 %v447, 64
  %v498 = vpop.permute.xlu0 %497
  %v501 = vsel %vm185, %v496, 0.0
  %502 = vadd.xlane.f32.xlu0 %v501
  %v503 = vpop.xlane.xlu0 %502
  %v504 = vsel %vm185, %v498, 0.0
  %505 = vadd.xlane.f32.xlu0 %v504
  %v506 = vpop.xlane.xlu0 %505
  %v507 = vmul.f32 %v503, %v195
  %v508 = vmul.f32 %v506, %v195
  %v509 = vsub.f32 %v445, %v507
  %v510 = vsub.f32 %v447, %v508
  %v511 = vmul.f32 %v509, %v509
  %v512 = vmul.f32 %v510, %v510
  %515 = vrot.lane.b32.xlu0 %v511, 64
  %v516 = vpop.permute.xlu0 %515
  %517 = vrot.lane.b32.xlu0 %v512, 64
  %v518 = vpop.permute.xlu0 %517
  %v521 = vsel %vm185, %v516, 0.0
  %522 = vadd.xlane.f32.xlu0 %v521
  %v523 = vpop.xlane.xlu0 %522
  %v524 = vsel %vm185, %v518, 0.0
  %525 = vadd.xlane.f32.xlu0 %v524
  %v526 = vpop.xlane.xlu0 %525
  %v527 = vmul.f32 %v523, %v195
  %v528 = vmul.f32 %v526, %v195
  %v529 = vadd.f32 %v527, 1e-05
  %v530 = vadd.f32 %v528, 1e-05
  %v531 = vrsqrt.pop %v529
  %v532 = vmul.f32 %v531, %v529
  %v533 = vmul.f32 %v532, %v531
  %v534 = vmul.f32 0.5, %v533
  %v535 = vsub.f32 1.5, %v534
  %v536 = vmul.f32 %v531, %v535
  %vm537 = vweird.f32 %v529
  %vm538 = vweird.f32 %v531
  %vm539 = vmor %vm537, %vm538
  %v540 = vsel %vm539, %v531, %v536
  %v541 = vrsqrt.pop %v530
  %v542 = vmul.f32 %v541, %v530
  %v543 = vmul.f32 %v542, %v541
  %v544 = vmul.f32 0.5, %v543
  %v545 = vsub.f32 1.5, %v544
  %v546 = vmul.f32 %v541, %v545
  %vm547 = vweird.f32 %v530
  %vm548 = vweird.f32 %v541
  %vm549 = vmor %vm547, %vm548
  %v550 = vsel %vm549, %v541, %v546
  %v551 = vmul.f32 %v509, %v540
  %v552 = vmul.f32 %v510, %v550
  %v553 = vsel %vm185, %v491, %v551
  %v554 = vsel %vm185, %v492, %v552
  %vm555 = vcmp.gt.f32.partialorder %v553, 0.0
  %vm556 = vcmp.gt.f32.partialorder %v554, 0.0
  %v557 = vmin.f32 %v553, 0.0
  %v558 = vmin.f32 %v554, 0.0
  %v559 = vmul.f32 %v557, 1.442695
  %v560 = vpow.pop %v559
  %v561 = vmul.f32 %v558, 1.442695
  %v562 = vpow.pop %v561
  %v563 = vsub.f32 %v560, 1.0
  %v564 = vsub.f32 %v562, 1.0
  %v565 = vsel %vm555, %v553, %v563
  %v566 = vsel %vm556, %v554, %v564
  %v567 = vpack.c.bf16 %v566, %v565
  %v568 = vld [vmem:[%s51] sm:$0xf]
  %v569 = vld [vmem:[%s51 + $0x4] sm:$0xf]
  %v570 = vld [vmem:[%s51 + $0x8] sm:$0xf]
  %v571 = vld [vmem:[%s51 + $0xc] sm:$0xf]
  %v572 = vld [vmem:[%s51 + $0x10] sm:$0xf]
  %v573 = vld [vmem:[%s51 + $0x14] sm:$0xf]
  %v574 = vld [vmem:[%s51 + $0x18] sm:$0xf]
  %v575 = vld [vmem:[%s51 + $0x1c] sm:$0xf]
  %v576 = vld [vmem:[%s51 + $0x20] sm:$0xf]
  %v577 = vld [vmem:[%s51 + $0x24] sm:$0xf]
  %v578 = vld [vmem:[%s51 + $0x28] sm:$0xf]
  %v579 = vld [vmem:[%s51 + $0x2c] sm:$0xf]
  %v580 = vld [vmem:[%s51 + $0x30] sm:$0xf]
  %v581 = vld [vmem:[%s51 + $0x34] sm:$0xf]
  %v582 = vld [vmem:[%s51 + $0x38] sm:$0xf]
  %v583 = vld [vmem:[%s51 + $0x3c] sm:$0xf]
  %v600 = vunpack.c.l.b16 %v568
  %v601 = vunpack.c.l.b16 %v569
  %v602 = vunpack.c.l.b16 %v570
  %v603 = vunpack.c.l.b16 %v571
  %v604 = vunpack.c.l.b16 %v572
  %v605 = vunpack.c.l.b16 %v573
  %v606 = vunpack.c.l.b16 %v574
  %v607 = vunpack.c.l.b16 %v575
  %v608 = vunpack.c.l.b16 %v576
  %v609 = vunpack.c.l.b16 %v577
  %v610 = vunpack.c.l.b16 %v578
  %v611 = vunpack.c.l.b16 %v579
  %v612 = vunpack.c.l.b16 %v580
  %v613 = vunpack.c.l.b16 %v581
  %v614 = vunpack.c.l.b16 %v582
  %v615 = vunpack.c.l.b16 %v583
  %v616 = vpack.c.b16 %v601, %v600
  %v617 = vpack.c.b16 %v603, %v602
  %v618 = vpack.c.b16 %v605, %v604
  %v619 = vpack.c.b16 %v607, %v606
  %v620 = vpack.c.b16 %v609, %v608
  %v621 = vpack.c.b16 %v611, %v610
  %v622 = vpack.c.b16 %v613, %v612
  %v623 = vpack.c.b16 %v615, %v614
  %632 = vmatpush.bf16.msra.mxu0 %v623
  %633 = vmatpush.bf16.msra.mxu0 %v622
  %634 = vmatpush.bf16.msra.mxu0 %v621
  %635 = vmatpush.bf16.msra.mxu0 %v620
  %636 = vmatpush.bf16.msra.mxu0 %v619
  %637 = vmatpush.bf16.msra.mxu0 %v618
  %638 = vmatpush.bf16.msra.mxu0 %v617
  %639 = vmatpush.bf16.msra.mxu0 %v616
  %640 = vmatmul.bf16.gmra.mxu0 %v567
  %v641 = vpop.f32.mrf.mxu0
  %v642 = vadd.f32 0.0, %v641
  %v643 = vpop.f32.mrf.mxu0
  %v644 = vadd.f32 0.0, %v643
  %645 = vdwg.mxu0
  %v646 = vld [vmem:[%s53] sm:$0xf]
  %v647 = vld [vmem:[%s53 + $0x4] sm:$0xf]
  %v648 = vld [vmem:[%s53 + $0x8] sm:$0xf]
  %v649 = vld [vmem:[%s53 + $0xc] sm:$0xf]
  %v650 = vld [vmem:[%s53 + $0x10] sm:$0xf]
  %v651 = vld [vmem:[%s53 + $0x14] sm:$0xf]
  %v652 = vld [vmem:[%s53 + $0x18] sm:$0xf]
  %v653 = vld [vmem:[%s53 + $0x1c] sm:$0xf]
  %v654 = vld [vmem:[%s53 + $0x20] sm:$0xf]
  %v655 = vld [vmem:[%s53 + $0x24] sm:$0xf]
  %v656 = vld [vmem:[%s53 + $0x28] sm:$0xf]
  %v657 = vld [vmem:[%s53 + $0x2c] sm:$0xf]
  %v658 = vld [vmem:[%s53 + $0x30] sm:$0xf]
  %v659 = vld [vmem:[%s53 + $0x34] sm:$0xf]
  %v660 = vld [vmem:[%s53 + $0x38] sm:$0xf]
  %v661 = vld [vmem:[%s53 + $0x3c] sm:$0xf]
  %v678 = vunpack.c.l.b16 %v646
  %v679 = vunpack.c.l.b16 %v647
  %v680 = vunpack.c.l.b16 %v648
  %v681 = vunpack.c.l.b16 %v649
  %v682 = vunpack.c.l.b16 %v650
  %v683 = vunpack.c.l.b16 %v651
  %v684 = vunpack.c.l.b16 %v652
  %v685 = vunpack.c.l.b16 %v653
  %v686 = vunpack.c.l.b16 %v654
  %v687 = vunpack.c.l.b16 %v655
  %v688 = vunpack.c.l.b16 %v656
  %v689 = vunpack.c.l.b16 %v657
  %v690 = vunpack.c.l.b16 %v658
  %v691 = vunpack.c.l.b16 %v659
  %v692 = vunpack.c.l.b16 %v660
  %v693 = vunpack.c.l.b16 %v661
  %v694 = vpack.c.b16 %v679, %v678
  %v695 = vpack.c.b16 %v681, %v680
  %v696 = vpack.c.b16 %v683, %v682
  %v697 = vpack.c.b16 %v685, %v684
  %v698 = vpack.c.b16 %v687, %v686
  %v699 = vpack.c.b16 %v689, %v688
  %v700 = vpack.c.b16 %v691, %v690
  %v701 = vpack.c.b16 %v693, %v692
  %710 = vmatpush.bf16.msra.mxu0 %v701
  %711 = vmatpush.bf16.msra.mxu0 %v700
  %712 = vmatpush.bf16.msra.mxu0 %v699
  %713 = vmatpush.bf16.msra.mxu0 %v698
  %714 = vmatpush.bf16.msra.mxu0 %v697
  %715 = vmatpush.bf16.msra.mxu0 %v696
  %716 = vmatpush.bf16.msra.mxu0 %v695
  %717 = vmatpush.bf16.msra.mxu0 %v694
  %718 = vmatmul.bf16.gmra.mxu0 %v567
  %v719 = vpop.f32.mrf.mxu0
  %v720 = vadd.f32 0.0, %v719
  %v721 = vpop.f32.mrf.mxu0
  %v722 = vadd.f32 0.0, %v721
  %723 = vdwg.mxu0
  %v724 = vmax.f32 %v642, %v720
  %v725 = vmax.f32 %v644, %v722
  %v726 = vpack.c.bf16 %v725, %v724
  %v727 = vld [vmem:[%s39] sm:$0xf]
  %v728 = vld [vmem:[%s39 + $0x4] sm:$0xf]
  %v729 = vld [vmem:[%s39 + $0x8] sm:$0xf]
  %v730 = vld [vmem:[%s39 + $0xc] sm:$0xf]
  %v731 = vld [vmem:[%s39 + $0x10] sm:$0xf]
  %v732 = vld [vmem:[%s39 + $0x14] sm:$0xf]
  %v733 = vld [vmem:[%s39 + $0x18] sm:$0xf]
  %v734 = vld [vmem:[%s39 + $0x1c] sm:$0xf]
  %v743 = vunpack.c.l.b16 %v727
  %v744 = vunpack.c.l.b16 %v728
  %v745 = vunpack.c.l.b16 %v729
  %v746 = vunpack.c.l.b16 %v730
  %v747 = vunpack.c.l.b16 %v731
  %v748 = vunpack.c.l.b16 %v732
  %v749 = vunpack.c.l.b16 %v733
  %v750 = vunpack.c.l.b16 %v734
  %v751 = vpack.c.b16 %v744, %v743
  %v752 = vpack.c.b16 %v746, %v745
  %v753 = vpack.c.b16 %v748, %v747
  %v754 = vpack.c.b16 %v750, %v749
  %v760 = vsel %vm185, %v726, 0
  %762 = vmatpush.bf16.msra.mxu0 0
  %763 = vmatpush.bf16.msra.mxu0 0
  %764 = vmatpush.bf16.msra.mxu0 0
  %765 = vmatpush.bf16.msra.mxu0 0
  %766 = vmatpush.bf16.msra.mxu0 %v754
  %767 = vmatpush.bf16.msra.mxu0 %v753
  %768 = vmatpush.bf16.msra.mxu0 %v752
  %769 = vmatpush.bf16.msra.mxu0 %v751
  %770 = vmatmul.bf16.gmra.mxu0 %v760
  %v771 = vpop.f32.mrf.mxu0
  %v772 = vadd.f32 0.0, %v771
  %v773 = vpop.f32.mrf.mxu0
  %v774 = vadd.f32 0.0, %v773
  %775 = vdwg.mxu0
  %v776 = vld [vmem:[%s41] sm:$0xf]
  %v777 = vld [vmem:[%s41 + $0x4] sm:$0xf]
  %v778 = vld [vmem:[%s41 + $0x8] sm:$0xf]
  %v779 = vld [vmem:[%s41 + $0xc] sm:$0xf]
  %v780 = vld [vmem:[%s41 + $0x10] sm:$0xf]
  %v781 = vld [vmem:[%s41 + $0x14] sm:$0xf]
  %v782 = vld [vmem:[%s41 + $0x18] sm:$0xf]
  %v783 = vld [vmem:[%s41 + $0x1c] sm:$0xf]
  %v792 = vunpack.c.l.b16 %v776
  %v793 = vunpack.c.l.b16 %v777
  %v794 = vunpack.c.l.b16 %v778
  %v795 = vunpack.c.l.b16 %v779
  %v796 = vunpack.c.l.b16 %v780
  %v797 = vunpack.c.l.b16 %v781
  %v798 = vunpack.c.l.b16 %v782
  %v799 = vunpack.c.l.b16 %v783
  %v800 = vpack.c.b16 %v793, %v792
  %v801 = vpack.c.b16 %v795, %v794
  %v802 = vpack.c.b16 %v797, %v796
  %v803 = vpack.c.b16 %v799, %v798
  %808 = vmatpush.bf16.msra.mxu0 0
  %809 = vmatpush.bf16.msra.mxu0 0
  %810 = vmatpush.bf16.msra.mxu0 0
  %811 = vmatpush.bf16.msra.mxu0 0
  %812 = vmatpush.bf16.msra.mxu0 %v803
  %813 = vmatpush.bf16.msra.mxu0 %v802
  %814 = vmatpush.bf16.msra.mxu0 %v801
  %815 = vmatpush.bf16.msra.mxu0 %v800
  %816 = vmatmul.bf16.gmra.mxu0 %v760
  %v817 = vpop.f32.mrf.mxu0
  %v818 = vadd.f32 0.0, %v817
  %v819 = vpop.f32.mrf.mxu0
  %v820 = vadd.f32 0.0, %v819
  %821 = vdwg.mxu0
  %v822 = vpack.c.bf16 %v774, %v772
  %v823 = vpack.c.bf16 %v820, %v818
  %v824 = vld [vmem:[%s11] sm:$0xf]
  %v825 = vld [vmem:[%s11 + $0x4] sm:$0xf]
  %v826 = vld [vmem:[%s11 + $0x8] sm:$0xf]
  %v827 = vld [vmem:[%s11 + $0xc] sm:$0xf]
  %v828 = vld [vmem:[%s13] sm:$0xff]
  %v829 = vld [vmem:[%s13 + $0x8] sm:$0xff]
  %v830 = vld [vmem:[%s13 + $0x10] sm:$0xff]
  %v831 = vld [vmem:[%s13 + $0x18] sm:$0xff]
  %833 = vset.pattern.permute.xlu0 0
  %834 = vperm.xlu0 %833, %v828
  %v835 = vpop.permute.xlu0 %834
  %838 = vset.pattern.permute.xlu0 0
  %839 = vperm.xlu0 %838, %v829
  %v840 = vpop.permute.xlu0 %839
  %843 = vset.pattern.permute.xlu0 0
  %844 = vperm.xlu0 %843, %v830
  %v845 = vpop.permute.xlu0 %844
  %848 = vset.pattern.permute.xlu0 0
  %849 = vperm.xlu0 %848, %v831
  %v850 = vpop.permute.xlu0 %849
  %v856 = vunpack.c.l.b16 %v824
  %v857 = vunpack.c.l.b16 %v825
  %v858 = vunpack.c.l.b16 %v826
  %v859 = vunpack.c.l.b16 %v827
  %v860 = vpack.c.b16 %v857, %v856
  %v861 = vpack.c.b16 %v859, %v858
  %vm862 = vcmask 392192
  %v864 = vsel %vm862, %v860, 0
  %v867 = vsel %vm862, %v861, 0
  %869 = vmatpush.bf16.msra.mxu0 0
  %870 = vmatpush.bf16.msra.mxu0 0
  %871 = vmatpush.bf16.msra.mxu0 0
  %872 = vmatpush.bf16.msra.mxu0 0
  %873 = vmatpush.bf16.msra.mxu0 0
  %874 = vmatpush.bf16.msra.mxu0 %v823
  %875 = vmatpush.bf16.msra.mxu0 %v726
  %876 = vmatpush.bf16.msra.mxu0 %v822
  %877 = vmatmul.bf16.gmra.mxu0 %v864
  %v878 = vpop.f32.mrf.mxu0
  %v879 = vadd.f32 %v835, %v878
  %v880 = vpop.f32.mrf.mxu0
  %v881 = vadd.f32 %v840, %v880
  %882 = vmatmul.bf16.gmra.mxu0 %v867
  %v883 = vpop.f32.mrf.mxu0
  %v884 = vadd.f32 %v845, %v883
  %v885 = vpop.f32.mrf.mxu0
  %v886 = vadd.f32 %v850, %v885
  %887 = vdwg.mxu0
  %vm888 = vcmask 261120
  %v889 = vsel %vm888, %v879, 0.0
  %890 = vadd.xlane.f32.xlu0 %v889
  %v891 = vpop.xlane.xlu0 %890
  %v892 = vsel %vm888, %v881, 0.0
  %893 = vadd.xlane.f32.xlu0 %v892
  %v894 = vpop.xlane.xlu0 %893
  %v895 = vsel %vm888, %v884, 0.0
  %896 = vadd.xlane.f32.xlu0 %v895
  %v897 = vpop.xlane.xlu0 %896
  %v898 = vsel %vm888, %v886, 0.0
  %899 = vadd.xlane.f32.xlu0 %v898
  %v900 = vpop.xlane.xlu0 %899
  %v901 = vrcp.pop 32.0
  %v902 = vmul.f32 32.0, %v901
  %v903 = vsub.f32 1.0, %v902
  %v904 = vmul.f32 %v901, %v903
  %v905 = vadd.f32 %v901, %v904
  %vm906 = vweird.f32 %v901
  %v907 = vsel %vm906, %v901, %v905
  %v908 = vmul.f32 %v891, %v907
  %v909 = vmul.f32 %v894, %v907
  %v910 = vmul.f32 %v897, %v907
  %v911 = vmul.f32 %v900, %v907
  %v912 = vsub.f32 %v879, %v908
  %v913 = vsub.f32 %v881, %v909
  %v914 = vsub.f32 %v884, %v910
  %v915 = vsub.f32 %v886, %v911
  %v916 = vmul.f32 %v912, %v912
  %v917 = vmul.f32 %v913, %v913
  %v918 = vmul.f32 %v914, %v914
  %v919 = vmul.f32 %v915, %v915
  %v920 = vsel %vm888, %v916, 0.0
  %921 = vadd.xlane.f32.xlu0 %v920
  %v922 = vpop.xlane.xlu0 %921
  %v923 = vsel %vm888, %v917, 0.0
  %924 = vadd.xlane.f32.xlu0 %v923
  %v925 = vpop.xlane.xlu0 %924
  %v926 = vsel %vm888, %v918, 0.0
  %927 = vadd.xlane.f32.xlu0 %v926
  %v928 = vpop.xlane.xlu0 %927
  %v929 = vsel %vm888, %v919, 0.0
  %930 = vadd.xlane.f32.xlu0 %v929
  %v931 = vpop.xlane.xlu0 %930
  %v932 = vmul.f32 %v922, %v907
  %v933 = vmul.f32 %v925, %v907
  %v934 = vmul.f32 %v928, %v907
  %v935 = vmul.f32 %v931, %v907
  %v936 = vadd.f32 %v932, 1e-05
  %v937 = vadd.f32 %v933, 1e-05
  %v938 = vadd.f32 %v934, 1e-05
  %v939 = vadd.f32 %v935, 1e-05
  %v940 = vrsqrt.pop %v936
  %v941 = vmul.f32 %v940, %v936
  %v942 = vmul.f32 %v941, %v940
  %v943 = vmul.f32 0.5, %v942
  %v944 = vsub.f32 1.5, %v943
  %v945 = vmul.f32 %v940, %v944
  %vm946 = vweird.f32 %v936
  %vm947 = vweird.f32 %v940
  %vm948 = vmor %vm946, %vm947
  %v949 = vsel %vm948, %v940, %v945
  %v950 = vrsqrt.pop %v937
  %v951 = vmul.f32 %v950, %v937
  %v952 = vmul.f32 %v951, %v950
  %v953 = vmul.f32 0.5, %v952
  %v954 = vsub.f32 1.5, %v953
  %v955 = vmul.f32 %v950, %v954
  %vm956 = vweird.f32 %v937
  %vm957 = vweird.f32 %v950
  %vm958 = vmor %vm956, %vm957
  %v959 = vsel %vm958, %v950, %v955
  %v960 = vrsqrt.pop %v938
  %v961 = vmul.f32 %v960, %v938
  %v962 = vmul.f32 %v961, %v960
  %v963 = vmul.f32 0.5, %v962
  %v964 = vsub.f32 1.5, %v963
  %v965 = vmul.f32 %v960, %v964
  %vm966 = vweird.f32 %v938
  %vm967 = vweird.f32 %v960
  %vm968 = vmor %vm966, %vm967
  %v969 = vsel %vm968, %v960, %v965
  %v970 = vrsqrt.pop %v939
  %v971 = vmul.f32 %v970, %v939
  %v972 = vmul.f32 %v971, %v970
  %v973 = vmul.f32 0.5, %v972
  %v974 = vsub.f32 1.5, %v973
  %v975 = vmul.f32 %v970, %v974
  %vm976 = vweird.f32 %v939
  %vm977 = vweird.f32 %v970
  %vm978 = vmor %vm976, %vm977
  %v979 = vsel %vm978, %v970, %v975
  %v980 = vmul.f32 %v912, %v949
  %v981 = vmul.f32 %v913, %v959
  %v982 = vmul.f32 %v914, %v969
  %v983 = vmul.f32 %v915, %v979
  %988 = vrot.lane.b32.xlu0 %v879, 96
  %v989 = vpop.permute.xlu0 %988
  %990 = vrot.lane.b32.xlu0 %v881, 96
  %v991 = vpop.permute.xlu0 %990
  %992 = vrot.lane.b32.xlu0 %v884, 96
  %v993 = vpop.permute.xlu0 %992
  %994 = vrot.lane.b32.xlu0 %v886, 96
  %v995 = vpop.permute.xlu0 %994
  %v1000 = vsel %vm888, %v989, 0.0
  %1001 = vadd.xlane.f32.xlu0 %v1000
  %v1002 = vpop.xlane.xlu0 %1001
  %v1003 = vsel %vm888, %v991, 0.0
  %1004 = vadd.xlane.f32.xlu0 %v1003
  %v1005 = vpop.xlane.xlu0 %1004
  %v1006 = vsel %vm888, %v993, 0.0
  %1007 = vadd.xlane.f32.xlu0 %v1006
  %v1008 = vpop.xlane.xlu0 %1007
  %v1009 = vsel %vm888, %v995, 0.0
  %1010 = vadd.xlane.f32.xlu0 %v1009
  %v1011 = vpop.xlane.xlu0 %1010
  %v1012 = vmul.f32 %v1002, %v907
  %v1013 = vmul.f32 %v1005, %v907
  %v1014 = vmul.f32 %v1008, %v907
  %v1015 = vmul.f32 %v1011, %v907
  %v1016 = vsub.f32 %v879, %v1012
  %v1017 = vsub.f32 %v881, %v1013
  %v1018 = vsub.f32 %v884, %v1014
  %v1019 = vsub.f32 %v886, %v1015
  %v1020 = vmul.f32 %v1016, %v1016
  %v1021 = vmul.f32 %v1017, %v1017
  %v1022 = vmul.f32 %v1018, %v1018
  %v1023 = vmul.f32 %v1019, %v1019
  %1028 = vrot.lane.b32.xlu0 %v1020, 96
  %v1029 = vpop.permute.xlu0 %1028
  %1030 = vrot.lane.b32.xlu0 %v1021, 96
  %v1031 = vpop.permute.xlu0 %1030
  %1032 = vrot.lane.b32.xlu0 %v1022, 96
  %v1033 = vpop.permute.xlu0 %1032
  %1034 = vrot.lane.b32.xlu0 %v1023, 96
  %v1035 = vpop.permute.xlu0 %1034
  %v1040 = vsel %vm888, %v1029, 0.0
  %1041 = vadd.xlane.f32.xlu0 %v1040
  %v1042 = vpop.xlane.xlu0 %1041
  %v1043 = vsel %vm888, %v1031, 0.0
  %1044 = vadd.xlane.f32.xlu0 %v1043
  %v1045 = vpop.xlane.xlu0 %1044
  %v1046 = vsel %vm888, %v1033, 0.0
  %1047 = vadd.xlane.f32.xlu0 %v1046
  %v1048 = vpop.xlane.xlu0 %1047
  %v1049 = vsel %vm888, %v1035, 0.0
  %1050 = vadd.xlane.f32.xlu0 %v1049
  %v1051 = vpop.xlane.xlu0 %1050
  %v1052 = vmul.f32 %v1042, %v907
  %v1053 = vmul.f32 %v1045, %v907
  %v1054 = vmul.f32 %v1048, %v907
  %v1055 = vmul.f32 %v1051, %v907
  %v1056 = vadd.f32 %v1052, 1e-05
  %v1057 = vadd.f32 %v1053, 1e-05
  %v1058 = vadd.f32 %v1054, 1e-05
  %v1059 = vadd.f32 %v1055, 1e-05
  %v1060 = vrsqrt.pop %v1056
  %v1061 = vmul.f32 %v1060, %v1056
  %v1062 = vmul.f32 %v1061, %v1060
  %v1063 = vmul.f32 0.5, %v1062
  %v1064 = vsub.f32 1.5, %v1063
  %v1065 = vmul.f32 %v1060, %v1064
  %vm1066 = vweird.f32 %v1056
  %vm1067 = vweird.f32 %v1060
  %vm1068 = vmor %vm1066, %vm1067
  %v1069 = vsel %vm1068, %v1060, %v1065
  %v1070 = vrsqrt.pop %v1057
  %v1071 = vmul.f32 %v1070, %v1057
  %v1072 = vmul.f32 %v1071, %v1070
  %v1073 = vmul.f32 0.5, %v1072
  %v1074 = vsub.f32 1.5, %v1073
  %v1075 = vmul.f32 %v1070, %v1074
  %vm1076 = vweird.f32 %v1057
  %vm1077 = vweird.f32 %v1070
  %vm1078 = vmor %vm1076, %vm1077
  %v1079 = vsel %vm1078, %v1070, %v1075
  %v1080 = vrsqrt.pop %v1058
  %v1081 = vmul.f32 %v1080, %v1058
  %v1082 = vmul.f32 %v1081, %v1080
  %v1083 = vmul.f32 0.5, %v1082
  %v1084 = vsub.f32 1.5, %v1083
  %v1085 = vmul.f32 %v1080, %v1084
  %vm1086 = vweird.f32 %v1058
  %vm1087 = vweird.f32 %v1080
  %vm1088 = vmor %vm1086, %vm1087
  %v1089 = vsel %vm1088, %v1080, %v1085
  %v1090 = vrsqrt.pop %v1059
  %v1091 = vmul.f32 %v1090, %v1059
  %v1092 = vmul.f32 %v1091, %v1090
  %v1093 = vmul.f32 0.5, %v1092
  %v1094 = vsub.f32 1.5, %v1093
  %v1095 = vmul.f32 %v1090, %v1094
  %vm1096 = vweird.f32 %v1059
  %vm1097 = vweird.f32 %v1090
  %vm1098 = vmor %vm1096, %vm1097
  %v1099 = vsel %vm1098, %v1090, %v1095
  %v1100 = vmul.f32 %v1016, %v1069
  %v1101 = vmul.f32 %v1017, %v1079
  %v1102 = vmul.f32 %v1018, %v1089
  %v1103 = vmul.f32 %v1019, %v1099
  %v1104 = vsel %vm888, %v980, %v1100
  %v1105 = vsel %vm888, %v981, %v1101
  %v1106 = vsel %vm888, %v982, %v1102
  %v1107 = vsel %vm888, %v983, %v1103
  %vm1108 = vcmp.gt.f32.partialorder %v1104, 0.0
  %vm1109 = vcmp.gt.f32.partialorder %v1105, 0.0
  %vm1110 = vcmp.gt.f32.partialorder %v1106, 0.0
  %vm1111 = vcmp.gt.f32.partialorder %v1107, 0.0
  %v1112 = vmin.f32 %v1104, 0.0
  %v1113 = vmin.f32 %v1105, 0.0
  %v1114 = vmin.f32 %v1106, 0.0
  %v1115 = vmin.f32 %v1107, 0.0
  %v1116 = vmul.f32 %v1112, 1.442695
  %v1117 = vpow.pop %v1116
  %v1118 = vmul.f32 %v1113, 1.442695
  %v1119 = vpow.pop %v1118
  %v1120 = vmul.f32 %v1114, 1.442695
  %v1121 = vpow.pop %v1120
  %v1122 = vmul.f32 %v1115, 1.442695
  %v1123 = vpow.pop %v1122
  %v1124 = vsub.f32 %v1117, 1.0
  %v1125 = vsub.f32 %v1119, 1.0
  %v1126 = vsub.f32 %v1121, 1.0
  %v1127 = vsub.f32 %v1123, 1.0
  %v1128 = vsel %vm1108, %v1104, %v1124
  %v1129 = vsel %vm1109, %v1105, %v1125
  %v1130 = vsel %vm1110, %v1106, %v1126
  %v1131 = vsel %vm1111, %v1107, %v1127
  %v1132 = vpack.c.bf16 %v1129, %v1128
  %v1133 = vpack.c.bf16 %v1131, %v1130
  %v1134 = vld [vmem:[%s55] sm:$0xf]
  %v1135 = vld [vmem:[%s55 + $0x4] sm:$0xf]
  %v1136 = vld [vmem:[%s55 + $0x8] sm:$0xf]
  %v1137 = vld [vmem:[%s55 + $0xc] sm:$0xf]
  %v1138 = vld [vmem:[%s55 + $0x10] sm:$0xf]
  %v1139 = vld [vmem:[%s55 + $0x14] sm:$0xf]
  %v1140 = vld [vmem:[%s55 + $0x18] sm:$0xf]
  %v1141 = vld [vmem:[%s55 + $0x1c] sm:$0xf]
  %v1150 = vunpack.c.l.b16 %v1134
  %v1151 = vunpack.c.l.b16 %v1135
  %v1152 = vunpack.c.l.b16 %v1136
  %v1153 = vunpack.c.l.b16 %v1137
  %v1154 = vunpack.c.l.b16 %v1138
  %v1155 = vunpack.c.l.b16 %v1139
  %v1156 = vunpack.c.l.b16 %v1140
  %v1157 = vunpack.c.l.b16 %v1141
  %v1158 = vpack.c.b16 %v1151, %v1150
  %v1159 = vpack.c.b16 %v1153, %v1152
  %v1160 = vpack.c.b16 %v1155, %v1154
  %v1161 = vpack.c.b16 %v1157, %v1156
  %v1167 = vsel %vm185, %v1132, 0
  %v1170 = vsel %vm185, %v1133, 0
  %1172 = vmatpush.bf16.msra.mxu0 0
  %1173 = vmatpush.bf16.msra.mxu0 0
  %1174 = vmatpush.bf16.msra.mxu0 0
  %1175 = vmatpush.bf16.msra.mxu0 0
  %1176 = vmatpush.bf16.msra.mxu0 %v1161
  %1177 = vmatpush.bf16.msra.mxu0 %v1160
  %1178 = vmatpush.bf16.msra.mxu0 %v1159
  %1179 = vmatpush.bf16.msra.mxu0 %v1158
  %1180 = vmatmul.bf16.gmra.mxu0 %v1167
  %v1181 = vpop.f32.mrf.mxu0
  %v1182 = vadd.f32 0.0, %v1181
  %v1183 = vpop.f32.mrf.mxu0
  %v1184 = vadd.f32 0.0, %v1183
  %1185 = vmatmul.bf16.gmra.mxu0 %v1170
  %v1186 = vpop.f32.mrf.mxu0
  %v1187 = vadd.f32 0.0, %v1186
  %v1188 = vpop.f32.mrf.mxu0
  %v1189 = vadd.f32 0.0, %v1188
  %1190 = vdwg.mxu0
  %v1191 = vld [vmem:[%s57] sm:$0xf]
  %v1192 = vld [vmem:[%s57 + $0x4] sm:$0xf]
  %v1193 = vld [vmem:[%s57 + $0x8] sm:$0xf]
  %v1194 = vld [vmem:[%s57 + $0xc] sm:$0xf]
  %v1195 = vld [vmem:[%s57 + $0x10] sm:$0xf]
  %v1196 = vld [vmem:[%s57 + $0x14] sm:$0xf]
  %v1197 = vld [vmem:[%s57 + $0x18] sm:$0xf]
  %v1198 = vld [vmem:[%s57 + $0x1c] sm:$0xf]
  %v1207 = vunpack.c.l.b16 %v1191
  %v1208 = vunpack.c.l.b16 %v1192
  %v1209 = vunpack.c.l.b16 %v1193
  %v1210 = vunpack.c.l.b16 %v1194
  %v1211 = vunpack.c.l.b16 %v1195
  %v1212 = vunpack.c.l.b16 %v1196
  %v1213 = vunpack.c.l.b16 %v1197
  %v1214 = vunpack.c.l.b16 %v1198
  %v1215 = vpack.c.b16 %v1208, %v1207
  %v1216 = vpack.c.b16 %v1210, %v1209
  %v1217 = vpack.c.b16 %v1212, %v1211
  %v1218 = vpack.c.b16 %v1214, %v1213
  %1223 = vmatpush.bf16.msra.mxu0 0
  %1224 = vmatpush.bf16.msra.mxu0 0
  %1225 = vmatpush.bf16.msra.mxu0 0
  %1226 = vmatpush.bf16.msra.mxu0 0
  %1227 = vmatpush.bf16.msra.mxu0 %v1218
  %1228 = vmatpush.bf16.msra.mxu0 %v1217
  %1229 = vmatpush.bf16.msra.mxu0 %v1216
  %1230 = vmatpush.bf16.msra.mxu0 %v1215
  %1231 = vmatmul.bf16.gmra.mxu0 %v1167
  %v1232 = vpop.f32.mrf.mxu0
  %v1233 = vadd.f32 0.0, %v1232
  %v1234 = vpop.f32.mrf.mxu0
  %v1235 = vadd.f32 0.0, %v1234
  %1236 = vmatmul.bf16.gmra.mxu0 %v1170
  %v1237 = vpop.f32.mrf.mxu0
  %v1238 = vadd.f32 0.0, %v1237
  %v1239 = vpop.f32.mrf.mxu0
  %v1240 = vadd.f32 0.0, %v1239
  %1241 = vdwg.mxu0
  %v1242 = vmax.f32 %v1182, %v1233
  %v1243 = vmax.f32 %v1184, %v1235
  %v1244 = vmax.f32 %v1187, %v1238
  %v1245 = vmax.f32 %v1189, %v1240
  %v1246 = vpack.c.bf16 %v1243, %v1242
  %v1247 = vpack.c.bf16 %v1245, %v1244
  %v1248 = vld [vmem:[%s43] sm:$0xf]
  %v1249 = vld [vmem:[%s43 + $0x4] sm:$0xf]
  %v1250 = vld [vmem:[%s43 + $0x8] sm:$0xf]
  %v1251 = vld [vmem:[%s43 + $0xc] sm:$0xf]
  %v1256 = vunpack.c.l.b16 %v1248
  %v1257 = vunpack.c.l.b16 %v1249
  %v1258 = vunpack.c.l.b16 %v1250
  %v1259 = vunpack.c.l.b16 %v1251
  %v1260 = vpack.c.b16 %v1257, %v1256
  %v1261 = vpack.c.b16 %v1259, %v1258
  %v1265 = vsel %vm888, %v1246, 0
  %v1268 = vsel %vm888, %v1247, 0
  %1270 = vmatpush.bf16.msra.mxu0 0
  %1271 = vmatpush.bf16.msra.mxu0 0
  %1272 = vmatpush.bf16.msra.mxu0 0
  %1273 = vmatpush.bf16.msra.mxu0 0
  %1274 = vmatpush.bf16.msra.mxu0 0
  %1275 = vmatpush.bf16.msra.mxu0 0
  %1276 = vmatpush.bf16.msra.mxu0 %v1261
  %1277 = vmatpush.bf16.msra.mxu0 %v1260
  %1278 = vmatmul.bf16.gmra.mxu0 %v1265
  %v1279 = vpop.f32.mrf.mxu0
  %v1280 = vadd.f32 0.0, %v1279
  %v1281 = vpop.f32.mrf.mxu0
  %v1282 = vadd.f32 0.0, %v1281
  %1283 = vmatmul.bf16.gmra.mxu0 %v1268
  %v1284 = vpop.f32.mrf.mxu0
  %v1285 = vadd.f32 0.0, %v1284
  %v1286 = vpop.f32.mrf.mxu0
  %v1287 = vadd.f32 0.0, %v1286
  %1288 = vdwg.mxu0
  %v1289 = vld [vmem:[%s45] sm:$0xf]
  %v1290 = vld [vmem:[%s45 + $0x4] sm:$0xf]
  %v1291 = vld [vmem:[%s45 + $0x8] sm:$0xf]
  %v1292 = vld [vmem:[%s45 + $0xc] sm:$0xf]
  %v1297 = vunpack.c.l.b16 %v1289
  %v1298 = vunpack.c.l.b16 %v1290
  %v1299 = vunpack.c.l.b16 %v1291
  %v1300 = vunpack.c.l.b16 %v1292
  %v1301 = vpack.c.b16 %v1298, %v1297
  %v1302 = vpack.c.b16 %v1300, %v1299
  %1305 = vmatpush.bf16.msra.mxu0 0
  %1306 = vmatpush.bf16.msra.mxu0 0
  %1307 = vmatpush.bf16.msra.mxu0 0
  %1308 = vmatpush.bf16.msra.mxu0 0
  %1309 = vmatpush.bf16.msra.mxu0 0
  %1310 = vmatpush.bf16.msra.mxu0 0
  %1311 = vmatpush.bf16.msra.mxu0 %v1302
  %1312 = vmatpush.bf16.msra.mxu0 %v1301
  %1313 = vmatmul.bf16.gmra.mxu0 %v1265
  %v1314 = vpop.f32.mrf.mxu0
  %v1315 = vadd.f32 0.0, %v1314
  %v1316 = vpop.f32.mrf.mxu0
  %v1317 = vadd.f32 0.0, %v1316
  %1318 = vmatmul.bf16.gmra.mxu0 %v1268
  %v1319 = vpop.f32.mrf.mxu0
  %v1320 = vadd.f32 0.0, %v1319
  %v1321 = vpop.f32.mrf.mxu0
  %v1322 = vadd.f32 0.0, %v1321
  %1323 = vdwg.mxu0
  %v1324 = vpack.c.bf16 %v1282, %v1280
  %v1325 = vpack.c.bf16 %v1287, %v1285
  %v1326 = vpack.c.bf16 %v1317, %v1315
  %v1327 = vpack.c.bf16 %v1322, %v1320
  %v1328 = vld [vmem:[%s15] sm:$0xf]
  %v1329 = vld [vmem:[%s15 + $0x4] sm:$0xf]
  %v1330 = vld [vmem:[%s15 + $0x8] sm:$0xf]
  %v1331 = vld [vmem:[%s15 + $0xc] sm:$0xf]
  %v1332 = vld [vmem:[%s17] sm:$0xff]
  %v1333 = vld [vmem:[%s17 + $0x8] sm:$0xff]
  %v1334 = vld [vmem:[%s17 + $0x10] sm:$0xff]
  %v1335 = vld [vmem:[%s17 + $0x18] sm:$0xff]
  %1337 = vset.pattern.permute.xlu0 0
  %1338 = vperm.xlu0 %1337, %v1332
  %v1339 = vpop.permute.xlu0 %1338
  %1342 = vset.pattern.permute.xlu0 0
  %1343 = vperm.xlu0 %1342, %v1333
  %v1344 = vpop.permute.xlu0 %1343
  %1347 = vset.pattern.permute.xlu0 0
  %1348 = vperm.xlu0 %1347, %v1334
  %v1349 = vpop.permute.xlu0 %1348
  %1352 = vset.pattern.permute.xlu0 0
  %1353 = vperm.xlu0 %1352, %v1335
  %v1354 = vpop.permute.xlu0 %1353
  %v1360 = vunpack.c.l.b16 %v1328
  %v1361 = vunpack.c.l.b16 %v1329
  %v1362 = vunpack.c.l.b16 %v1330
  %v1363 = vunpack.c.l.b16 %v1331
  %v1364 = vpack.c.b16 %v1361, %v1360
  %v1365 = vpack.c.b16 %v1363, %v1362
  %vm1366 = vcmask 785408
  %v1368 = vsel %vm1366, %v1364, 0
  %v1371 = vsel %vm1366, %v1365, 0
  %1373 = vmatpush.bf16.msra.mxu0 0
  %1374 = vmatpush.bf16.msra.mxu0 0
  %1375 = vmatpush.bf16.msra.mxu0 %v1327
  %1376 = vmatpush.bf16.msra.mxu0 %v1326
  %1377 = vmatpush.bf16.msra.mxu0 %v1247
  %1378 = vmatpush.bf16.msra.mxu0 %v1246
  %1379 = vmatpush.bf16.msra.mxu0 %v1325
  %1380 = vmatpush.bf16.msra.mxu0 %v1324
  %1381 = vmatmul.bf16.gmra.mxu0 %v1368
  %v1382 = vpop.f32.mrf.mxu0
  %v1383 = vadd.f32 %v1339, %v1382
  %v1384 = vpop.f32.mrf.mxu0
  %v1385 = vadd.f32 %v1344, %v1384
  %1386 = vmatmul.bf16.gmra.mxu0 %v1371
  %v1387 = vpop.f32.mrf.mxu0
  %v1388 = vadd.f32 %v1349, %v1387
  %v1389 = vpop.f32.mrf.mxu0
  %v1390 = vadd.f32 %v1354, %v1389
  %1391 = vdwg.mxu0
  %vm1392 = vcmask 130048
  %v1393 = vsel %vm1392, %v1383, 0.0
  %1394 = vadd.xlane.f32.xlu0 %v1393
  %v1395 = vpop.xlane.xlu0 %1394
  %v1396 = vsel %vm1392, %v1385, 0.0
  %1397 = vadd.xlane.f32.xlu0 %v1396
  %v1398 = vpop.xlane.xlu0 %1397
  %v1399 = vsel %vm1392, %v1388, 0.0
  %1400 = vadd.xlane.f32.xlu0 %v1399
  %v1401 = vpop.xlane.xlu0 %1400
  %v1402 = vsel %vm1392, %v1390, 0.0
  %1403 = vadd.xlane.f32.xlu0 %v1402
  %v1404 = vpop.xlane.xlu0 %1403
  %v1405 = vrcp.pop 16.0
  %v1406 = vmul.f32 16.0, %v1405
  %v1407 = vsub.f32 1.0, %v1406
  %v1408 = vmul.f32 %v1405, %v1407
  %v1409 = vadd.f32 %v1405, %v1408
  %vm1410 = vweird.f32 %v1405
  %v1411 = vsel %vm1410, %v1405, %v1409
  %v1412 = vmul.f32 %v1395, %v1411
  %v1413 = vmul.f32 %v1398, %v1411
  %v1414 = vmul.f32 %v1401, %v1411
  %v1415 = vmul.f32 %v1404, %v1411
  %v1416 = vsub.f32 %v1383, %v1412
  %v1417 = vsub.f32 %v1385, %v1413
  %v1418 = vsub.f32 %v1388, %v1414
  %v1419 = vsub.f32 %v1390, %v1415
  %v1420 = vmul.f32 %v1416, %v1416
  %v1421 = vmul.f32 %v1417, %v1417
  %v1422 = vmul.f32 %v1418, %v1418
  %v1423 = vmul.f32 %v1419, %v1419
  %v1424 = vsel %vm1392, %v1420, 0.0
  %1425 = vadd.xlane.f32.xlu0 %v1424
  %v1426 = vpop.xlane.xlu0 %1425
  %v1427 = vsel %vm1392, %v1421, 0.0
  %1428 = vadd.xlane.f32.xlu0 %v1427
  %v1429 = vpop.xlane.xlu0 %1428
  %v1430 = vsel %vm1392, %v1422, 0.0
  %1431 = vadd.xlane.f32.xlu0 %v1430
  %v1432 = vpop.xlane.xlu0 %1431
  %v1433 = vsel %vm1392, %v1423, 0.0
  %1434 = vadd.xlane.f32.xlu0 %v1433
  %v1435 = vpop.xlane.xlu0 %1434
  %v1436 = vmul.f32 %v1426, %v1411
  %v1437 = vmul.f32 %v1429, %v1411
  %v1438 = vmul.f32 %v1432, %v1411
  %v1439 = vmul.f32 %v1435, %v1411
  %v1440 = vadd.f32 %v1436, 1e-05
  %v1441 = vadd.f32 %v1437, 1e-05
  %v1442 = vadd.f32 %v1438, 1e-05
  %v1443 = vadd.f32 %v1439, 1e-05
  %v1444 = vrsqrt.pop %v1440
  %v1445 = vmul.f32 %v1444, %v1440
  %v1446 = vmul.f32 %v1445, %v1444
  %v1447 = vmul.f32 0.5, %v1446
  %v1448 = vsub.f32 1.5, %v1447
  %v1449 = vmul.f32 %v1444, %v1448
  %vm1450 = vweird.f32 %v1440
  %vm1451 = vweird.f32 %v1444
  %vm1452 = vmor %vm1450, %vm1451
  %v1453 = vsel %vm1452, %v1444, %v1449
  %v1454 = vrsqrt.pop %v1441
  %v1455 = vmul.f32 %v1454, %v1441
  %v1456 = vmul.f32 %v1455, %v1454
  %v1457 = vmul.f32 0.5, %v1456
  %v1458 = vsub.f32 1.5, %v1457
  %v1459 = vmul.f32 %v1454, %v1458
  %vm1460 = vweird.f32 %v1441
  %vm1461 = vweird.f32 %v1454
  %vm1462 = vmor %vm1460, %vm1461
  %v1463 = vsel %vm1462, %v1454, %v1459
  %v1464 = vrsqrt.pop %v1442
  %v1465 = vmul.f32 %v1464, %v1442
  %v1466 = vmul.f32 %v1465, %v1464
  %v1467 = vmul.f32 0.5, %v1466
  %v1468 = vsub.f32 1.5, %v1467
  %v1469 = vmul.f32 %v1464, %v1468
  %vm1470 = vweird.f32 %v1442
  %vm1471 = vweird.f32 %v1464
  %vm1472 = vmor %vm1470, %vm1471
  %v1473 = vsel %vm1472, %v1464, %v1469
  %v1474 = vrsqrt.pop %v1443
  %v1475 = vmul.f32 %v1474, %v1443
  %v1476 = vmul.f32 %v1475, %v1474
  %v1477 = vmul.f32 0.5, %v1476
  %v1478 = vsub.f32 1.5, %v1477
  %v1479 = vmul.f32 %v1474, %v1478
  %vm1480 = vweird.f32 %v1443
  %vm1481 = vweird.f32 %v1474
  %vm1482 = vmor %vm1480, %vm1481
  %v1483 = vsel %vm1482, %v1474, %v1479
  %v1484 = vmul.f32 %v1416, %v1453
  %v1485 = vmul.f32 %v1417, %v1463
  %v1486 = vmul.f32 %v1418, %v1473
  %v1487 = vmul.f32 %v1419, %v1483
  %1492 = vrot.lane.b32.xlu0 %v1383, 112
  %v1493 = vpop.permute.xlu0 %1492
  %1494 = vrot.lane.b32.xlu0 %v1385, 112
  %v1495 = vpop.permute.xlu0 %1494
  %1496 = vrot.lane.b32.xlu0 %v1388, 112
  %v1497 = vpop.permute.xlu0 %1496
  %1498 = vrot.lane.b32.xlu0 %v1390, 112
  %v1499 = vpop.permute.xlu0 %1498
  %v1504 = vsel %vm1392, %v1493, 0.0
  %1505 = vadd.xlane.f32.xlu0 %v1504
  %v1506 = vpop.xlane.xlu0 %1505
  %v1507 = vsel %vm1392, %v1495, 0.0
  %1508 = vadd.xlane.f32.xlu0 %v1507
  %v1509 = vpop.xlane.xlu0 %1508
  %v1510 = vsel %vm1392, %v1497, 0.0
  %1511 = vadd.xlane.f32.xlu0 %v1510
  %v1512 = vpop.xlane.xlu0 %1511
  %v1513 = vsel %vm1392, %v1499, 0.0
  %1514 = vadd.xlane.f32.xlu0 %v1513
  %v1515 = vpop.xlane.xlu0 %1514
  %v1516 = vmul.f32 %v1506, %v1411
  %v1517 = vmul.f32 %v1509, %v1411
  %v1518 = vmul.f32 %v1512, %v1411
  %v1519 = vmul.f32 %v1515, %v1411
  %v1520 = vsub.f32 %v1383, %v1516
  %v1521 = vsub.f32 %v1385, %v1517
  %v1522 = vsub.f32 %v1388, %v1518
  %v1523 = vsub.f32 %v1390, %v1519
  %v1524 = vmul.f32 %v1520, %v1520
  %v1525 = vmul.f32 %v1521, %v1521
  %v1526 = vmul.f32 %v1522, %v1522
  %v1527 = vmul.f32 %v1523, %v1523
  %1532 = vrot.lane.b32.xlu0 %v1524, 112
  %v1533 = vpop.permute.xlu0 %1532
  %1534 = vrot.lane.b32.xlu0 %v1525, 112
  %v1535 = vpop.permute.xlu0 %1534
  %1536 = vrot.lane.b32.xlu0 %v1526, 112
  %v1537 = vpop.permute.xlu0 %1536
  %1538 = vrot.lane.b32.xlu0 %v1527, 112
  %v1539 = vpop.permute.xlu0 %1538
  %v1544 = vsel %vm1392, %v1533, 0.0
  %1545 = vadd.xlane.f32.xlu0 %v1544
  %v1546 = vpop.xlane.xlu0 %1545
  %v1547 = vsel %vm1392, %v1535, 0.0
  %1548 = vadd.xlane.f32.xlu0 %v1547
  %v1549 = vpop.xlane.xlu0 %1548
  %v1550 = vsel %vm1392, %v1537, 0.0
  %1551 = vadd.xlane.f32.xlu0 %v1550
  %v1552 = vpop.xlane.xlu0 %1551
  %v1553 = vsel %vm1392, %v1539, 0.0
  %1554 = vadd.xlane.f32.xlu0 %v1553
  %v1555 = vpop.xlane.xlu0 %1554
  %v1556 = vmul.f32 %v1546, %v1411
  %v1557 = vmul.f32 %v1549, %v1411
  %v1558 = vmul.f32 %v1552, %v1411
  %v1559 = vmul.f32 %v1555, %v1411
  %v1560 = vadd.f32 %v1556, 1e-05
  %v1561 = vadd.f32 %v1557, 1e-05
  %v1562 = vadd.f32 %v1558, 1e-05
  %v1563 = vadd.f32 %v1559, 1e-05
  %v1564 = vrsqrt.pop %v1560
  %v1565 = vmul.f32 %v1564, %v1560
  %v1566 = vmul.f32 %v1565, %v1564
  %v1567 = vmul.f32 0.5, %v1566
  %v1568 = vsub.f32 1.5, %v1567
  %v1569 = vmul.f32 %v1564, %v1568
  %vm1570 = vweird.f32 %v1560
  %vm1571 = vweird.f32 %v1564
  %vm1572 = vmor %vm1570, %vm1571
  %v1573 = vsel %vm1572, %v1564, %v1569
  %v1574 = vrsqrt.pop %v1561
  %v1575 = vmul.f32 %v1574, %v1561
  %v1576 = vmul.f32 %v1575, %v1574
  %v1577 = vmul.f32 0.5, %v1576
  %v1578 = vsub.f32 1.5, %v1577
  %v1579 = vmul.f32 %v1574, %v1578
  %vm1580 = vweird.f32 %v1561
  %vm1581 = vweird.f32 %v1574
  %vm1582 = vmor %vm1580, %vm1581
  %v1583 = vsel %vm1582, %v1574, %v1579
  %v1584 = vrsqrt.pop %v1562
  %v1585 = vmul.f32 %v1584, %v1562
  %v1586 = vmul.f32 %v1585, %v1584
  %v1587 = vmul.f32 0.5, %v1586
  %v1588 = vsub.f32 1.5, %v1587
  %v1589 = vmul.f32 %v1584, %v1588
  %vm1590 = vweird.f32 %v1562
  %vm1591 = vweird.f32 %v1584
  %vm1592 = vmor %vm1590, %vm1591
  %v1593 = vsel %vm1592, %v1584, %v1589
  %v1594 = vrsqrt.pop %v1563
  %v1595 = vmul.f32 %v1594, %v1563
  %v1596 = vmul.f32 %v1595, %v1594
  %v1597 = vmul.f32 0.5, %v1596
  %v1598 = vsub.f32 1.5, %v1597
  %v1599 = vmul.f32 %v1594, %v1598
  %vm1600 = vweird.f32 %v1563
  %vm1601 = vweird.f32 %v1594
  %vm1602 = vmor %vm1600, %vm1601
  %v1603 = vsel %vm1602, %v1594, %v1599
  %v1604 = vmul.f32 %v1520, %v1573
  %v1605 = vmul.f32 %v1521, %v1583
  %v1606 = vmul.f32 %v1522, %v1593
  %v1607 = vmul.f32 %v1523, %v1603
  %v1608 = vsel %vm1392, %v1484, %v1604
  %v1609 = vsel %vm1392, %v1485, %v1605
  %v1610 = vsel %vm1392, %v1486, %v1606
  %v1611 = vsel %vm1392, %v1487, %v1607
  %vm1612 = vcmp.gt.f32.partialorder %v1608, 0.0
  %vm1613 = vcmp.gt.f32.partialorder %v1609, 0.0
  %vm1614 = vcmp.gt.f32.partialorder %v1610, 0.0
  %vm1615 = vcmp.gt.f32.partialorder %v1611, 0.0
  %v1616 = vmin.f32 %v1608, 0.0
  %v1617 = vmin.f32 %v1609, 0.0
  %v1618 = vmin.f32 %v1610, 0.0
  %v1619 = vmin.f32 %v1611, 0.0
  %v1620 = vmul.f32 %v1616, 1.442695
  %v1621 = vpow.pop %v1620
  %v1622 = vmul.f32 %v1617, 1.442695
  %v1623 = vpow.pop %v1622
  %v1624 = vmul.f32 %v1618, 1.442695
  %v1625 = vpow.pop %v1624
  %v1626 = vmul.f32 %v1619, 1.442695
  %v1627 = vpow.pop %v1626
  %v1628 = vsub.f32 %v1621, 1.0
  %v1629 = vsub.f32 %v1623, 1.0
  %v1630 = vsub.f32 %v1625, 1.0
  %v1631 = vsub.f32 %v1627, 1.0
  %v1632 = vsel %vm1612, %v1608, %v1628
  %v1633 = vsel %vm1613, %v1609, %v1629
  %v1634 = vsel %vm1614, %v1610, %v1630
  %v1635 = vsel %vm1615, %v1611, %v1631
  %v1636 = vpack.c.bf16 %v1633, %v1632
  %v1637 = vpack.c.bf16 %v1635, %v1634
  %v1638 = vld [vmem:[%s59] sm:$0xf]
  %v1639 = vld [vmem:[%s59 + $0x4] sm:$0xf]
  %v1640 = vld [vmem:[%s59 + $0x8] sm:$0xf]
  %v1641 = vld [vmem:[%s59 + $0xc] sm:$0xf]
  %v1646 = vunpack.c.l.b16 %v1638
  %v1647 = vunpack.c.l.b16 %v1639
  %v1648 = vunpack.c.l.b16 %v1640
  %v1649 = vunpack.c.l.b16 %v1641
  %v1650 = vpack.c.b16 %v1647, %v1646
  %v1651 = vpack.c.b16 %v1649, %v1648
  %v1655 = vsel %vm888, %v1636, 0
  %v1658 = vsel %vm888, %v1637, 0
  %1660 = vmatpush.bf16.msra.mxu0 0
  %1661 = vmatpush.bf16.msra.mxu0 0
  %1662 = vmatpush.bf16.msra.mxu0 0
  %1663 = vmatpush.bf16.msra.mxu0 0
  %1664 = vmatpush.bf16.msra.mxu0 0
  %1665 = vmatpush.bf16.msra.mxu0 0
  %1666 = vmatpush.bf16.msra.mxu0 %v1651
  %1667 = vmatpush.bf16.msra.mxu0 %v1650
  %1668 = vmatmul.bf16.gmra.mxu0 %v1655
  %v1669 = vpop.f32.mrf.mxu0
  %v1670 = vadd.f32 0.0, %v1669
  %v1671 = vpop.f32.mrf.mxu0
  %v1672 = vadd.f32 0.0, %v1671
  %1673 = vmatmul.bf16.gmra.mxu0 %v1658
  %v1674 = vpop.f32.mrf.mxu0
  %v1675 = vadd.f32 0.0, %v1674
  %v1676 = vpop.f32.mrf.mxu0
  %v1677 = vadd.f32 0.0, %v1676
  %1678 = vdwg.mxu0
  %v1679 = vld [vmem:[%s61] sm:$0xf]
  %v1680 = vld [vmem:[%s61 + $0x4] sm:$0xf]
  %v1681 = vld [vmem:[%s61 + $0x8] sm:$0xf]
  %v1682 = vld [vmem:[%s61 + $0xc] sm:$0xf]
  %v1687 = vunpack.c.l.b16 %v1679
  %v1688 = vunpack.c.l.b16 %v1680
  %v1689 = vunpack.c.l.b16 %v1681
  %v1690 = vunpack.c.l.b16 %v1682
  %v1691 = vpack.c.b16 %v1688, %v1687
  %v1692 = vpack.c.b16 %v1690, %v1689
  %1695 = vmatpush.bf16.msra.mxu0 0
  %1696 = vmatpush.bf16.msra.mxu0 0
  %1697 = vmatpush.bf16.msra.mxu0 0
  %1698 = vmatpush.bf16.msra.mxu0 0
  %1699 = vmatpush.bf16.msra.mxu0 0
  %1700 = vmatpush.bf16.msra.mxu0 0
  %1701 = vmatpush.bf16.msra.mxu0 %v1692
  %1702 = vmatpush.bf16.msra.mxu0 %v1691
  %1703 = vmatmul.bf16.gmra.mxu0 %v1655
  %v1704 = vpop.f32.mrf.mxu0
  %v1705 = vadd.f32 0.0, %v1704
  %v1706 = vpop.f32.mrf.mxu0
  %v1707 = vadd.f32 0.0, %v1706
  %1708 = vmatmul.bf16.gmra.mxu0 %v1658
  %v1709 = vpop.f32.mrf.mxu0
  %v1710 = vadd.f32 0.0, %v1709
  %v1711 = vpop.f32.mrf.mxu0
  %v1712 = vadd.f32 0.0, %v1711
  %1713 = vdwg.mxu0
  %v1714 = vmax.f32 %v1670, %v1705
  %v1715 = vmax.f32 %v1672, %v1707
  %v1716 = vmax.f32 %v1675, %v1710
  %v1717 = vmax.f32 %v1677, %v1712
  %v1718 = vpack.c.bf16 %v1715, %v1714
  %v1719 = vpack.c.bf16 %v1717, %v1716
  %v1720 = vld [vmem:[%s47] sm:$0xf]
  %v1721 = vld [vmem:[%s47 + $0x4] sm:$0xf]
  %v1724 = vunpack.c.l.b16 %v1720
  %v1725 = vunpack.c.l.b16 %v1721
  %v1726 = vpack.c.b16 %v1725, %v1724
  %v1729 = vsel %vm1392, %v1718, 0
  %v1732 = vsel %vm1392, %v1719, 0
  %1734 = vmatpush.bf16.msra.mxu0 0
  %1735 = vmatpush.bf16.msra.mxu0 0
  %1736 = vmatpush.bf16.msra.mxu0 0
  %1737 = vmatpush.bf16.msra.mxu0 0
  %1738 = vmatpush.bf16.msra.mxu0 0
  %1739 = vmatpush.bf16.msra.mxu0 0
  %1740 = vmatpush.bf16.msra.mxu0 0
  %1741 = vmatpush.bf16.msra.mxu0 %v1726
  %1742 = vmatmul.bf16.gmra.mxu0 %v1729
  %v1743 = vpop.f32.mrf.mxu0
  %v1744 = vadd.f32 0.0, %v1743
  %v1745 = vpop.f32.mrf.mxu0
  %v1746 = vadd.f32 0.0, %v1745
  %1747 = vmatmul.bf16.gmra.mxu0 %v1732
  %v1748 = vpop.f32.mrf.mxu0
  %v1749 = vadd.f32 0.0, %v1748
  %v1750 = vpop.f32.mrf.mxu0
  %v1751 = vadd.f32 0.0, %v1750
  %1752 = vdwg.mxu0
  %v1753 = vld [vmem:[%s49] sm:$0xf]
  %v1754 = vld [vmem:[%s49 + $0x4] sm:$0xf]
  %v1757 = vunpack.c.l.b16 %v1753
  %v1758 = vunpack.c.l.b16 %v1754
  %v1759 = vpack.c.b16 %v1758, %v1757
  %1761 = vmatpush.bf16.msra.mxu0 0
  %1762 = vmatpush.bf16.msra.mxu0 0
  %1763 = vmatpush.bf16.msra.mxu0 0
  %1764 = vmatpush.bf16.msra.mxu0 0
  %1765 = vmatpush.bf16.msra.mxu0 0
  %1766 = vmatpush.bf16.msra.mxu0 0
  %1767 = vmatpush.bf16.msra.mxu0 0
  %1768 = vmatpush.bf16.msra.mxu0 %v1759
  %1769 = vmatmul.bf16.gmra.mxu0 %v1729
  %v1770 = vpop.f32.mrf.mxu0
  %v1771 = vadd.f32 0.0, %v1770
  %v1772 = vpop.f32.mrf.mxu0
  %v1773 = vadd.f32 0.0, %v1772
  %1774 = vmatmul.bf16.gmra.mxu0 %v1732
  %v1775 = vpop.f32.mrf.mxu0
  %v1776 = vadd.f32 0.0, %v1775
  %v1777 = vpop.f32.mrf.mxu0
  %v1778 = vadd.f32 0.0, %v1777
  %1779 = vdwg.mxu0
  %v1780 = vpack.c.bf16 %v1746, %v1744
  %v1781 = vpack.c.bf16 %v1751, %v1749
  %v1782 = vpack.c.bf16 %v1773, %v1771
  %v1783 = vpack.c.bf16 %v1778, %v1776
  %v1784 = vld [vmem:[%s19] sm:$0xf]
  %v1785 = vld [vmem:[%s19 + $0x4] sm:$0xf]
  %v1786 = vld [vmem:[%s19 + $0x8] sm:$0xf]
  %v1787 = vld [vmem:[%s19 + $0xc] sm:$0xf]
  %v1788 = vld [vmem:[%s19 + $0x10] sm:$0xf]
  %v1789 = vld [vmem:[%s19 + $0x14] sm:$0xf]
  %v1790 = vld [vmem:[%s19 + $0x18] sm:$0xf]
  %v1791 = vld [vmem:[%s19 + $0x1c] sm:$0xf]
  %v1800 = vunpack.c.l.b16 %v1784
  %v1801 = vunpack.c.l.b16 %v1785
  %v1802 = vunpack.c.l.b16 %v1786
  %v1803 = vunpack.c.l.b16 %v1787
  %v1804 = vunpack.c.l.b16 %v1788
  %v1805 = vunpack.c.l.b16 %v1789
  %v1806 = vunpack.c.l.b16 %v1790
  %v1807 = vunpack.c.l.b16 %v1791
  %v1808 = vpack.c.b16 %v1801, %v1800
  %v1809 = vpack.c.b16 %v1803, %v1802
  %v1810 = vpack.c.b16 %v1805, %v1804
  %v1811 = vpack.c.b16 %v1807, %v1806
  %v1813 = vsel %vm1366, %v1808, 0
  %v1816 = vsel %vm1366, %v1809, 0
  %v1819 = vsel %vm1366, %v1810, 0
  %v1822 = vsel %vm1366, %v1811, 0
  %1824 = vmatpush.bf16.msra.mxu0 0
  %1825 = vmatpush.bf16.msra.mxu0 0
  %1826 = vmatpush.bf16.msra.mxu0 %v1783
  %1827 = vmatpush.bf16.msra.mxu0 %v1782
  %1828 = vmatpush.bf16.msra.mxu0 %v1719
  %1829 = vmatpush.bf16.msra.mxu0 %v1718
  %1830 = vmatpush.bf16.msra.mxu0 %v1781
  %1831 = vmatpush.bf16.msra.mxu0 %v1780
  %1832 = vmatmul.bf16.gmra.mxu0 %v1813
  %v1833 = vpop.f32.mrf.mxu0
  %v1834 = vadd.f32 0.0, %v1833
  %v1835 = vpop.f32.mrf.mxu0
  %v1836 = vadd.f32 0.0, %v1835
  %1837 = vmatmul.bf16.gmra.mxu0 %v1816
  %v1838 = vpop.f32.mrf.mxu0
  %v1839 = vadd.f32 0.0, %v1838
  %v1840 = vpop.f32.mrf.mxu0
  %v1841 = vadd.f32 0.0, %v1840
  %1842 = vmatmul.bf16.gmra.mxu0 %v1819
  %v1843 = vpop.f32.mrf.mxu0
  %v1844 = vadd.f32 0.0, %v1843
  %v1845 = vpop.f32.mrf.mxu0
  %v1846 = vadd.f32 0.0, %v1845
  %1847 = vmatmul.bf16.gmra.mxu0 %v1822
  %v1848 = vpop.f32.mrf.mxu0
  %v1849 = vadd.f32 0.0, %v1848
  %v1850 = vpop.f32.mrf.mxu0
  %v1851 = vadd.f32 0.0, %v1850
  %1852 = vdwg.mxu0
  %v1853 = vpack.c.bf16 %v1836, %v1834
  %v1854 = vpack.c.bf16 %v1841, %v1839
  %v1855 = vpack.c.bf16 %v1846, %v1844
  %v1856 = vpack.c.bf16 %v1851, %v1849
  %v1857 = vld [vmem:[%s63] sm:$0xf]
  %v1858 = vld [vmem:[%s63 + $0x4] sm:$0xf]
  %v1859 = vld [vmem:[%s65] sm:$0xf]
  %v1860 = vld [vmem:[%s65 + $0x4] sm:$0xf]
  %v1863 = vunpack.c.l.b16 %v1859
  %v1864 = vunpack.c.l.b16 %v1860
  %v1865 = vpack.c.b16 %v1864, %v1863
  %v1868 = vsel %vm1392, %v1855, 0
  %v1871 = vsel %vm1392, %v1856, 0
  %1873 = vmatpush.bf16.msra.mxu0 0
  %1874 = vmatpush.bf16.msra.mxu0 0
  %1875 = vmatpush.bf16.msra.mxu0 0
  %1876 = vmatpush.bf16.msra.mxu0 0
  %1877 = vmatpush.bf16.msra.mxu0 0
  %1878 = vmatpush.bf16.msra.mxu0 0
  %1879 = vmatpush.bf16.msra.mxu0 0
  %1880 = vmatpush.bf16.msra.mxu0 %v1865
  %1881 = vmatmul.bf16.gmra.mxu0 %v1868
  %v1882 = vpop.f32.mrf.mxu0
  %v1883 = vadd.f32 0.0, %v1882
  %v1884 = vpop.f32.mrf.mxu0
  %v1885 = vadd.f32 0.0, %v1884
  %1886 = vmatmul.bf16.gmra.mxu0 %v1871
  %v1887 = vpop.f32.mrf.mxu0
  %v1888 = vadd.f32 0.0, %v1887
  %v1889 = vpop.f32.mrf.mxu0
  %v1890 = vadd.f32 0.0, %v1889
  %1891 = vdwg.mxu0
  %v1894 = vunpack.c.l.b16 %v1857
  %v1895 = vunpack.c.l.b16 %v1858
  %v1896 = vpack.c.b16 %v1895, %v1894
  %v1899 = vsel %vm1392, %v1853, 0
  %v1902 = vsel %vm1392, %v1854, 0
  %1904 = vmatpush.bf16.msra.mxu0 0
  %1905 = vmatpush.bf16.msra.mxu0 0
  %1906 = vmatpush.bf16.msra.mxu0 0
  %1907 = vmatpush.bf16.msra.mxu0 0
  %1908 = vmatpush.bf16.msra.mxu0 0
  %1909 = vmatpush.bf16.msra.mxu0 0
  %1910 = vmatpush.bf16.msra.mxu0 0
  %1911 = vmatpush.bf16.msra.mxu0 %v1896
  %1912 = vmatmul.bf16.gmra.mxu0 %v1899
  %v1913 = vpop.f32.mrf.mxu0
  %v1914 = vadd.f32 %v1883, %v1913
  %v1915 = vpop.f32.mrf.mxu0
  %v1916 = vadd.f32 %v1885, %v1915
  %1917 = vmatmul.bf16.gmra.mxu0 %v1902
  %v1918 = vpop.f32.mrf.mxu0
  %v1919 = vadd.f32 %v1888, %v1918
  %v1920 = vpop.f32.mrf.mxu0
  %v1921 = vadd.f32 %v1890, %v1920
  %1922 = vdwg.mxu0
  %v1923 = vld [vmem:[%s21] sm:$0xff]
  %v1924 = vld [vmem:[%s21 + $0x8] sm:$0xff]
  %v1925 = vld [vmem:[%s21 + $0x10] sm:$0xff]
  %v1926 = vld [vmem:[%s21 + $0x18] sm:$0xff]
  %1928 = vset.pattern.permute.xlu0 0
  %1929 = vperm.xlu0 %1928, %v1923
  %v1930 = vpop.permute.xlu0 %1929
  %1933 = vset.pattern.permute.xlu0 0
  %1934 = vperm.xlu0 %1933, %v1924
  %v1935 = vpop.permute.xlu0 %1934
  %1938 = vset.pattern.permute.xlu0 0
  %1939 = vperm.xlu0 %1938, %v1925
  %v1940 = vpop.permute.xlu0 %1939
  %1943 = vset.pattern.permute.xlu0 0
  %1944 = vperm.xlu0 %1943, %v1926
  %v1945 = vpop.permute.xlu0 %1944
  %v1947 = vadd.f32 %v1914, %v1930
  %v1948 = vadd.f32 %v1916, %v1935
  %v1949 = vadd.f32 %v1919, %v1940
  %v1950 = vadd.f32 %v1921, %v1945
  %v1951 = vsel %vm1392, %v1947, 0.0
  %1952 = vadd.xlane.f32.xlu0 %v1951
  %v1953 = vpop.xlane.xlu0 %1952
  %v1954 = vsel %vm1392, %v1948, 0.0
  %1955 = vadd.xlane.f32.xlu0 %v1954
  %v1956 = vpop.xlane.xlu0 %1955
  %v1957 = vsel %vm1392, %v1949, 0.0
  %1958 = vadd.xlane.f32.xlu0 %v1957
  %v1959 = vpop.xlane.xlu0 %1958
  %v1960 = vsel %vm1392, %v1950, 0.0
  %1961 = vadd.xlane.f32.xlu0 %v1960
  %v1962 = vpop.xlane.xlu0 %1961
  %v1963 = vmul.f32 %v1953, %v1411
  %v1964 = vmul.f32 %v1956, %v1411
  %v1965 = vmul.f32 %v1959, %v1411
  %v1966 = vmul.f32 %v1962, %v1411
  %v1967 = vsub.f32 %v1947, %v1963
  %v1968 = vsub.f32 %v1948, %v1964
  %v1969 = vsub.f32 %v1949, %v1965
  %v1970 = vsub.f32 %v1950, %v1966
  %v1971 = vmul.f32 %v1967, %v1967
  %v1972 = vmul.f32 %v1968, %v1968
  %v1973 = vmul.f32 %v1969, %v1969
  %v1974 = vmul.f32 %v1970, %v1970
  %v1975 = vsel %vm1392, %v1971, 0.0
  %1976 = vadd.xlane.f32.xlu0 %v1975
  %v1977 = vpop.xlane.xlu0 %1976
  %v1978 = vsel %vm1392, %v1972, 0.0
  %1979 = vadd.xlane.f32.xlu0 %v1978
  %v1980 = vpop.xlane.xlu0 %1979
  %v1981 = vsel %vm1392, %v1973, 0.0
  %1982 = vadd.xlane.f32.xlu0 %v1981
  %v1983 = vpop.xlane.xlu0 %1982
  %v1984 = vsel %vm1392, %v1974, 0.0
  %1985 = vadd.xlane.f32.xlu0 %v1984
  %v1986 = vpop.xlane.xlu0 %1985
  %v1987 = vmul.f32 %v1977, %v1411
  %v1988 = vmul.f32 %v1980, %v1411
  %v1989 = vmul.f32 %v1983, %v1411
  %v1990 = vmul.f32 %v1986, %v1411
  %v1991 = vadd.f32 %v1987, 1e-05
  %v1992 = vadd.f32 %v1988, 1e-05
  %v1993 = vadd.f32 %v1989, 1e-05
  %v1994 = vadd.f32 %v1990, 1e-05
  %v1995 = vrsqrt.pop %v1991
  %v1996 = vmul.f32 %v1995, %v1991
  %v1997 = vmul.f32 %v1996, %v1995
  %v1998 = vmul.f32 0.5, %v1997
  %v1999 = vsub.f32 1.5, %v1998
  %v2000 = vmul.f32 %v1995, %v1999
  %vm2001 = vweird.f32 %v1991
  %vm2002 = vweird.f32 %v1995
  %vm2003 = vmor %vm2001, %vm2002
  %v2004 = vsel %vm2003, %v1995, %v2000
  %v2005 = vrsqrt.pop %v1992
  %v2006 = vmul.f32 %v2005, %v1992
  %v2007 = vmul.f32 %v2006, %v2005
  %v2008 = vmul.f32 0.5, %v2007
  %v2009 = vsub.f32 1.5, %v2008
  %v2010 = vmul.f32 %v2005, %v2009
  %vm2011 = vweird.f32 %v1992
  %vm2012 = vweird.f32 %v2005
  %vm2013 = vmor %vm2011, %vm2012
  %v2014 = vsel %vm2013, %v2005, %v2010
  %v2015 = vrsqrt.pop %v1993
  %v2016 = vmul.f32 %v2015, %v1993
  %v2017 = vmul.f32 %v2016, %v2015
  %v2018 = vmul.f32 0.5, %v2017
  %v2019 = vsub.f32 1.5, %v2018
  %v2020 = vmul.f32 %v2015, %v2019
  %vm2021 = vweird.f32 %v1993
  %vm2022 = vweird.f32 %v2015
  %vm2023 = vmor %vm2021, %vm2022
  %v2024 = vsel %vm2023, %v2015, %v2020
  %v2025 = vrsqrt.pop %v1994
  %v2026 = vmul.f32 %v2025, %v1994
  %v2027 = vmul.f32 %v2026, %v2025
  %v2028 = vmul.f32 0.5, %v2027
  %v2029 = vsub.f32 1.5, %v2028
  %v2030 = vmul.f32 %v2025, %v2029
  %vm2031 = vweird.f32 %v1994
  %vm2032 = vweird.f32 %v2025
  %vm2033 = vmor %vm2031, %vm2032
  %v2034 = vsel %vm2033, %v2025, %v2030
  %v2035 = vmul.f32 %v1967, %v2004
  %v2036 = vmul.f32 %v1968, %v2014
  %v2037 = vmul.f32 %v1969, %v2024
  %v2038 = vmul.f32 %v1970, %v2034
  %2043 = vrot.lane.b32.xlu0 %v1947, 112
  %v2044 = vpop.permute.xlu0 %2043
  %2045 = vrot.lane.b32.xlu0 %v1948, 112
  %v2046 = vpop.permute.xlu0 %2045
  %2047 = vrot.lane.b32.xlu0 %v1949, 112
  %v2048 = vpop.permute.xlu0 %2047
  %2049 = vrot.lane.b32.xlu0 %v1950, 112
  %v2050 = vpop.permute.xlu0 %2049
  %v2055 = vsel %vm1392, %v2044, 0.0
  %2056 = vadd.xlane.f32.xlu0 %v2055
  %v2057 = vpop.xlane.xlu0 %2056
  %v2058 = vsel %vm1392, %v2046, 0.0
  %2059 = vadd.xlane.f32.xlu0 %v2058
  %v2060 = vpop.xlane.xlu0 %2059
  %v2061 = vsel %vm1392, %v2048, 0.0
  %2062 = vadd.xlane.f32.xlu0 %v2061
  %v2063 = vpop.xlane.xlu0 %2062
  %v2064 = vsel %vm1392, %v2050, 0.0
  %2065 = vadd.xlane.f32.xlu0 %v2064
  %v2066 = vpop.xlane.xlu0 %2065
  %v2067 = vmul.f32 %v2057, %v1411
  %v2068 = vmul.f32 %v2060, %v1411
  %v2069 = vmul.f32 %v2063, %v1411
  %v2070 = vmul.f32 %v2066, %v1411
  %v2071 = vsub.f32 %v1947, %v2067
  %v2072 = vsub.f32 %v1948, %v2068
  %v2073 = vsub.f32 %v1949, %v2069
  %v2074 = vsub.f32 %v1950, %v2070
  %v2075 = vmul.f32 %v2071, %v2071
  %v2076 = vmul.f32 %v2072, %v2072
  %v2077 = vmul.f32 %v2073, %v2073
  %v2078 = vmul.f32 %v2074, %v2074
  %2083 = vrot.lane.b32.xlu0 %v2075, 112
  %v2084 = vpop.permute.xlu0 %2083
  %2085 = vrot.lane.b32.xlu0 %v2076, 112
  %v2086 = vpop.permute.xlu0 %2085
  %2087 = vrot.lane.b32.xlu0 %v2077, 112
  %v2088 = vpop.permute.xlu0 %2087
  %2089 = vrot.lane.b32.xlu0 %v2078, 112
  %v2090 = vpop.permute.xlu0 %2089
  %v2095 = vsel %vm1392, %v2084, 0.0
  %2096 = vadd.xlane.f32.xlu0 %v2095
  %v2097 = vpop.xlane.xlu0 %2096
  %v2098 = vsel %vm1392, %v2086, 0.0
  %2099 = vadd.xlane.f32.xlu0 %v2098
  %v2100 = vpop.xlane.xlu0 %2099
  %v2101 = vsel %vm1392, %v2088, 0.0
  %2102 = vadd.xlane.f32.xlu0 %v2101
  %v2103 = vpop.xlane.xlu0 %2102
  %v2104 = vsel %vm1392, %v2090, 0.0
  %2105 = vadd.xlane.f32.xlu0 %v2104
  %v2106 = vpop.xlane.xlu0 %2105
  %v2107 = vmul.f32 %v2097, %v1411
  %v2108 = vmul.f32 %v2100, %v1411
  %v2109 = vmul.f32 %v2103, %v1411
  %v2110 = vmul.f32 %v2106, %v1411
  %v2111 = vadd.f32 %v2107, 1e-05
  %v2112 = vadd.f32 %v2108, 1e-05
  %v2113 = vadd.f32 %v2109, 1e-05
  %v2114 = vadd.f32 %v2110, 1e-05
  %v2115 = vrsqrt.pop %v2111
  %v2116 = vmul.f32 %v2115, %v2111
  %v2117 = vmul.f32 %v2116, %v2115
  %v2118 = vmul.f32 0.5, %v2117
  %v2119 = vsub.f32 1.5, %v2118
  %v2120 = vmul.f32 %v2115, %v2119
  %vm2121 = vweird.f32 %v2111
  %vm2122 = vweird.f32 %v2115
  %vm2123 = vmor %vm2121, %vm2122
  %v2124 = vsel %vm2123, %v2115, %v2120
  %v2125 = vrsqrt.pop %v2112
  %v2126 = vmul.f32 %v2125, %v2112
  %v2127 = vmul.f32 %v2126, %v2125
  %v2128 = vmul.f32 0.5, %v2127
  %v2129 = vsub.f32 1.5, %v2128
  %v2130 = vmul.f32 %v2125, %v2129
  %vm2131 = vweird.f32 %v2112
  %vm2132 = vweird.f32 %v2125
  %vm2133 = vmor %vm2131, %vm2132
  %v2134 = vsel %vm2133, %v2125, %v2130
  %v2135 = vrsqrt.pop %v2113
  %v2136 = vmul.f32 %v2135, %v2113
  %v2137 = vmul.f32 %v2136, %v2135
  %v2138 = vmul.f32 0.5, %v2137
  %v2139 = vsub.f32 1.5, %v2138
  %v2140 = vmul.f32 %v2135, %v2139
  %vm2141 = vweird.f32 %v2113
  %vm2142 = vweird.f32 %v2135
  %vm2143 = vmor %vm2141, %vm2142
  %v2144 = vsel %vm2143, %v2135, %v2140
  %v2145 = vrsqrt.pop %v2114
  %v2146 = vmul.f32 %v2145, %v2114
  %v2147 = vmul.f32 %v2146, %v2145
  %v2148 = vmul.f32 0.5, %v2147
  %v2149 = vsub.f32 1.5, %v2148
  %v2150 = vmul.f32 %v2145, %v2149
  %vm2151 = vweird.f32 %v2114
  %vm2152 = vweird.f32 %v2145
  %vm2153 = vmor %vm2151, %vm2152
  %v2154 = vsel %vm2153, %v2145, %v2150
  %v2155 = vmul.f32 %v2071, %v2124
  %v2156 = vmul.f32 %v2072, %v2134
  %v2157 = vmul.f32 %v2073, %v2144
  %v2158 = vmul.f32 %v2074, %v2154
  %v2159 = vsel %vm1392, %v2035, %v2155
  %v2160 = vsel %vm1392, %v2036, %v2156
  %v2161 = vsel %vm1392, %v2037, %v2157
  %v2162 = vsel %vm1392, %v2038, %v2158
  %vm2163 = vcmp.gt.f32.partialorder %v2159, 0.0
  %vm2164 = vcmp.gt.f32.partialorder %v2160, 0.0
  %vm2165 = vcmp.gt.f32.partialorder %v2161, 0.0
  %vm2166 = vcmp.gt.f32.partialorder %v2162, 0.0
  %v2167 = vmin.f32 %v2159, 0.0
  %v2168 = vmin.f32 %v2160, 0.0
  %v2169 = vmin.f32 %v2161, 0.0
  %v2170 = vmin.f32 %v2162, 0.0
  %v2171 = vmul.f32 %v2167, 1.442695
  %v2172 = vpow.pop %v2171
  %v2173 = vmul.f32 %v2168, 1.442695
  %v2174 = vpow.pop %v2173
  %v2175 = vmul.f32 %v2169, 1.442695
  %v2176 = vpow.pop %v2175
  %v2177 = vmul.f32 %v2170, 1.442695
  %v2178 = vpow.pop %v2177
  %v2179 = vsub.f32 %v2172, 1.0
  %v2180 = vsub.f32 %v2174, 1.0
  %v2181 = vsub.f32 %v2176, 1.0
  %v2182 = vsub.f32 %v2178, 1.0
  %v2183 = vsel %vm2163, %v2159, %v2179
  %v2184 = vsel %vm2164, %v2160, %v2180
  %v2185 = vsel %vm2165, %v2161, %v2181
  %v2186 = vsel %vm2166, %v2162, %v2182
  %v2187 = vpack.c.bf16 %v2184, %v2183
  %v2188 = vpack.c.bf16 %v2186, %v2185
  %v2190 = vsel %vm888, %v2187, 0
  %v2193 = vsel %vm888, %v2188, 0
  %2195 = vmatpush.bf16.msra.mxu0 0
  %2196 = vmatpush.bf16.msra.mxu0 0
  %2197 = vmatpush.bf16.msra.mxu0 0
  %2198 = vmatpush.bf16.msra.mxu0 0
  %2199 = vmatpush.bf16.msra.mxu0 0
  %2200 = vmatpush.bf16.msra.mxu0 0
  %2201 = vmatpush.bf16.msra.mxu0 %v1261
  %2202 = vmatpush.bf16.msra.mxu0 %v1260
  %2203 = vmatmul.bf16.gmra.mxu0 %v2190
  %v2204 = vpop.f32.mrf.mxu0
  %v2205 = vadd.f32 0.0, %v2204
  %v2206 = vpop.f32.mrf.mxu0
  %v2207 = vadd.f32 0.0, %v2206
  %2208 = vmatmul.bf16.gmra.mxu0 %v2193
  %v2209 = vpop.f32.mrf.mxu0
  %v2210 = vadd.f32 0.0, %v2209
  %v2211 = vpop.f32.mrf.mxu0
  %v2212 = vadd.f32 0.0, %v2211
  %2213 = vmatmul.bf16.gmra.mxu0 %v1265
  %v2214 = vpop.f32.mrf.mxu0
  %v2215 = vadd.f32 0.0, %v2214
  %v2216 = vpop.f32.mrf.mxu0
  %v2217 = vadd.f32 0.0, %v2216
  %2218 = vmatmul.bf16.gmra.mxu0 %v1268
  %v2219 = vpop.f32.mrf.mxu0
  %v2220 = vadd.f32 0.0, %v2219
  %v2221 = vpop.f32.mrf.mxu0
  %v2222 = vadd.f32 0.0, %v2221
  %2223 = vdwg.mxu0
  %2224 = vmatpush.bf16.msra.mxu0 0
  %2225 = vmatpush.bf16.msra.mxu0 0
  %2226 = vmatpush.bf16.msra.mxu0 0
  %2227 = vmatpush.bf16.msra.mxu0 0
  %2228 = vmatpush.bf16.msra.mxu0 0
  %2229 = vmatpush.bf16.msra.mxu0 0
  %2230 = vmatpush.bf16.msra.mxu0 %v1302
  %2231 = vmatpush.bf16.msra.mxu0 %v1301
  %2232 = vmatmul.bf16.gmra.mxu0 %v2190
  %v2233 = vpop.f32.mrf.mxu0
  %v2234 = vadd.f32 0.0, %v2233
  %v2235 = vpop.f32.mrf.mxu0
  %v2236 = vadd.f32 0.0, %v2235
  %2237 = vmatmul.bf16.gmra.mxu0 %v2193
  %v2238 = vpop.f32.mrf.mxu0
  %v2239 = vadd.f32 0.0, %v2238
  %v2240 = vpop.f32.mrf.mxu0
  %v2241 = vadd.f32 0.0, %v2240
  %2242 = vmatmul.bf16.gmra.mxu0 %v1265
  %v2243 = vpop.f32.mrf.mxu0
  %v2244 = vadd.f32 0.0, %v2243
  %v2245 = vpop.f32.mrf.mxu0
  %v2246 = vadd.f32 0.0, %v2245
  %2247 = vmatmul.bf16.gmra.mxu0 %v1268
  %v2248 = vpop.f32.mrf.mxu0
  %v2249 = vadd.f32 0.0, %v2248
  %v2250 = vpop.f32.mrf.mxu0
  %v2251 = vadd.f32 0.0, %v2250
  %2252 = vdwg.mxu0
  %v2253 = vpack.c.bf16 %v2207, %v2205
  %v2254 = vpack.c.bf16 %v2212, %v2210
  %v2255 = vpack.c.bf16 %v2217, %v2215
  %v2256 = vpack.c.bf16 %v2222, %v2220
  %v2257 = vpack.c.bf16 %v2236, %v2234
  %v2258 = vpack.c.bf16 %v2241, %v2239
  %v2259 = vpack.c.bf16 %v2246, %v2244
  %v2260 = vpack.c.bf16 %v2251, %v2249
  %v2261 = vld [vmem:[%s23] sm:$0xff]
  %v2262 = vld [vmem:[%s23 + $0x8] sm:$0xff]
  %v2263 = vld [vmem:[%s23 + $0x10] sm:$0xff]
  %v2264 = vld [vmem:[%s23 + $0x18] sm:$0xff]
  %v2269 = vunpack.c.l.b16 %v2261
  %v2270 = vunpack.c.h.b16 %v2261
  %v2271 = vunpack.c.l.b16 %v2262
  %v2272 = vunpack.c.h.b16 %v2262
  %v2273 = vunpack.c.l.b16 %v2263
  %v2274 = vunpack.c.h.b16 %v2263
  %v2275 = vunpack.c.l.b16 %v2264
  %v2276 = vunpack.c.h.b16 %v2264
  %v2277 = vpack.c.b16 %v2271, %v2269
  %v2278 = vpack.c.b16 %v2272, %v2270
  %v2279 = vpack.c.b16 %v2275, %v2273
  %v2280 = vpack.c.b16 %v2276, %v2274
  %v2284 = vsel %vm185, %v2278, 0
  %v2287 = vsel %vm185, %v2280, 0
  %2289 = vmatpush.bf16.msra.mxu0 %v1247
  %2290 = vmatpush.bf16.msra.mxu0 %v1246
  %2291 = vmatpush.bf16.msra.mxu0 %v2188
  %2292 = vmatpush.bf16.msra.mxu0 %v2187
  %2293 = vmatpush.bf16.msra.mxu0 %v2256
  %2294 = vmatpush.bf16.msra.mxu0 %v2255
  %2295 = vmatpush.bf16.msra.mxu0 %v2254
  %2296 = vmatpush.bf16.msra.mxu0 %v2253
  %2297 = vmatmul.bf16.gmra.mxu0 %v2277
  %v2298 = vpop.f32.mrf.mxu0
  %v2299 = vadd.f32 0.0, %v2298
  %v2300 = vpop.f32.mrf.mxu0
  %v2301 = vadd.f32 0.0, %v2300
  %2302 = vmatmul.bf16.gmra.mxu0 %v2279
  %v2303 = vpop.f32.mrf.mxu0
  %v2304 = vadd.f32 0.0, %v2303
  %v2305 = vpop.f32.mrf.mxu0
  %v2306 = vadd.f32 0.0, %v2305
  %2307 = vdwg.mxu0
  %2308 = vmatpush.bf16.msra.mxu0 0
  %2309 = vmatpush.bf16.msra.mxu0 0
  %2310 = vmatpush.bf16.msra.mxu0 0
  %2311 = vmatpush.bf16.msra.mxu0 0
  %2312 = vmatpush.bf16.msra.mxu0 %v2260
  %2313 = vmatpush.bf16.msra.mxu0 %v2259
  %2314 = vmatpush.bf16.msra.mxu0 %v2258
  %2315 = vmatpush.bf16.msra.mxu0 %v2257
  %2316 = vmatmul.bf16.gmra.mxu0 %v2284
  %v2317 = vpop.f32.mrf.mxu0
  %v2318 = vadd.f32 %v2299, %v2317
  %v2319 = vpop.f32.mrf.mxu0
  %v2320 = vadd.f32 %v2301, %v2319
  %2321 = vmatmul.bf16.gmra.mxu0 %v2287
  %v2322 = vpop.f32.mrf.mxu0
  %v2323 = vadd.f32 %v2304, %v2322
  %v2324 = vpop.f32.mrf.mxu0
  %v2325 = vadd.f32 %v2306, %v2324
  %2326 = vdwg.mxu0
  %v2327 = vpack.c.bf16 %v2320, %v2318
  %v2328 = vpack.c.bf16 %v2325, %v2323
  %v2329 = vld [vmem:[%s67] sm:$0xf]
  %v2330 = vld [vmem:[%s67 + $0x4] sm:$0xf]
  %v2331 = vld [vmem:[%s67 + $0x8] sm:$0xf]
  %v2332 = vld [vmem:[%s67 + $0xc] sm:$0xf]
  %v2333 = vld [vmem:[%s69] sm:$0xf]
  %v2334 = vld [vmem:[%s69 + $0x4] sm:$0xf]
  %v2335 = vld [vmem:[%s69 + $0x8] sm:$0xf]
  %v2336 = vld [vmem:[%s69 + $0xc] sm:$0xf]
  %v2341 = vunpack.c.l.b16 %v2333
  %v2342 = vunpack.c.l.b16 %v2334
  %v2343 = vunpack.c.l.b16 %v2335
  %v2344 = vunpack.c.l.b16 %v2336
  %v2345 = vpack.c.b16 %v2342, %v2341
  %v2346 = vpack.c.b16 %v2344, %v2343
  %v2350 = vsel %vm888, %v2328, 0
  %2352 = vmatpush.bf16.msra.mxu0 0
  %2353 = vmatpush.bf16.msra.mxu0 0
  %2354 = vmatpush.bf16.msra.mxu0 0
  %2355 = vmatpush.bf16.msra.mxu0 0
  %2356 = vmatpush.bf16.msra.mxu0 0
  %2357 = vmatpush.bf16.msra.mxu0 0
  %2358 = vmatpush.bf16.msra.mxu0 %v2346
  %2359 = vmatpush.bf16.msra.mxu0 %v2345
  %2360 = vmatmul.bf16.gmra.mxu0 %v2350
  %v2361 = vpop.f32.mrf.mxu0
  %v2362 = vadd.f32 0.0, %v2361
  %v2363 = vpop.f32.mrf.mxu0
  %v2364 = vadd.f32 0.0, %v2363
  %2365 = vdwg.mxu0
  %v2370 = vunpack.c.l.b16 %v2329
  %v2371 = vunpack.c.l.b16 %v2330
  %v2372 = vunpack.c.l.b16 %v2331
  %v2373 = vunpack.c.l.b16 %v2332
  %v2374 = vpack.c.b16 %v2371, %v2370
  %v2375 = vpack.c.b16 %v2373, %v2372
  %v2379 = vsel %vm888, %v2327, 0
  %2381 = vmatpush.bf16.msra.mxu0 0
  %2382 = vmatpush.bf16.msra.mxu0 0
  %2383 = vmatpush.bf16.msra.mxu0 0
  %2384 = vmatpush.bf16.msra.mxu0 0
  %2385 = vmatpush.bf16.msra.mxu0 0
  %2386 = vmatpush.bf16.msra.mxu0 0
  %2387 = vmatpush.bf16.msra.mxu0 %v2375
  %2388 = vmatpush.bf16.msra.mxu0 %v2374
  %2389 = vmatmul.bf16.gmra.mxu0 %v2379
  %v2390 = vpop.f32.mrf.mxu0
  %v2391 = vadd.f32 %v2362, %v2390
  %v2392 = vpop.f32.mrf.mxu0
  %v2393 = vadd.f32 %v2364, %v2392
  %2394 = vdwg.mxu0
  %v2395 = vld [vmem:[%s25] sm:$0xff]
  %v2396 = vld [vmem:[%s25 + $0x8] sm:$0xff]
  %2398 = vset.pattern.permute.xlu0 0
  %2399 = vperm.xlu0 %2398, %v2395
  %v2400 = vpop.permute.xlu0 %2399
  %2403 = vset.pattern.permute.xlu0 0
  %2404 = vperm.xlu0 %2403, %v2396
  %v2405 = vpop.permute.xlu0 %2404
  %v2407 = vadd.f32 %v2391, %v2400
  %v2408 = vadd.f32 %v2393, %v2405
  %v2409 = vsel %vm888, %v2407, 0.0
  %2410 = vadd.xlane.f32.xlu0 %v2409
  %v2411 = vpop.xlane.xlu0 %2410
  %v2412 = vsel %vm888, %v2408, 0.0
  %2413 = vadd.xlane.f32.xlu0 %v2412
  %v2414 = vpop.xlane.xlu0 %2413
  %v2415 = vmul.f32 %v2411, %v907
  %v2416 = vmul.f32 %v2414, %v907
  %v2417 = vsub.f32 %v2407, %v2415
  %v2418 = vsub.f32 %v2408, %v2416
  %v2419 = vmul.f32 %v2417, %v2417
  %v2420 = vmul.f32 %v2418, %v2418
  %v2421 = vsel %vm888, %v2419, 0.0
  %2422 = vadd.xlane.f32.xlu0 %v2421
  %v2423 = vpop.xlane.xlu0 %2422
  %v2424 = vsel %vm888, %v2420, 0.0
  %2425 = vadd.xlane.f32.xlu0 %v2424
  %v2426 = vpop.xlane.xlu0 %2425
  %v2427 = vmul.f32 %v2423, %v907
  %v2428 = vmul.f32 %v2426, %v907
  %v2429 = vadd.f32 %v2427, 1e-05
  %v2430 = vadd.f32 %v2428, 1e-05
  %v2431 = vrsqrt.pop %v2429
  %v2432 = vmul.f32 %v2431, %v2429
  %v2433 = vmul.f32 %v2432, %v2431
  %v2434 = vmul.f32 0.5, %v2433
  %v2435 = vsub.f32 1.5, %v2434
  %v2436 = vmul.f32 %v2431, %v2435
  %vm2437 = vweird.f32 %v2429
  %vm2438 = vweird.f32 %v2431
  %vm2439 = vmor %vm2437, %vm2438
  %v2440 = vsel %vm2439, %v2431, %v2436
  %v2441 = vrsqrt.pop %v2430
  %v2442 = vmul.f32 %v2441, %v2430
  %v2443 = vmul.f32 %v2442, %v2441
  %v2444 = vmul.f32 0.5, %v2443
  %v2445 = vsub.f32 1.5, %v2444
  %v2446 = vmul.f32 %v2441, %v2445
  %vm2447 = vweird.f32 %v2430
  %vm2448 = vweird.f32 %v2441
  %vm2449 = vmor %vm2447, %vm2448
  %v2450 = vsel %vm2449, %v2441, %v2446
  %v2451 = vmul.f32 %v2417, %v2440
  %v2452 = vmul.f32 %v2418, %v2450
  %2455 = vrot.lane.b32.xlu0 %v2407, 96
  %v2456 = vpop.permute.xlu0 %2455
  %2457 = vrot.lane.b32.xlu0 %v2408, 96
  %v2458 = vpop.permute.xlu0 %2457
  %v2461 = vsel %vm888, %v2456, 0.0
  %2462 = vadd.xlane.f32.xlu0 %v2461
  %v2463 = vpop.xlane.xlu0 %2462
  %v2464 = vsel %vm888, %v2458, 0.0
  %2465 = vadd.xlane.f32.xlu0 %v2464
  %v2466 = vpop.xlane.xlu0 %2465
  %v2467 = vmul.f32 %v2463, %v907
  %v2468 = vmul.f32 %v2466, %v907
  %v2469 = vsub.f32 %v2407, %v2467
  %v2470 = vsub.f32 %v2408, %v2468
  %v2471 = vmul.f32 %v2469, %v2469
  %v2472 = vmul.f32 %v2470, %v2470
  %2475 = vrot.lane.b32.xlu0 %v2471, 96
  %v2476 = vpop.permute.xlu0 %2475
  %2477 = vrot.lane.b32.xlu0 %v2472, 96
  %v2478 = vpop.permute.xlu0 %2477
  %v2481 = vsel %vm888, %v2476, 0.0
  %2482 = vadd.xlane.f32.xlu0 %v2481
  %v2483 = vpop.xlane.xlu0 %2482
  %v2484 = vsel %vm888, %v2478, 0.0
  %2485 = vadd.xlane.f32.xlu0 %v2484
  %v2486 = vpop.xlane.xlu0 %2485
  %v2487 = vmul.f32 %v2483, %v907
  %v2488 = vmul.f32 %v2486, %v907
  %v2489 = vadd.f32 %v2487, 1e-05
  %v2490 = vadd.f32 %v2488, 1e-05
  %v2491 = vrsqrt.pop %v2489
  %v2492 = vmul.f32 %v2491, %v2489
  %v2493 = vmul.f32 %v2492, %v2491
  %v2494 = vmul.f32 0.5, %v2493
  %v2495 = vsub.f32 1.5, %v2494
  %v2496 = vmul.f32 %v2491, %v2495
  %vm2497 = vweird.f32 %v2489
  %vm2498 = vweird.f32 %v2491
  %vm2499 = vmor %vm2497, %vm2498
  %v2500 = vsel %vm2499, %v2491, %v2496
  %v2501 = vrsqrt.pop %v2490
  %v2502 = vmul.f32 %v2501, %v2490
  %v2503 = vmul.f32 %v2502, %v2501
  %v2504 = vmul.f32 0.5, %v2503
  %v2505 = vsub.f32 1.5, %v2504
  %v2506 = vmul.f32 %v2501, %v2505
  %vm2507 = vweird.f32 %v2490
  %vm2508 = vweird.f32 %v2501
  %vm2509 = vmor %vm2507, %vm2508
  %v2510 = vsel %vm2509, %v2501, %v2506
  %v2511 = vmul.f32 %v2469, %v2500
  %v2512 = vmul.f32 %v2470, %v2510
  %v2513 = vsel %vm888, %v2451, %v2511
  %v2514 = vsel %vm888, %v2452, %v2512
  %vm2515 = vcmp.gt.f32.partialorder %v2513, 0.0
  %vm2516 = vcmp.gt.f32.partialorder %v2514, 0.0
  %v2517 = vmin.f32 %v2513, 0.0
  %v2518 = vmin.f32 %v2514, 0.0
  %v2519 = vmul.f32 %v2517, 1.442695
  %v2520 = vpow.pop %v2519
  %v2521 = vmul.f32 %v2518, 1.442695
  %v2522 = vpow.pop %v2521
  %v2523 = vsub.f32 %v2520, 1.0
  %v2524 = vsub.f32 %v2522, 1.0
  %v2525 = vsel %vm2515, %v2513, %v2523
  %v2526 = vsel %vm2516, %v2514, %v2524
  %v2527 = vpack.c.bf16 %v2526, %v2525
  %v2529 = vsel %vm185, %v2527, 0
  %2531 = vmatpush.bf16.msra.mxu0 0
  %2532 = vmatpush.bf16.msra.mxu0 0
  %2533 = vmatpush.bf16.msra.mxu0 0
  %2534 = vmatpush.bf16.msra.mxu0 0
  %2535 = vmatpush.bf16.msra.mxu0 %v754
  %2536 = vmatpush.bf16.msra.mxu0 %v753
  %2537 = vmatpush.bf16.msra.mxu0 %v752
  %2538 = vmatpush.bf16.msra.mxu0 %v751
  %2539 = vmatmul.bf16.gmra.mxu0 %v2529
  %v2540 = vpop.f32.mrf.mxu0
  %v2541 = vadd.f32 0.0, %v2540
  %v2542 = vpop.f32.mrf.mxu0
  %v2543 = vadd.f32 0.0, %v2542
  %2544 = vmatmul.bf16.gmra.mxu0 %v760
  %v2545 = vpop.f32.mrf.mxu0
  %v2546 = vadd.f32 0.0, %v2545
  %v2547 = vpop.f32.mrf.mxu0
  %v2548 = vadd.f32 0.0, %v2547
  %2549 = vdwg.mxu0
  %2550 = vmatpush.bf16.msra.mxu0 0
  %2551 = vmatpush.bf16.msra.mxu0 0
  %2552 = vmatpush.bf16.msra.mxu0 0
  %2553 = vmatpush.bf16.msra.mxu0 0
  %2554 = vmatpush.bf16.msra.mxu0 %v803
  %2555 = vmatpush.bf16.msra.mxu0 %v802
  %2556 = vmatpush.bf16.msra.mxu0 %v801
  %2557 = vmatpush.bf16.msra.mxu0 %v800
  %2558 = vmatmul.bf16.gmra.mxu0 %v2529
  %v2559 = vpop.f32.mrf.mxu0
  %v2560 = vadd.f32 0.0, %v2559
  %v2561 = vpop.f32.mrf.mxu0
  %v2562 = vadd.f32 0.0, %v2561
  %2563 = vmatmul.bf16.gmra.mxu0 %v760
  %v2564 = vpop.f32.mrf.mxu0
  %v2565 = vadd.f32 0.0, %v2564
  %v2566 = vpop.f32.mrf.mxu0
  %v2567 = vadd.f32 0.0, %v2566
  %2568 = vdwg.mxu0
  %v2569 = vpack.c.bf16 %v2543, %v2541
  %v2570 = vpack.c.bf16 %v2548, %v2546
  %v2571 = vpack.c.bf16 %v2562, %v2560
  %v2572 = vpack.c.bf16 %v2567, %v2565
  %v2573 = vld [vmem:[%s27] sm:$0xf]
  %v2574 = vld [vmem:[%s27 + $0x4] sm:$0xf]
  %v2577 = vunpack.c.l.b16 %v2573
  %v2578 = vunpack.c.l.b16 %v2574
  %v2579 = vpack.c.b16 %v2578, %v2577
  %v2581 = vsel %vm1366, %v2579, 0
  %2583 = vmatpush.bf16.msra.mxu0 0
  %2584 = vmatpush.bf16.msra.mxu0 0
  %2585 = vmatpush.bf16.msra.mxu0 %v2572
  %2586 = vmatpush.bf16.msra.mxu0 %v2571
  %2587 = vmatpush.bf16.msra.mxu0 %v726
  %2588 = vmatpush.bf16.msra.mxu0 %v2527
  %2589 = vmatpush.bf16.msra.mxu0 %v2570
  %2590 = vmatpush.bf16.msra.mxu0 %v2569
  %2591 = vmatmul.bf16.gmra.mxu0 %v2581
  %v2592 = vpop.f32.mrf.mxu0
  %v2593 = vadd.f32 0.0, %v2592
  %v2594 = vpop.f32.mrf.mxu0
  %v2595 = vadd.f32 0.0, %v2594
  %2596 = vdwg.mxu0
  %v2597 = vpack.c.bf16 %v2593, %v2593
  %v2598 = vpack.c.bf16 %v2595, %v2595
  %v2599 = vld [vmem:[%s71] sm:$0xf]
  %v2600 = vld [vmem:[%s71 + $0x4] sm:$0xf]
  %v2601 = vld [vmem:[%s71 + $0x8] sm:$0xf]
  %v2602 = vld [vmem:[%s71 + $0xc] sm:$0xf]
  %v2603 = vld [vmem:[%s71 + $0x10] sm:$0xf]
  %v2604 = vld [vmem:[%s71 + $0x14] sm:$0xf]
  %v2605 = vld [vmem:[%s71 + $0x18] sm:$0xf]
  %v2606 = vld [vmem:[%s71 + $0x1c] sm:$0xf]
  %v2607 = vld [vmem:[%s73] sm:$0xf]
  %v2608 = vld [vmem:[%s73 + $0x4] sm:$0xf]
  %v2609 = vld [vmem:[%s73 + $0x8] sm:$0xf]
  %v2610 = vld [vmem:[%s73 + $0xc] sm:$0xf]
  %v2611 = vld [vmem:[%s73 + $0x10] sm:$0xf]
  %v2612 = vld [vmem:[%s73 + $0x14] sm:$0xf]
  %v2613 = vld [vmem:[%s73 + $0x18] sm:$0xf]
  %v2614 = vld [vmem:[%s73 + $0x1c] sm:$0xf]
  %v2623 = vunpack.c.l.b16 %v2607
  %v2624 = vunpack.c.l.b16 %v2608
  %v2625 = vunpack.c.l.b16 %v2609
  %v2626 = vunpack.c.l.b16 %v2610
  %v2627 = vunpack.c.l.b16 %v2611
  %v2628 = vunpack.c.l.b16 %v2612
  %v2629 = vunpack.c.l.b16 %v2613
  %v2630 = vunpack.c.l.b16 %v2614
  %v2631 = vpack.c.b16 %v2624, %v2623
  %v2632 = vpack.c.b16 %v2626, %v2625
  %v2633 = vpack.c.b16 %v2628, %v2627
  %v2634 = vpack.c.b16 %v2630, %v2629
  %v2640 = vsel %vm185, %v2598, 0
  %2642 = vmatpush.bf16.msra.mxu0 0
  %2643 = vmatpush.bf16.msra.mxu0 0
  %2644 = vmatpush.bf16.msra.mxu0 0
  %2645 = vmatpush.bf16.msra.mxu0 0
  %2646 = vmatpush.bf16.msra.mxu0 %v2634
  %2647 = vmatpush.bf16.msra.mxu0 %v2633
  %2648 = vmatpush.bf16.msra.mxu0 %v2632
  %2649 = vmatpush.bf16.msra.mxu0 %v2631
  %2650 = vmatmul.bf16.gmra.mxu0 %v2640
  %v2651 = vpop.f32.mrf.mxu0
  %v2652 = vadd.f32 0.0, %v2651
  %v2653 = vpop.f32.mrf.mxu0
  %2654 = vdwg.mxu0
  %v2663 = vunpack.c.l.b16 %v2599
  %v2664 = vunpack.c.l.b16 %v2600
  %v2665 = vunpack.c.l.b16 %v2601
  %v2666 = vunpack.c.l.b16 %v2602
  %v2667 = vunpack.c.l.b16 %v2603
  %v2668 = vunpack.c.l.b16 %v2604
  %v2669 = vunpack.c.l.b16 %v2605
  %v2670 = vunpack.c.l.b16 %v2606
  %v2671 = vpack.c.b16 %v2664, %v2663
  %v2672 = vpack.c.b16 %v2666, %v2665
  %v2673 = vpack.c.b16 %v2668, %v2667
  %v2674 = vpack.c.b16 %v2670, %v2669
  %v2680 = vsel %vm185, %v2597, 0
  %2682 = vmatpush.bf16.msra.mxu0 0
  %2683 = vmatpush.bf16.msra.mxu0 0
  %2684 = vmatpush.bf16.msra.mxu0 0
  %2685 = vmatpush.bf16.msra.mxu0 0
  %2686 = vmatpush.bf16.msra.mxu0 %v2674
  %2687 = vmatpush.bf16.msra.mxu0 %v2673
  %2688 = vmatpush.bf16.msra.mxu0 %v2672
  %2689 = vmatpush.bf16.msra.mxu0 %v2671
  %2690 = vmatmul.bf16.gmra.mxu0 %v2680
  %v2691 = vpop.f32.mrf.mxu0
  %v2692 = vadd.f32 %v2652, %v2691
  %v2693 = vpop.f32.mrf.mxu0
  %2694 = vdwg.mxu0
  %v2695 = vld [vmem:[%s29] sm:$0xff]
  %2697 = vset.pattern.permute.xlu0 0
  %2698 = vperm.xlu0 %2697, %v2695
  %v2699 = vpop.permute.xlu0 %2698
  %v2701 = vadd.f32 %v2692, %v2699
  %v2702 = vsel %vm185, %v2701, 0.0
  %2703 = vadd.xlane.f32.xlu0 %v2702
  %v2704 = vpop.xlane.xlu0 %2703
  %v2705 = vmul.f32 %v2704, %v195
  %v2706 = vsub.f32 %v2701, %v2705
  %v2707 = vmul.f32 %v2706, %v2706
  %v2708 = vsel %vm185, %v2707, 0.0
  %2709 = vadd.xlane.f32.xlu0 %v2708
  %v2710 = vpop.xlane.xlu0 %2709
  %v2711 = vmul.f32 %v2710, %v195
  %v2712 = vadd.f32 %v2711, 1e-05
  %v2713 = vrsqrt.pop %v2712
  %v2714 = vmul.f32 %v2713, %v2712
  %v2715 = vmul.f32 %v2714, %v2713
  %v2716 = vmul.f32 0.5, %v2715
  %v2717 = vsub.f32 1.5, %v2716
  %v2718 = vmul.f32 %v2713, %v2717
  %vm2719 = vweird.f32 %v2712
  %vm2720 = vweird.f32 %v2713
  %vm2721 = vmor %vm2719, %vm2720
  %v2722 = vsel %vm2721, %v2713, %v2718
  %v2723 = vmul.f32 %v2706, %v2722
  %2725 = vrot.lane.b32.xlu0 %v2701, 64
  %v2726 = vpop.permute.xlu0 %2725
  %v2728 = vsel %vm185, %v2726, 0.0
  %2729 = vadd.xlane.f32.xlu0 %v2728
  %v2730 = vpop.xlane.xlu0 %2729
  %v2731 = vmul.f32 %v2730, %v195
  %v2732 = vsub.f32 %v2701, %v2731
  %v2733 = vmul.f32 %v2732, %v2732
  %2735 = vrot.lane.b32.xlu0 %v2733, 64
  %v2736 = vpop.permute.xlu0 %2735
  %v2738 = vsel %vm185, %v2736, 0.0
  %2739 = vadd.xlane.f32.xlu0 %v2738
  %v2740 = vpop.xlane.xlu0 %2739
  %v2741 = vmul.f32 %v2740, %v195
  %v2742 = vadd.f32 %v2741, 1e-05
  %v2743 = vrsqrt.pop %v2742
  %v2744 = vmul.f32 %v2743, %v2742
  %v2745 = vmul.f32 %v2744, %v2743
  %v2746 = vmul.f32 0.5, %v2745
  %v2747 = vsub.f32 1.5, %v2746
  %v2748 = vmul.f32 %v2743, %v2747
  %vm2749 = vweird.f32 %v2742
  %vm2750 = vweird.f32 %v2743
  %vm2751 = vmor %vm2749, %vm2750
  %v2752 = vsel %vm2751, %v2743, %v2748
  %v2753 = vmul.f32 %v2732, %v2752
  %v2754 = vsel %vm185, %v2723, %v2753
  %vm2755 = vcmp.gt.f32.partialorder %v2754, 0.0
  %v2756 = vmin.f32 %v2754, 0.0
  %v2757 = vmul.f32 %v2756, 1.442695
  %v2758 = vpow.pop %v2757
  %v2759 = vsub.f32 %v2758, 1.0
  %v2760 = vsel %vm2755, %v2754, %v2759
  %v2761 = vpack.c.bf16 %v155, %v2760
  %2762 = vmatpush.bf16.msra.mxu0 %v308
  %2763 = vmatpush.bf16.msra.mxu0 %v307
  %2764 = vmatpush.bf16.msra.mxu0 %v306
  %2765 = vmatpush.bf16.msra.mxu0 %v305
  %2766 = vmatpush.bf16.msra.mxu0 %v304
  %2767 = vmatpush.bf16.msra.mxu0 %v303
  %2768 = vmatpush.bf16.msra.mxu0 %v302
  %2769 = vmatpush.bf16.msra.mxu0 %v301
  %2770 = vmatmul.bf16.gmra.mxu0 %v2761
  %v2771 = vpop.f32.mrf.mxu0
  %v2772 = vadd.f32 0.0, %v2771
  %v2773 = vpop.f32.mrf.mxu0
  %v2774 = vadd.f32 0.0, %v2773
  %2775 = vdwg.mxu0
  %2776 = vmatpush.bf16.msra.mxu0 %v385
  %2777 = vmatpush.bf16.msra.mxu0 %v384
  %2778 = vmatpush.bf16.msra.mxu0 %v383
  %2779 = vmatpush.bf16.msra.mxu0 %v382
  %2780 = vmatpush.bf16.msra.mxu0 %v381
  %2781 = vmatpush.bf16.msra.mxu0 %v380
  %2782 = vmatpush.bf16.msra.mxu0 %v379
  %2783 = vmatpush.bf16.msra.mxu0 %v378
  %2784 = vmatmul.bf16.gmra.mxu0 %v2761
  %v2785 = vpop.f32.mrf.mxu0
  %v2786 = vadd.f32 0.0, %v2785
  %v2787 = vpop.f32.mrf.mxu0
  %v2788 = vadd.f32 0.0, %v2787
  %2789 = vdwg.mxu0
  %v2790 = vld [vmem:[%s31] sm:$0xff]
  %v2791 = vld [vmem:[%s33] sm:$0xff]
  %2793 = vset.pattern.permute.xlu0 0
  %2794 = vperm.xlu0 %2793, %v2791
  %v2795 = vpop.permute.xlu0 %2794
  %v2798 = vsel %vm862, %v2790, 0
  %2800 = vmatpush.msra.mxu0 0.0
  %2801 = vmatpush.msra.mxu0 0.0
  %2802 = vmatpush.msra.mxu0 0.0
  %2803 = vmatpush.msra.mxu0 0.0
  %2804 = vmatpush.msra.mxu0 0.0
  %2805 = vmatpush.msra.mxu0 0.0
  %2806 = vmatpush.msra.mxu0 0.0
  %2807 = vmatpush.msra.mxu0 0.0
  %2808 = vmatpush.msra.mxu0 0.0
  %2809 = vmatpush.msra.mxu0 0.0
  %2810 = vmatpush.msra.mxu0 %v2788
  %2811 = vmatpush.msra.mxu0 %v2786
  %2812 = vmatpush.msra.mxu0 %v155
  %2813 = vmatpush.msra.mxu0 %v2760
  %2814 = vmatpush.msra.mxu0 %v2774
  %2815 = vmatpush.msra.mxu0 %v2772
  %2816 = vmatmul.f32.gmra.mxu0 %v2798
  %v2817 = vpop.f32.mrf.mxu0
  %v2818 = vadd.f32 %v2795, %v2817
  %2819 = vdwg.mxu0
  %v2820 = vsub.f32 0.0, %v2818
  %v2821 = vmul.f32 %v2820, 1.442695
  %v2822 = vpow.pop %v2821
  %v2823 = vadd.f32 %v2822, 1.0
  %v2824 = vrcp.pop %v2823
  %2825 = vst [vmem:[%s75] sm:$0xff] %v2824
  // Predicated region
  $region150: #{conv_autoencoder_forward.1} parent=0 // pred_check
    _
  $region151: #{conv_autoencoder_forward.1} parent=0 // pred_check_branch
    %2827 = sbr.rel (0) target = $region153
  $region152: #{conv_autoencoder_forward.1} parent=0 // pred_region
    _
  $region153: #{conv_autoencoder_forward.1} parent=0 // pred_fallthru
    _
  // Predicated region
  $region154: #{conv_autoencoder_forward.1} parent=0 // pred_check
    _
  $region155: #{conv_autoencoder_forward.1} parent=0 // pred_check_branch
    %2829 = sbr.rel (0) target = $region157
  $region156: #{conv_autoencoder_forward.1} parent=0 // pred_region
    _
  $region157: #{conv_autoencoder_forward.1} parent=0 // pred_fallthru
    _

</llo_original>
